<compile_context>
chip_gen: v7x
topology: tpu7x:2x2x1
jax: 0.10.0
libtpu: 0.0.40
codegen_flags: <defaults>
</compile_context>

<pallas_src>
import math
from functools import partial

import jax
import jax.numpy as jnp
from jax.experimental import pallas as pl
from jax.experimental.pallas import tpu as pltpu

LN_EPS = 1e-5
# 48 MiB: leaves headroom on v7x (64 MiB physical VMEM / TC); well under v5e/v6e 128 MiB.
VMEM_LIMIT = 48 * 1024 * 1024


# ----------------------------- helpers -----------------------------

def _params(*sems):
    return pltpu.CompilerParams(dimension_semantics=tuple(sems),
                                vmem_limit_bytes=VMEM_LIMIT)


def _divisor_tile(n, cap, quantum):
    if n <= cap:
        return n
    t = (cap // quantum) * quantum
    while t >= quantum:
        if n % t == 0:
            return t
        t -= quantum
    return None


def _tile_rows(m, cap=256):
    """Largest MXU-friendly row tile <= cap dividing m (prefer multiples of 128)."""
    if m <= cap:
        return m
    for q in (128, 8):
        t = _divisor_tile(m, cap, q)
        if t is not None:
            return t
    # TODO(synk): pad rows + mask tails instead of falling back to the full dimension.
    return m


def _tile_cols(n, cap=512):
    """Largest lane tile <= cap dividing n (multiple of 128)."""
    if n <= cap:
        return n
    t = _divisor_tile(n, cap, 128)
    if t is not None:
        return t
    # TODO(synk): pad columns + mask tails instead of falling back to the full dimension.
    return n


def _gelu_tanh(x):
    # F.gelu(approximate='tanh') == gelu_new
    c = math.sqrt(2.0 / math.pi)
    return 0.5 * x * (1.0 + jnp.tanh(c * (x + 0.044715 * x * x * x)))


def _ln(x, g, b, eps):
    mu = jnp.mean(x, axis=-1, keepdims=True)
    var = jnp.mean(jnp.square(x - mu), axis=-1, keepdims=True)
    return (x - mu) * jax.lax.rsqrt(var + eps) * g + b


def _causal_softmax(s):
    """Softmax over last axis of (S, S) scores with the reference's -10000 causal mask."""
    row = jax.lax.broadcasted_iota(jnp.int32, s.shape, 0)
    col = jax.lax.broadcasted_iota(jnp.int32, s.shape, 1)
    s = jnp.where(col > row, s - 10000.0, s)
    m = jnp.max(s, axis=-1, keepdims=True)
    e = jnp.exp(s - m)
    return e * pl.reciprocal(jnp.sum(e, axis=-1, keepdims=True), approx=True)


# ----------------------------- Pallas kernels -----------------------------

def _ln_linear_kernel(x_ref, g_ref, b_ref, w_ref, wb_ref, o_ref, *, eps):
    h = _ln(x_ref[...], g_ref[...], b_ref[...], eps).astype(w_ref.dtype)
    y = jnp.dot(h, w_ref[...], preferred_element_type=jnp.float32) + wb_ref[...]
    o_ref[...] = y.astype(o_ref.dtype)


def ln_linear(x, gamma, beta, w, wb, out_dtype=jnp.bfloat16, eps=LN_EPS):
    # fused pre-matmul LayerNorm + linear (used for Wqkv).
    M, D = x.shape
    N = w.shape[1]
    tm, tn = _tile_rows(M), _tile_cols(N)
    return pl.pallas_call(
        partial(_ln_linear_kernel, eps=eps),
        out_shape=jax.ShapeDtypeStruct((M, N), out_dtype),
        grid=(M // tm, N // tn),
        in_specs=[pl.BlockSpec((tm, D), lambda i, j: (i, 0)),
                  pl.BlockSpec((1, D), lambda i, j: (0, 0)),
                  pl.BlockSpec((1, D), lambda i, j: (0, 0)),
                  pl.BlockSpec((D, tn), lambda i, j: (0, j)),
                  pl.BlockSpec((1, tn), lambda i, j: (0, j))],
        out_specs=pl.BlockSpec((tm, tn), lambda i, j: (i, j)),
        compiler_params=_params("parallel", "parallel"),
    )(x, gamma.reshape(1, D), beta.reshape(1, D), w, wb.reshape(1, N))


def _linear_kernel(x_ref, w_ref, b_ref, o_ref, *, act):
    y = jnp.dot(x_ref[...].astype(w_ref.dtype), w_ref[...],
                preferred_element_type=jnp.float32) + b_ref[...]
    if act == "gelu":
        y = _gelu_tanh(y)
    o_ref[...] = y.astype(o_ref.dtype)


def linear(x, w, b, act=None, out_dtype=jnp.bfloat16):
    M, K = x.shape
    N = w.shape[1]
    tm, tn = _tile_rows(M), _tile_cols(N)
    return pl.pallas_call(
        partial(_linear_kernel, act=act),
        out_shape=jax.ShapeDtypeStruct((M, N), out_dtype),
        grid=(M // tm, N // tn),
        in_specs=[pl.BlockSpec((tm, K), lambda i, j: (i, 0)),
                  pl.BlockSpec((K, tn), lambda i, j: (0, j)),
                  pl.BlockSpec((1, tn), lambda i, j: (0, j))],
        out_specs=pl.BlockSpec((tm, tn), lambda i, j: (i, j)),
        compiler_params=_params("parallel", "parallel"),
    )(x, w, b.reshape(1, N))


def _linear_add_kernel(x_ref, w_ref, b_ref, r_ref, o_ref):
    y = jnp.dot(x_ref[...].astype(w_ref.dtype), w_ref[...],
                preferred_element_type=jnp.float32)
    o_ref[...] = y + b_ref[...] + r_ref[...]


def linear_add(x, w, b, r):
    # fused out_proj + residual add (f32 residual out; next kernel applies the LN).
    M, K = x.shape
    D = w.shape[1]
    tm = _tile_rows(M)
    return pl.pallas_call(
        _linear_add_kernel,
        out_shape=jax.ShapeDtypeStruct((M, D), jnp.float32),
        grid=(M // tm,),
        in_specs=[pl.BlockSpec((tm, K), lambda i: (i, 0)),
                  pl.BlockSpec((K, D), lambda i: (0, 0)),
                  pl.BlockSpec((1, D), lambda i: (0, 0)),
                  pl.BlockSpec((tm, D), lambda i: (i, 0))],
        out_specs=pl.BlockSpec((tm, D), lambda i: (i, 0)),
        compiler_params=_params("parallel"),
    )(x, w, b.reshape(1, D), r)


def _ln_mlp_add_kernel(x_ref, g_ref, b_ref, w1_ref, b1_ref, w2_ref, b2_ref,
                       o_ref, h_sc, acc_sc, *, eps):
    j = pl.program_id(1)

    @pl.when(j == 0)
    def _():
        h_sc[...] = _ln(x_ref[...], g_ref[...], b_ref[...], eps).astype(h_sc.dtype)
        acc_sc[...] = jnp.zeros_like(acc_sc)

    hj = jnp.dot(h_sc[...], w1_ref[...], preferred_element_type=jnp.float32) + b1_ref[...]
    hj = _gelu_tanh(hj).astype(w2_ref.dtype)
    acc_sc[...] += jnp.dot(hj, w2_ref[...], preferred_element_type=jnp.float32)

    @pl.when(j == pl.num_programs(1) - 1)
    def _():
        o_ref[...] = acc_sc[...] + b2_ref[...] + x_ref[...]


def ln_mlp_add(x, gamma, beta, w1, b1, w2, b2, eps=LN_EPS):
    # fused LN -> fc1 -> gelu -> fc2 -> residual add, with the MLP inner dim on the grid
    # (P3 accumulator) so the weights stream in I-tiles instead of sitting double-buffered.
    M, D = x.shape
    I = w1.shape[1]
    tm, ti = _tile_rows(M), _tile_cols(I)
    return pl.pallas_call(
        partial(_ln_mlp_add_kernel, eps=eps),
        out_shape=jax.ShapeDtypeStruct((M, D), jnp.float32),
        grid=(M // tm, I // ti),
        in_specs=[pl.BlockSpec((tm, D), lambda i, j: (i, 0)),
                  pl.BlockSpec((1, D), lambda i, j: (0, 0)),
                  pl.BlockSpec((1, D), lambda i, j: (0, 0)),
                  pl.BlockSpec((D, ti), lambda i, j: (0, j)),
                  pl.BlockSpec((1, ti), lambda i, j: (0, j)),
                  pl.BlockSpec((ti, D), lambda i, j: (j, 0)),
                  pl.BlockSpec((1, D), lambda i, j: (0, 0))],
        out_specs=pl.BlockSpec((tm, D), lambda i, j: (i, 0)),
        scratch_shapes=[pltpu.VMEM((tm, D), jnp.bfloat16),
                        pltpu.VMEM((tm, D), jnp.float32)],
        compiler_params=_params("parallel", "arbitrary"),
    )(x, gamma.reshape(1, D), beta.reshape(1, D), w1, b1.reshape(1, I), w2,
      b2.reshape(1, D))


def _content_block_kernel(x_ref, g0_ref, b0_ref, g1_ref, b1_ref,
                          w1_ref, fb1_ref, w2_ref, fb2_ref, g2_ref, b2_ref,
                          o_ref, h_sc, r_sc, acc_sc, *, eps):
    # LN0 -> (Identity mixer) add -> LN1 -> fc1 -> gelu -> fc2 -> add -> LN2, fully fused.
    j = pl.program_id(1)

    @pl.when(j == 0)
    def _():
        x = x_ref[...]
        res1 = _ln(x, g0_ref[...], b0_ref[...], eps) + x
        r_sc[...] = res1
        h_sc[...] = _ln(res1, g1_ref[...], b1_ref[...], eps).astype(h_sc.dtype)
        acc_sc[...] = jnp.zeros_like(acc_sc)

    hj = jnp.dot(h_sc[...], w1_ref[...], preferred_element_type=jnp.float32) + fb1_ref[...]
    hj = _gelu_tanh(hj).astype(w2_ref.dtype)
    acc_sc[...] += jnp.dot(hj, w2_ref[...], preferred_element_type=jnp.float32)

    @pl.when(j == pl.num_programs(1) - 1)
    def _():
        res2 = acc_sc[...] + fb2_ref[...] + r_sc[...]
        o_ref[...] = _ln(res2, g2_ref[...], b2_ref[...], eps).astype(o_ref.dtype)


def content_block(x, g0, b0, g1, b1, w1, fb1, w2, fb2, g2, b2, eps=LN_EPS):
    M, D = x.shape
    I = w1.shape[1]
    tm, ti = _tile_rows(M), _tile_cols(I)
    return pl.pallas_call(
        partial(_content_block_kernel, eps=eps),
        out_shape=jax.ShapeDtypeStruct((M, D), jnp.bfloat16),
        grid=(M // tm, I // ti),
        in_specs=[pl.BlockSpec((tm, D), lambda i, j: (i, 0)),
                  pl.BlockSpec((1, D), lambda i, j: (0, 0)),
                  pl.BlockSpec((1, D), lambda i, j: (0, 0)),
                  pl.BlockSpec((1, D), lambda i, j: (0, 0)),
                  pl.BlockSpec((1, D), lambda i, j: (0, 0)),
                  pl.BlockSpec((D, ti), lambda i, j: (0, j)),
                  pl.BlockSpec((1, ti), lambda i, j: (0, j)),
                  pl.BlockSpec((ti, D), lambda i, j: (j, 0)),
                  pl.BlockSpec((1, D), lambda i, j: (0, 0)),
                  pl.BlockSpec((1, D), lambda i, j: (0, 0)),
                  pl.BlockSpec((1, D), lambda i, j: (0, 0))],
        out_specs=pl.BlockSpec((tm, D), lambda i, j: (i, 0)),
        scratch_shapes=[pltpu.VMEM((tm, D), jnp.bfloat16),
                        pltpu.VMEM((tm, D), jnp.float32),
                        pltpu.VMEM((tm, D), jnp.float32)],
        compiler_params=_params("parallel", "arbitrary"),
    )(x, g0.reshape(1, D), b0.reshape(1, D), g1.reshape(1, D), b1.reshape(1, D),
      w1, fb1.reshape(1, I), w2, fb2.reshape(1, D), g2.reshape(1, D), b2.reshape(1, D))


def _grouped_linear_kernel(x_ref, w_ref, b_ref, o_ref):
    w = w_ref[...].reshape(w_ref.shape[1:])
    b = b_ref[...].reshape(1, b_ref.shape[-1])
    y = jnp.dot(x_ref[...].astype(w.dtype), w, preferred_element_type=jnp.float32) + b
    o_ref[...] = y.reshape(o_ref.shape).astype(o_ref.dtype)


def grouped_linear(x, w, b):
    # x: (M, K) bf16;  w: (G, K, N) bf16;  b: (G, 1, N) f32  ->  (G, M, N) bf16 group-major.
    M, K = x.shape
    G, _, N = w.shape
    tm = _tile_rows(M)
    return pl.pallas_call(
        _grouped_linear_kernel,
        out_shape=jax.ShapeDtypeStruct((G, M, N), jnp.bfloat16),
        grid=(G, M // tm),
        in_specs=[pl.BlockSpec((tm, K), lambda g, i: (i, 0)),
                  pl.BlockSpec((1, K, N), lambda g, i: (g, 0, 0)),
                  pl.BlockSpec((1, 1, N), lambda g, i: (g, 0, 0))],
        out_specs=pl.BlockSpec((1, tm, N), lambda g, i: (g, i, 0)),
        compiler_params=_params("parallel", "parallel"),
    )(x, w, b)


def _ln_grouped_linear_kernel(x_ref, g_ref, b_ref, w_ref, wb_ref, o_ref, *, eps):
    h = _ln(x_ref[...], g_ref[...], b_ref[...], eps).astype(w_ref.dtype)
    w = w_ref[...].reshape(w_ref.shape[1:])
    wb = wb_ref[...].reshape(1, wb_ref.shape[-1])
    y = jnp.dot(h, w, preferred_element_type=jnp.float32) + wb
    o_ref[...] = y.reshape(o_ref.shape).astype(o_ref.dtype)


def ln_grouped_linear(x, gamma, beta, w, wb, eps=LN_EPS):
    # final-LN fused into the per-content-vector contextualization q/k projection.
    M, D = x.shape
    G, _, N = w.shape
    tm = _tile_rows(M)
    return pl.pallas_call(
        partial(_ln_grouped_linear_kernel, eps=eps),
        out_shape=jax.ShapeDtypeStruct((G, M, N), jnp.bfloat16),
        grid=(G, M // tm),
        in_specs=[pl.BlockSpec((tm, D), lambda g, i: (i, 0)),
                  pl.BlockSpec((1, D), lambda g, i: (0, 0)),
                  pl.BlockSpec((1, D), lambda g, i: (0, 0)),
                  pl.BlockSpec((1, D, N), lambda g, i: (g, 0, 0)),
                  pl.BlockSpec((1, 1, N), lambda g, i: (g, 0, 0))],
        out_specs=pl.BlockSpec((1, tm, N), lambda g, i: (g, i, 0)),
        compiler_params=_params("parallel", "parallel"),
    )(x, gamma.reshape(1, D), beta.reshape(1, D), w, wb)


def _mha_kernel(qkv_ref, o_ref, *, scale):
    blk = qkv_ref[...]                                   # (1, 3, 1, S, Dh) bf16
    S, Dh = blk.shape[-2], blk.shape[-1]
    qkv = blk.reshape(3, S, Dh)
    q, k, v = qkv[0], qkv[1], qkv[2]
    s = jax.lax.dot_general(q, k, (((1,), (1,)), ((), ())),
                            preferred_element_type=jnp.float32) * scale
    p = _causal_softmax(s)
    out = jnp.dot(p.astype(v.dtype), v, preferred_element_type=jnp.float32)
    o_ref[...] = out.reshape(o_ref.shape).astype(o_ref.dtype)


def causal_mha(qkv, B, S, H, Dh):
    # TODO(synk): non-online softmax holds full (S,S) scores in VMEM; switch to a
    # flash-style online softmax (tile the key axis) for long sequences, esp. on v7x.
    D = H * Dh
    # head-major layout so each (batch, head) grid step reads a dense (3, S, Dh) tile.
    qkv5 = qkv.reshape(B, S, 3, H, Dh).transpose(0, 2, 3, 1, 4)      # (B, 3, H, S, Dh)
    out = pl.pallas_call(
        partial(_mha_kernel, scale=1.0 / math.sqrt(Dh)),
        out_shape=jax.ShapeDtypeStruct((B, H, S, Dh), jnp.bfloat16),
        grid=(B, H),
        in_specs=[pl.BlockSpec((1, 3, 1, S, Dh), lambda b, h: (b, 0, h, 0, 0))],
        out_specs=pl.BlockSpec((1, 1, S, Dh), lambda b, h: (b, h, 0, 0)),
        compiler_params=_params("parallel", "parallel"),
    )(qkv5)
    return out.transpose(0, 2, 1, 3).reshape(B * S, D)               # back to token-major


def _ctx_mix_kernel(qk_ref, c_ref, o_ref, acc_sc, *, scale, dv):
    # Fused contextualization scores + content mix:
    #   out[b] += softmax(causal(q_n @ k_n^T * scale)) @ content_n   (sum over n = NV)
    # The (S, S) prob map lives only in VMEM; NV is a grid reduction axis.
    n = pl.program_id(1)

    @pl.when(n == 0)
    def _():
        acc_sc[...] = jnp.zeros_like(acc_sc)

    qk = qk_ref[...].reshape(qk_ref.shape[-2], qk_ref.shape[-1])     # (S, 2*Dv) bf16
    q, k = qk[:, :dv], qk[:, dv:]
    s = jax.lax.dot_general(q, k, (((1,), (1,)), ((), ())),
                            preferred_element_type=jnp.float32) * scale
    p = _causal_softmax(s)
    c = c_ref[...].reshape(c_ref.shape[-2], c_ref.shape[-1])         # (S, D) bf16
    acc_sc[...] += jnp.dot(p.astype(c.dtype), c, preferred_element_type=jnp.float32)

    @pl.when(n == pl.num_programs(1) - 1)
    def _():
        o_ref[...] = acc_sc[...].reshape(o_ref.shape).astype(o_ref.dtype)


def contextual_mix(qk_nv, content_nv, B, S, NV, Dv, D):
    # qk_nv: (NV, B*S, 2*Dv) bf16 (q | k packed along lanes); content_nv: (NV, B*S, D) bf16.
    # TODO(synk): for v7x small-batch, add a query-row tile axis marked parallel for megacore.
    qk4 = qk_nv.reshape(NV, B, S, 2 * Dv)
    c4 = content_nv.reshape(NV, B, S, D)
    return pl.pallas_call(
        partial(_ctx_mix_kernel, scale=1.0 / math.sqrt(Dv), dv=Dv),
        out_shape=jax.ShapeDtypeStruct((B, S, D), jnp.bfloat16),
        grid=(B, NV),
        in_specs=[pl.BlockSpec((1, 1, S, 2 * Dv), lambda b, n: (n, b, 0, 0)),
                  pl.BlockSpec((1, 1, S, D), lambda b, n: (n, b, 0, 0))],
        out_specs=pl.BlockSpec((1, S, D), lambda b, n: (b, 0, 0)),
        scratch_shapes=[pltpu.VMEM((S, D), jnp.float32)],
        compiler_params=_params("parallel", "arbitrary"),
    )(qk4, c4)


def _lm_head_kernel(x_ref, w_ref, o_ref):
    # logits tile = x @ wte_tile^T (contraction on dim 1 of both; no transpose copy).
    o_ref[...] = jax.lax.dot_general(
        x_ref[...].astype(w_ref.dtype), w_ref[...],
        (((1,), (1,)), ((), ())), preferred_element_type=jnp.float32)


def lm_head(x, wte):
    M, D = x.shape
    V = wte.shape[0]
    Vp = ((V + 127) // 128) * 128
    if Vp != V:
        wte = jnp.pad(wte, ((0, Vp - V), (0, 0)))   # lane-align the vocab, slice after
    tm = _tile_rows(M, cap=1024)                    # big row tile: x stays resident
    tv = _tile_cols(Vp, cap=1024)
    logits = pl.pallas_call(
        _lm_head_kernel,
        out_shape=jax.ShapeDtypeStruct((M, Vp), jnp.float32),
        grid=(M // tm, Vp // tv),                   # M outer: x block constant over vocab sweep
        in_specs=[pl.BlockSpec((tm, D), lambda i, j: (i, 0)),
                  pl.BlockSpec((tv, D), lambda i, j: (j, 0))],
        out_specs=pl.BlockSpec((tm, tv), lambda i, j: (i, j)),
        compiler_params=_params("parallel", "parallel"),
    )(x, wte)
    return logits[:, :V] if Vp != V else logits


# ----------------------------- model forward -----------------------------

def backpack_forward(params, input_ids, cfg):
    B, S = input_ids.shape
    D = cfg["n_embd"]
    H = cfg["n_head"]
    Dh = D // H
    NV = cfg["num_content_vectors"]
    Dv = D // NV
    M = B * S
    wte, wpe = params["wte"], params["wpe"]           # bf16

    # ----- GPT2 contextual model (shifted-prenorm); every LN fused into its consumer -----
    pos = jnp.arange(S, dtype=jnp.int32)
    emb = (jnp.take(wte, input_ids, axis=0).astype(jnp.float32)
           + jnp.take(wpe, pos, axis=0)[None].astype(jnp.float32))
    residual = emb.reshape(M, D)                      # fp32 residual (dropout = identity)
    ln_in = params["gpt2_ln0"]
    for layer in params["layers"]:
        qkv = ln_linear(residual, *ln_in, layer["wqkv_w"], layer["wqkv_b"])     # (M,3D) bf16
        attn = causal_mha(qkv, B, S, H, Dh)                                     # (M, D) bf16
        res1 = linear_add(attn, layer["out_w"], layer["out_b"], residual)       # (M, D) f32
        residual = ln_mlp_add(res1, *layer["norm1"],
                              layer["fc1_w"], layer["fc1_b"],
                              layer["fc2_w"], layer["fc2_b"])                   # (M, D) f32
        ln_in = layer["norm2"]

    # contextualization q/k per content vector (final LN fused; q|k packed along lanes)
    qk_nv = ln_grouped_linear(residual, *ln_in,
                              params["ctx_wqk"], params["ctx_bqk"])             # (NV,M,2Dv) bf16

    # ----- content model (word embeddings only, one Identity-mixer block, expand MLP) -----
    cp = params["content"]
    c_resid = jnp.take(wte, input_ids, axis=0).astype(jnp.float32).reshape(M, D)
    h2 = content_block(c_resid, *cp["ln0"], *cp["norm1"],
                       cp["fc1_w"], cp["fc1_b"], cp["fc2_w"], cp["fc2_b"],
                       *cp["norm2"])                                            # (M, D) bf16
    h_final = linear(h2, cp["final_fc1_w"], cp["final_fc1_b"], act="gelu")      # (M, I) bf16
    content_nv = grouped_linear(h_final, cp["final_fc2_w"], cp["final_fc2_b"])  # (NV,M,D) bf16

    # ----- fused softmax(causal scores) @ content, summed over content vectors -----
    mixed = contextual_mix(qk_nv, content_nv, B, S, NV, Dv, D)                  # (B,S,D) bf16

    # ----- tied LM head (weight == word embedding matrix, no bias) -----
    logits = lm_head(mixed.reshape(M, D), wte)
    return logits.reshape(B, S, wte.shape[0])


# ----------------------------- parameter init -----------------------------

def init_params(key, cfg):
    V, D, I = cfg["vocab_size"], cfg["n_embd"], cfg["n_inner"]
    NV, NL, P = cfg["num_content_vectors"], cfg["n_layer"], cfg["n_positions"]
    Dv = D // NV
    std = 0.02
    rescale_gpt = std / math.sqrt(2 * NL)       # out_proj.weight / fc2.weight rescale
    rescale_content = std / math.sqrt(2 * 1)    # content module has a single block

    keys = iter(jax.random.split(key, 64))

    def nrm(shape, s=std):
        return (s * jax.random.normal(next(keys), shape, dtype=jnp.float32)
                ).astype(jnp.bfloat16)

    ones = lambda n: jnp.ones((n,), jnp.float32)
    zeros = lambda *shape: jnp.zeros(shape, jnp.float32)

    params = {
        "wte": nrm((V, D)),
        "wpe": nrm((P, D)),
        "gpt2_ln0": (ones(D), zeros(D)),
    }

    # contextualization Wqkv (D -> 2D) stored per content vector with q|k packed on lanes:
    # (NV, D, 2*Dv), columns [q_n | k_n]  (no runtime transposes in the forward).
    w_ctx = nrm((D, 2 * D))
    params["ctx_wqk"] = (w_ctx.reshape(D, 2, NV, Dv)
                         .transpose(2, 0, 1, 3).reshape(NV, D, 2 * Dv))
    params["ctx_bqk"] = zeros(NV, 1, 2 * Dv)

    layers = []
    for _ in range(NL):
        layers.append({
            "wqkv_w": nrm((D, 3 * D)), "wqkv_b": zeros(3 * D),
            "out_w": nrm((D, D), rescale_gpt), "out_b": zeros(D),
            "norm1": (ones(D), zeros(D)),
            "fc1_w": nrm((D, I)), "fc1_b": zeros(I),
            "fc2_w": nrm((I, D), rescale_gpt), "fc2_b": zeros(D),
            "norm2": (ones(D), zeros(D)),
        })
    params["layers"] = layers

    w_final2 = nrm((I, NV * D), rescale_content)
    params["content"] = {
        "ln0": (ones(D), zeros(D)),
        "norm1": (ones(D), zeros(D)),
        "norm2": (ones(D), zeros(D)),
        "fc1_w": nrm((D, I)), "fc1_b": zeros(I),
        "fc2_w": nrm((I, D), rescale_content), "fc2_b": zeros(D),
        "final_fc1_w": nrm((D, I)), "final_fc1_b": zeros(I),
        # final fc2 (I -> NV*D) stored as (NV, I, D): content produced directly in
        # content-vector-major layout, consumed in-place by contextual_mix.
        "final_fc2_w": w_final2.reshape(I, NV, D).transpose(1, 0, 2),
        "final_fc2_b": zeros(NV, 1, D),
    }
    return params


# ----------------------------- main -----------------------------

if __name__ == "__main__":
    cfg = dict(
        vocab_size=128,
        n_embd=32,
        n_head=4,
        n_layer=2,
        n_inner=128,               # 4 * hidden
        n_positions=64,
        num_content_vectors=4,
    )
    key = jax.random.PRNGKey(0)
    pkey, dkey = jax.random.split(key)
    params = init_params(pkey, cfg)

    B, S = 2, 8
    input_ids = jax.random.randint(dkey, (B, S), 0, cfg["vocab_size"], dtype=jnp.int32)

    fwd = jax.jit(partial(backpack_forward, cfg=cfg))
    logits = fwd(params, input_ids)
    logits = jax.block_until_ready(logits)

    assert logits.shape == (B, S, cfg["vocab_size"]), logits.shape
    assert bool(jnp.all(jnp.isfinite(logits)))
    # TODO(synk): dropout layers (embd/resid/attn pdrop) are treated as identity (eval mode).
    print("KERNEL_OK")
</pallas_src>

<mosaic_0001>
module attributes {stable_mosaic.version = 11 : i64} {
  func.func @_ln_linear_kernel(%arg0: i32, %arg1: i32, %arg2: memref<16x32xf32, #tpu.memory_space<vmem>>, %arg3: memref<1x32xf32, #tpu.memory_space<vmem>>, %arg4: memref<1x32xf32, #tpu.memory_space<vmem>>, %arg5: memref<32x96xbf16, #tpu.memory_space<vmem>>, %arg6: memref<1x96xf32, #tpu.memory_space<vmem>>, %arg7: memref<16x96xbf16, #tpu.memory_space<vmem>>) attributes {dimension_semantics = [#tpu.dimension_semantics<parallel>, #tpu.dimension_semantics<parallel>], iteration_bounds = array<i64: 1, 1>, scalar_prefetch = 0 : i64, scratch_operands = 0 : i64, tpu.core_type = #tpu.core_type<tc>, window_params = [{transform_indices = @transform_0, window_bounds = array<i64: 16, 32>}, {pipeline_mode = #tpu.pipeline_mode<synchronous>, transform_indices = @transform_1, window_bounds = array<i64: 1, 32>}, {pipeline_mode = #tpu.pipeline_mode<synchronous>, transform_indices = @transform_2, window_bounds = array<i64: 1, 32>}, {transform_indices = @transform_3, window_bounds = array<i64: 32, 96>}, {transform_indices = @transform_4, window_bounds = array<i64: 1, 96>}, {transform_indices = @transform_5, window_bounds = array<i64: 16, 96>}]} {
    %c0 = arith.constant 0 : index
    %c0_0 = arith.constant 0 : index
    %0 = vector.load %arg2[%c0, %c0_0] : memref<16x32xf32, #tpu.memory_space<vmem>>, vector<16x32xf32>
    %c0_1 = arith.constant 0 : index
    %c0_2 = arith.constant 0 : index
    %1 = vector.load %arg3[%c0_1, %c0_2] : memref<1x32xf32, #tpu.memory_space<vmem>>, vector<1x32xf32>
    %c0_3 = arith.constant 0 : index
    %c0_4 = arith.constant 0 : index
    %2 = vector.load %arg4[%c0_3, %c0_4] : memref<1x32xf32, #tpu.memory_space<vmem>>, vector<1x32xf32>
    %cst = arith.constant dense<0.000000e+00> : vector<16xf32>
    %3 = vector.multi_reduction <add>, %0, %cst [1] : vector<16x32xf32> to vector<16xf32>
    %4 = vector.shape_cast %3 : vector<16xf32> to vector<16x1xf32>
    %cst_5 = arith.constant 3.200000e+01 : f32
    %5 = vector.broadcast %cst_5 : f32 to vector<16x1xf32>
    %6 = arith.divf %4, %5 : vector<16x1xf32>
    %7 = vector.broadcast %6 : vector<16x1xf32> to vector<16x32xf32>
    %8 = arith.subf %0, %7 : vector<16x32xf32>
    %9 = arith.mulf %8, %8 : vector<16x32xf32>
    %cst_6 = arith.constant dense<0.000000e+00> : vector<16xf32>
    %10 = vector.multi_reduction <add>, %9, %cst_6 [1] : vector<16x32xf32> to vector<16xf32>
    %11 = vector.shape_cast %10 : vector<16xf32> to vector<16x1xf32>
    %cst_7 = arith.constant 3.200000e+01 : f32
    %12 = vector.broadcast %cst_7 : f32 to vector<16x1xf32>
    %13 = arith.divf %11, %12 : vector<16x1xf32>
    %14 = vector.broadcast %6 : vector<16x1xf32> to vector<16x32xf32>
    %15 = arith.subf %0, %14 : vector<16x32xf32>
    %cst_8 = arith.constant 9.99999974E-6 : f32
    %16 = vector.broadcast %cst_8 : f32 to vector<16x1xf32>
    %17 = arith.addf %13, %16 : vector<16x1xf32>
    %18 = math.rsqrt %17 : vector<16x1xf32>
    %19 = vector.broadcast %18 : vector<16x1xf32> to vector<16x32xf32>
    %20 = arith.mulf %15, %19 : vector<16x32xf32>
    %21 = vector.broadcast %1 : vector<1x32xf32> to vector<16x32xf32>
    %22 = arith.mulf %20, %21 : vector<16x32xf32>
    %23 = vector.broadcast %2 : vector<1x32xf32> to vector<16x32xf32>
    %24 = arith.addf %22, %23 : vector<16x32xf32>
    %25 = arith.truncf %24 : vector<16x32xf32> to vector<16x32xbf16>
    %c0_9 = arith.constant 0 : index
    %c0_10 = arith.constant 0 : index
    %26 = vector.load %arg5[%c0_9, %c0_10] : memref<32x96xbf16, #tpu.memory_space<vmem>>, vector<32x96xbf16>
    %cst_11 = arith.constant dense<0.000000e+00> : vector<16x96xf32>
    %27 = tpu.matmul %25, %26, %cst_11 {dimension_numbers = #tpu.dot_dimension_numbers<[1], [0], [0], [1], [0, 0, 1, 1], [], []>} : vector<16x32xbf16>, vector<32x96xbf16>, vector<16x96xf32> -> vector<16x96xf32>
    %c0_12 = arith.constant 0 : index
    %c0_13 = arith.constant 0 : index
    %28 = vector.load %arg6[%c0_12, %c0_13] : memref<1x96xf32, #tpu.memory_space<vmem>>, vector<1x96xf32>
    %29 = vector.broadcast %28 : vector<1x96xf32> to vector<16x96xf32>
    %30 = arith.addf %27, %29 : vector<16x96xf32>
    %31 = arith.truncf %30 : vector<16x96xf32> to vector<16x96xbf16>
    %c0_14 = arith.constant 0 : index
    %c0_15 = arith.constant 0 : index
    %32 = vector.load %arg7[%c0_14, %c0_15] : memref<16x96xbf16, #tpu.memory_space<vmem>>, vector<16x96xbf16>
    tpu.vector_store %arg7[%c0_14, %c0_15], %31 {strides = array<i32>} : memref<16x96xbf16, #tpu.memory_space<vmem>>, vector<16x96xbf16>,
    return
  }
  func.func @transform_0(%arg0: i32, %arg1: i32) -> (i32, i32) {
    %c0_i32 = arith.constant 0 : i32
    %c0_i32_0 = arith.constant 0 : i32
    return %arg0, %c0_i32 : i32, i32
  }
  func.func @transform_1(%arg0: i32, %arg1: i32) -> (i32, i32) {
    %c0_i32 = arith.constant 0 : i32
    %c0_i32_0 = arith.constant 0 : i32
    %c0_i32_1 = arith.constant 0 : i32
    return %c0_i32, %c0_i32_0 : i32, i32
  }
  func.func @transform_2(%arg0: i32, %arg1: i32) -> (i32, i32) {
    %c0_i32 = arith.constant 0 : i32
    %c0_i32_0 = arith.constant 0 : i32
    %c0_i32_1 = arith.constant 0 : i32
    return %c0_i32, %c0_i32_0 : i32, i32
  }
  func.func @transform_3(%arg0: i32, %arg1: i32) -> (i32, i32) {
    %c0_i32 = arith.constant 0 : i32
    %c0_i32_0 = arith.constant 0 : i32
    return %c0_i32, %arg1 : i32, i32
  }
  func.func @transform_4(%arg0: i32, %arg1: i32) -> (i32, i32) {
    %c0_i32 = arith.constant 0 : i32
    %c0_i32_0 = arith.constant 0 : i32
    return %c0_i32, %arg1 : i32, i32
  }
  func.func @transform_5(%arg0: i32, %arg1: i32) -> (i32, i32) {
    %c0_i32 = arith.constant 0 : i32
    return %arg0, %arg1 : i32, i32
  }
}

module attributes {stable_mosaic.version = 11 : i64} {
  func.func @_mha_kernel(%arg0: i32, %arg1: i32, %arg2: memref<1x3x1x8x8xbf16, #tpu.memory_space<vmem>>, %arg3: memref<1x1x8x8xbf16, #tpu.memory_space<vmem>>) attributes {dimension_semantics = [#tpu.dimension_semantics<parallel>, #tpu.dimension_semantics<parallel>], iteration_bounds = array<i64: 2, 4>, scalar_prefetch = 0 : i64, scratch_operands = 0 : i64, tpu.core_type = #tpu.core_type<tc>, window_params = [{transform_indices = @transform_0, window_bounds = array<i64: 1, 3, 1, 8, 8>}, {transform_indices = @transform_1, window_bounds = array<i64: 1, 1, 8, 8>}]} {
    %c0 = arith.constant 0 : index
    %c0_0 = arith.constant 0 : index
    %c0_1 = arith.constant 0 : index
    %c0_2 = arith.constant 0 : index
    %c0_3 = arith.constant 0 : index
    %0 = vector.load %arg2[%c0, %c0_0, %c0_1, %c0_2, %c0_3] : memref<1x3x1x8x8xbf16, #tpu.memory_space<vmem>>, vector<1x3x1x8x8xbf16>
    %1 = vector.shape_cast %0 : vector<1x3x1x8x8xbf16> to vector<3x8x8xbf16>
    %2 = vector.extract_strided_slice %1 {offsets = [0, 0, 0], sizes = [1, 8, 8], strides = [1, 1, 1]} : vector<3x8x8xbf16> to vector<1x8x8xbf16>
    %3 = vector.shape_cast %2 : vector<1x8x8xbf16> to vector<8x8xbf16>
    %4 = vector.extract_strided_slice %1 {offsets = [1, 0, 0], sizes = [1, 8, 8], strides = [1, 1, 1]} : vector<3x8x8xbf16> to vector<1x8x8xbf16>
    %5 = vector.shape_cast %4 : vector<1x8x8xbf16> to vector<8x8xbf16>
    %6 = vector.extract_strided_slice %1 {offsets = [2, 0, 0], sizes = [1, 8, 8], strides = [1, 1, 1]} : vector<3x8x8xbf16> to vector<1x8x8xbf16>
    %7 = vector.shape_cast %6 : vector<1x8x8xbf16> to vector<8x8xbf16>
    %cst = arith.constant dense<0.000000e+00> : vector<8x8xf32>
    %8 = tpu.matmul %3, %5, %cst {dimension_numbers = #tpu.dot_dimension_numbers<[1], [1], [0], [0], [0, 0, 1, 0], [], []>} : vector<8x8xbf16>, vector<8x8xbf16>, vector<8x8xf32> -> vector<8x8xf32>
    %cst_4 = arith.constant 0.353553385 : f32
    %9 = vector.broadcast %cst_4 : f32 to vector<8x8xf32>
    %10 = arith.mulf %8, %9 : vector<8x8xf32>
    %11 = tpu.iota {dimensions = array<i32: 0>} : vector<8x8xi32>
    %12 = tpu.iota {dimensions = array<i32: 1>} : vector<8x8xi32>
    %13 = arith.cmpi sgt, %12, %11 : vector<8x8xi32>
    %cst_5 = arith.constant 1.000000e+04 : f32
    %14 = vector.broadcast %cst_5 : f32 to vector<8x8xf32>
    %15 = arith.subf %10, %14 : vector<8x8xf32>
    %16 = arith.select %13, %15, %10 : vector<8x8xi1>, vector<8x8xf32>
    %cst_6 = arith.constant dense<0xFF800000> : vector<8xf32>
    %17 = vector.multi_reduction <maximumf>, %16, %cst_6 [1] : vector<8x8xf32> to vector<8xf32>
    %18 = vector.shape_cast %17 : vector<8xf32> to vector<8x1xf32>
    %19 = vector.broadcast %18 : vector<8x1xf32> to vector<8x8xf32>
    %20 = arith.subf %16, %19 : vector<8x8xf32>
    %21 = math.exp %20 : vector<8x8xf32>
    %cst_7 = arith.constant dense<0.000000e+00> : vector<8xf32>
    %22 = vector.multi_reduction <add>, %21, %cst_7 [1] : vector<8x8xf32> to vector<8xf32>
    %23 = vector.shape_cast %22 : vector<8xf32> to vector<8x1xf32>
    %24 = tpu.reciprocal %23 {approx = true} : vector<8x1xf32> -> vector<8x1xf32>
    %25 = vector.broadcast %24 : vector<8x1xf32> to vector<8x8xf32>
    %26 = arith.mulf %21, %25 : vector<8x8xf32>
    %27 = arith.truncf %26 : vector<8x8xf32> to vector<8x8xbf16>
    %cst_8 = arith.constant dense<0.000000e+00> : vector<8x8xf32>
    %28 = tpu.matmul %27, %7, %cst_8 {dimension_numbers = #tpu.dot_dimension_numbers<[1], [0], [0], [1], [0, 0, 1, 1], [], []>} : vector<8x8xbf16>, vector<8x8xbf16>, vector<8x8xf32> -> vector<8x8xf32>
    %29 = vector.shape_cast %28 : vector<8x8xf32> to vector<1x1x8x8xf32>
    %30 = arith.truncf %29 : vector<1x1x8x8xf32> to vector<1x1x8x8xbf16>
    %c0_9 = arith.constant 0 : index
    %c0_10 = arith.constant 0 : index
    %c0_11 = arith.constant 0 : index
    %c0_12 = arith.constant 0 : index
    %31 = vector.load %arg3[%c0_9, %c0_10, %c0_11, %c0_12] : memref<1x1x8x8xbf16, #tpu.memory_space<vmem>>, vector<1x1x8x8xbf16>
    tpu.vector_store %arg3[%c0_9, %c0_10, %c0_11, %c0_12], %30 {strides = array<i32>} : memref<1x1x8x8xbf16, #tpu.memory_space<vmem>>, vector<1x1x8x8xbf16>,
    return
  }
  func.func @transform_0(%arg0: i32, %arg1: i32) -> (i32, i32, i32, i32, i32) {
    %c0_i32 = arith.constant 0 : i32
    %c0_i32_0 = arith.constant 0 : i32
    %c0_i32_1 = arith.constant 0 : i32
    %c0_i32_2 = arith.constant 0 : i32
    return %arg0, %c0_i32, %arg1, %c0_i32_0, %c0_i32_1 : i32, i32, i32, i32, i32
  }
  func.func @transform_1(%arg0: i32, %arg1: i32) -> (i32, i32, i32, i32) {
    %c0_i32 = arith.constant 0 : i32
    %c0_i32_0 = arith.constant 0 : i32
    %c0_i32_1 = arith.constant 0 : i32
    return %arg0, %arg1, %c0_i32, %c0_i32_0 : i32, i32, i32, i32
  }
}

module attributes {stable_mosaic.version = 11 : i64} {
  func.func @_linear_add_kernel(%arg0: i32, %arg1: memref<16x32xbf16, #tpu.memory_space<vmem>>, %arg2: memref<32x32xbf16, #tpu.memory_space<vmem>>, %arg3: memref<1x32xf32, #tpu.memory_space<vmem>>, %arg4: memref<16x32xf32, #tpu.memory_space<vmem>>, %arg5: memref<16x32xf32, #tpu.memory_space<vmem>>) attributes {dimension_semantics = [#tpu.dimension_semantics<parallel>], iteration_bounds = array<i64: 1>, scalar_prefetch = 0 : i64, scratch_operands = 0 : i64, tpu.core_type = #tpu.core_type<tc>, window_params = [{transform_indices = @transform_0, window_bounds = array<i64: 16, 32>}, {pipeline_mode = #tpu.pipeline_mode<synchronous>, transform_indices = @transform_1, window_bounds = array<i64: 32, 32>}, {pipeline_mode = #tpu.pipeline_mode<synchronous>, transform_indices = @transform_2, window_bounds = array<i64: 1, 32>}, {transform_indices = @transform_3, window_bounds = array<i64: 16, 32>}, {transform_indices = @transform_4, window_bounds = array<i64: 16, 32>}]} {
    %c0 = arith.constant 0 : index
    %c0_0 = arith.constant 0 : index
    %0 = vector.load %arg1[%c0, %c0_0] : memref<16x32xbf16, #tpu.memory_space<vmem>>, vector<16x32xbf16>
    %c0_1 = arith.constant 0 : index
    %c0_2 = arith.constant 0 : index
    %1 = vector.load %arg2[%c0_1, %c0_2] : memref<32x32xbf16, #tpu.memory_space<vmem>>, vector<32x32xbf16>
    %cst = arith.constant dense<0.000000e+00> : vector<16x32xf32>
    %2 = tpu.matmul %0, %1, %cst {dimension_numbers = #tpu.dot_dimension_numbers<[1], [0], [0], [1], [0, 0, 1, 1], [], []>} : vector<16x32xbf16>, vector<32x32xbf16>, vector<16x32xf32> -> vector<16x32xf32>
    %c0_3 = arith.constant 0 : index
    %c0_4 = arith.constant 0 : index
    %3 = vector.load %arg3[%c0_3, %c0_4] : memref<1x32xf32, #tpu.memory_space<vmem>>, vector<1x32xf32>
    %4 = vector.broadcast %3 : vector<1x32xf32> to vector<16x32xf32>
    %5 = arith.addf %2, %4 : vector<16x32xf32>
    %c0_5 = arith.constant 0 : index
    %c0_6 = arith.constant 0 : index
    %6 = vector.load %arg4[%c0_5, %c0_6] : memref<16x32xf32, #tpu.memory_space<vmem>>, vector<16x32xf32>
    %7 = arith.addf %5, %6 : vector<16x32xf32>
    %c0_7 = arith.constant 0 : index
    %c0_8 = arith.constant 0 : index
    %8 = vector.load %arg5[%c0_7, %c0_8] : memref<16x32xf32, #tpu.memory_space<vmem>>, vector<16x32xf32>
    tpu.vector_store %arg5[%c0_7, %c0_8], %7 {strides = array<i32>} : memref<16x32xf32, #tpu.memory_space<vmem>>, vector<16x32xf32>,
    return
  }
  func.func @transform_0(%arg0: i32) -> (i32, i32) {
    %c0_i32 = arith.constant 0 : i32
    %c0_i32_0 = arith.constant 0 : i32
    return %arg0, %c0_i32 : i32, i32
  }
  func.func @transform_1(%arg0: i32) -> (i32, i32) {
    %c0_i32 = arith.constant 0 : i32
    %c0_i32_0 = arith.constant 0 : i32
    %c0_i32_1 = arith.constant 0 : i32
    return %c0_i32, %c0_i32_0 : i32, i32
  }
  func.func @transform_2(%arg0: i32) -> (i32, i32) {
    %c0_i32 = arith.constant 0 : i32
    %c0_i32_0 = arith.constant 0 : i32
    %c0_i32_1 = arith.constant 0 : i32
    return %c0_i32, %c0_i32_0 : i32, i32
  }
  func.func @transform_3(%arg0: i32) -> (i32, i32) {
    %c0_i32 = arith.constant 0 : i32
    %c0_i32_0 = arith.constant 0 : i32
    return %arg0, %c0_i32 : i32, i32
  }
  func.func @transform_4(%arg0: i32) -> (i32, i32) {
    %c0_i32 = arith.constant 0 : i32
    %c0_i32_0 = arith.constant 0 : i32
    return %arg0, %c0_i32 : i32, i32
  }
}

module attributes {stable_mosaic.version = 11 : i64} {
  func.func @_ln_mlp_add_kernel(%arg0: i32, %arg1: i32, %arg2: memref<16x32xf32, #tpu.memory_space<vmem>>, %arg3: memref<1x32xf32, #tpu.memory_space<vmem>>, %arg4: memref<1x32xf32, #tpu.memory_space<vmem>>, %arg5: memref<32x128xbf16, #tpu.memory_space<vmem>>, %arg6: memref<1x128xf32, #tpu.memory_space<vmem>>, %arg7: memref<128x32xbf16, #tpu.memory_space<vmem>>, %arg8: memref<1x32xf32, #tpu.memory_space<vmem>>, %arg9: memref<16x32xf32, #tpu.memory_space<vmem>>, %arg10: memref<16x32xbf16, #tpu.memory_space<vmem>>, %arg11: memref<16x32xf32, #tpu.memory_space<vmem>>) attributes {dimension_semantics = [#tpu.dimension_semantics<parallel>, #tpu.dimension_semantics<arbitrary>], iteration_bounds = array<i64: 1, 1>, scalar_prefetch = 0 : i64, scratch_operands = 2 : i64, tpu.core_type = #tpu.core_type<tc>, window_params = [{transform_indices = @transform_0, window_bounds = array<i64: 16, 32>}, {pipeline_mode = #tpu.pipeline_mode<synchronous>, transform_indices = @transform_1, window_bounds = array<i64: 1, 32>}, {pipeline_mode = #tpu.pipeline_mode<synchronous>, transform_indices = @transform_2, window_bounds = array<i64: 1, 32>}, {transform_indices = @transform_3, window_bounds = array<i64: 32, 128>}, {transform_indices = @transform_4, window_bounds = array<i64: 1, 128>}, {transform_indices = @transform_5, window_bounds = array<i64: 128, 32>}, {pipeline_mode = #tpu.pipeline_mode<synchronous>, transform_indices = @transform_6, window_bounds = array<i64: 1, 32>}, {transform_indices = @transform_7, window_bounds = array<i64: 16, 32>}]} {
    %c0_i32 = arith.constant 0 : i32
    %0 = arith.cmpi eq, %arg1, %c0_i32 : i32
    %1 = arith.extui %0 : i1 to i32
    %c0_i32_0 = arith.constant 0 : i32
    %2 = arith.cmpi ne, %1, %c0_i32_0 : i32
    scf.if %2 {
      %c0_19 = arith.constant 0 : index
      %c0_20 = arith.constant 0 : index
      %31 = vector.load %arg2[%c0_19, %c0_20] : memref<16x32xf32, #tpu.memory_space<vmem>>, vector<16x32xf32>
      %c0_21 = arith.constant 0 : index
      %c0_22 = arith.constant 0 : index
      %32 = vector.load %arg3[%c0_21, %c0_22] : memref<1x32xf32, #tpu.memory_space<vmem>>, vector<1x32xf32>
      %c0_23 = arith.constant 0 : index
      %c0_24 = arith.constant 0 : index
      %33 = vector.load %arg4[%c0_23, %c0_24] : memref<1x32xf32, #tpu.memory_space<vmem>>, vector<1x32xf32>
      %cst_25 = arith.constant dense<0.000000e+00> : vector<16xf32>
      %34 = vector.multi_reduction <add>, %31, %cst_25 [1] : vector<16x32xf32> to vector<16xf32>
      %35 = vector.shape_cast %34 : vector<16xf32> to vector<16x1xf32>
      %cst_26 = arith.constant 3.200000e+01 : f32
      %36 = vector.broadcast %cst_26 : f32 to vector<16x1xf32>
      %37 = arith.divf %35, %36 : vector<16x1xf32>
      %38 = vector.broadcast %37 : vector<16x1xf32> to vector<16x32xf32>
      %39 = arith.subf %31, %38 : vector<16x32xf32>
      %40 = arith.mulf %39, %39 : vector<16x32xf32>
      %cst_27 = arith.constant dense<0.000000e+00> : vector<16xf32>
      %41 = vector.multi_reduction <add>, %40, %cst_27 [1] : vector<16x32xf32> to vector<16xf32>
      %42 = vector.shape_cast %41 : vector<16xf32> to vector<16x1xf32>
      %cst_28 = arith.constant 3.200000e+01 : f32
      %43 = vector.broadcast %cst_28 : f32 to vector<16x1xf32>
      %44 = arith.divf %42, %43 : vector<16x1xf32>
      %45 = vector.broadcast %37 : vector<16x1xf32> to vector<16x32xf32>
      %46 = arith.subf %31, %45 : vector<16x32xf32>
      %cst_29 = arith.constant 9.99999974E-6 : f32
      %47 = vector.broadcast %cst_29 : f32 to vector<16x1xf32>
      %48 = arith.addf %44, %47 : vector<16x1xf32>
      %49 = math.rsqrt %48 : vector<16x1xf32>
      %50 = vector.broadcast %49 : vector<16x1xf32> to vector<16x32xf32>
      %51 = arith.mulf %46, %50 : vector<16x32xf32>
      %52 = vector.broadcast %32 : vector<1x32xf32> to vector<16x32xf32>
      %53 = arith.mulf %51, %52 : vector<16x32xf32>
      %54 = vector.broadcast %33 : vector<1x32xf32> to vector<16x32xf32>
      %55 = arith.addf %53, %54 : vector<16x32xf32>
      %56 = arith.truncf %55 : vector<16x32xf32> to vector<16x32xbf16>
      %c0_30 = arith.constant 0 : index
      %c0_31 = arith.constant 0 : index
      %57 = vector.load %arg10[%c0_30, %c0_31] : memref<16x32xbf16, #tpu.memory_space<vmem>>, vector<16x32xbf16>
      tpu.vector_store %arg10[%c0_30, %c0_31], %56 {strides = array<i32>} : memref<16x32xbf16, #tpu.memory_space<vmem>>, vector<16x32xbf16>,
      %cst_32 = arith.constant 0.000000e+00 : f32
      %58 = vector.broadcast %cst_32 : f32 to vector<16x32xf32>
      %c0_33 = arith.constant 0 : index
      %c0_34 = arith.constant 0 : index
      %59 = vector.load %arg11[%c0_33, %c0_34] : memref<16x32xf32, #tpu.memory_space<vmem>>, vector<16x32xf32>
      tpu.vector_store %arg11[%c0_33, %c0_34], %58 {strides = array<i32>} : memref<16x32xf32, #tpu.memory_space<vmem>>, vector<16x32xf32>,
    } else {
    }
    %c0 = arith.constant 0 : index
    %c0_1 = arith.constant 0 : index
    %3 = vector.load %arg10[%c0, %c0_1] : memref<16x32xbf16, #tpu.memory_space<vmem>>, vector<16x32xbf16>
    %c0_2 = arith.constant 0 : index
    %c0_3 = arith.constant 0 : index
    %4 = vector.load %arg5[%c0_2, %c0_3] : memref<32x128xbf16, #tpu.memory_space<vmem>>, vector<32x128xbf16>
    %cst = arith.constant dense<0.000000e+00> : vector<16x128xf32>
    %5 = tpu.matmul %3, %4, %cst {dimension_numbers = #tpu.dot_dimension_numbers<[1], [0], [0], [1], [0, 0, 1, 1], [], []>} : vector<16x32xbf16>, vector<32x128xbf16>, vector<16x128xf32> -> vector<16x128xf32>
    %c0_4 = arith.constant 0 : index
    %c0_5 = arith.constant 0 : index
    %6 = vector.load %arg6[%c0_4, %c0_5] : memref<1x128xf32, #tpu.memory_space<vmem>>, vector<1x128xf32>
    %7 = vector.broadcast %6 : vector<1x128xf32> to vector<16x128xf32>
    %8 = arith.addf %5, %7 : vector<16x128xf32>
    %cst_6 = arith.constant 5.000000e-01 : f32
    %9 = vector.broadcast %cst_6 : f32 to vector<16x128xf32>
    %10 = arith.mulf %9, %8 : vector<16x128xf32>
    %cst_7 = arith.constant 4.471500e-02 : f32
    %11 = vector.broadcast %cst_7 : f32 to vector<16x128xf32>
    %12 = arith.mulf %11, %8 : vector<16x128xf32>
    %13 = arith.mulf %12, %8 : vector<16x128xf32>
    %14 = arith.mulf %13, %8 : vector<16x128xf32>
    %15 = arith.addf %8, %14 : vector<16x128xf32>
    %cst_8 = arith.constant 0.797884583 : f32
    %16 = vector.broadcast %cst_8 : f32 to vector<16x128xf32>
    %17 = arith.mulf %16, %15 : vector<16x128xf32>
    %18 = math.tanh %17 : vector<16x128xf32>
    %cst_9 = arith.constant 1.000000e+00 : f32
    %19 = vector.broadcast %cst_9 : f32 to vector<16x128xf32>
    %20 = arith.addf %19, %18 : vector<16x128xf32>
    %21 = arith.mulf %10, %20 : vector<16x128xf32>
    %22 = arith.truncf %21 : vector<16x128xf32> to vector<16x128xbf16>
    %c0_10 = arith.constant 0 : index
    %c0_11 = arith.constant 0 : index
    %23 = vector.load %arg11[%c0_10, %c0_11] : memref<16x32xf32, #tpu.memory_space<vmem>>, vector<16x32xf32>
    %c0_12 = arith.constant 0 : index
    %c0_13 = arith.constant 0 : index
    %24 = vector.load %arg7[%c0_12, %c0_13] : memref<128x32xbf16, #tpu.memory_space<vmem>>, vector<128x32xbf16>
    %cst_14 = arith.constant dense<0.000000e+00> : vector<16x32xf32>
    %25 = tpu.matmul %22, %24, %cst_14 {dimension_numbers = #tpu.dot_dimension_numbers<[1], [0], [0], [1], [0, 0, 1, 1], [], []>} : vector<16x128xbf16>, vector<128x32xbf16>, vector<16x32xf32> -> vector<16x32xf32>
    %26 = arith.addf %23, %25 : vector<16x32xf32>
    %c0_15 = arith.constant 0 : index
    %c0_16 = arith.constant 0 : index
    %27 = vector.load %arg11[%c0_15, %c0_16] : memref<16x32xf32, #tpu.memory_space<vmem>>, vector<16x32xf32>
    tpu.vector_store %arg11[%c0_15, %c0_16], %26 {strides = array<i32>} : memref<16x32xf32, #tpu.memory_space<vmem>>, vector<16x32xf32>,
    %c0_i32_17 = arith.constant 0 : i32
    %28 = arith.cmpi eq, %arg1, %c0_i32_17 : i32
    %29 = arith.extui %28 : i1 to i32
    %c0_i32_18 = arith.constant 0 : i32
    %30 = arith.cmpi ne, %29, %c0_i32_18 : i32
    scf.if %30 {
      %c0_19 = arith.constant 0 : index
      %c0_20 = arith.constant 0 : index
      %31 = vector.load %arg11[%c0_19, %c0_20] : memref<16x32xf32, #tpu.memory_space<vmem>>, vector<16x32xf32>
      %c0_21 = arith.constant 0 : index
      %c0_22 = arith.constant 0 : index
      %32 = vector.load %arg8[%c0_21, %c0_22] : memref<1x32xf32, #tpu.memory_space<vmem>>, vector<1x32xf32>
      %33 = vector.broadcast %32 : vector<1x32xf32> to vector<16x32xf32>
      %34 = arith.addf %31, %33 : vector<16x32xf32>
      %c0_23 = arith.constant 0 : index
      %c0_24 = arith.constant 0 : index
      %35 = vector.load %arg2[%c0_23, %c0_24] : memref<16x32xf32, #tpu.memory_space<vmem>>, vector<16x32xf32>
      %36 = arith.addf %34, %35 : vector<16x32xf32>
      %c0_25 = arith.constant 0 : index
      %c0_26 = arith.constant 0 : index
      %37 = vector.load %arg9[%c0_25, %c0_26] : memref<16x32xf32, #tpu.memory_space<vmem>>, vector<16x32xf32>
      tpu.vector_store %arg9[%c0_25, %c0_26], %36 {strides = array<i32>} : memref<16x32xf32, #tpu.memory_space<vmem>>, vector<16x32xf32>,
    } else {
    }
    return
  }
  func.func @transform_0(%arg0: i32, %arg1: i32) -> (i32, i32) {
    %c0_i32 = arith.constant 0 : i32
    %c0_i32_0 = arith.constant 0 : i32
    return %arg0, %c0_i32 : i32, i32
  }
  func.func @transform_1(%arg0: i32, %arg1: i32) -> (i32, i32) {
    %c0_i32 = arith.constant 0 : i32
    %c0_i32_0 = arith.constant 0 : i32
    %c0_i32_1 = arith.constant 0 : i32
    return %c0_i32, %c0_i32_0 : i32, i32
  }
  func.func @transform_2(%arg0: i32, %arg1: i32) -> (i32, i32) {
    %c0_i32 = arith.constant 0 : i32
    %c0_i32_0 = arith.constant 0 : i32
    %c0_i32_1 = arith.constant 0 : i32
    return %c0_i32, %c0_i32_0 : i32, i32
  }
  func.func @transform_3(%arg0: i32, %arg1: i32) -> (i32, i32) {
    %c0_i32 = arith.constant 0 : i32
    %c0_i32_0 = arith.constant 0 : i32
    return %c0_i32, %arg1 : i32, i32
  }
  func.func @transform_4(%arg0: i32, %arg1: i32) -> (i32, i32) {
    %c0_i32 = arith.constant 0 : i32
    %c0_i32_0 = arith.constant 0 : i32
    return %c0_i32, %arg1 : i32, i32
  }
  func.func @transform_5(%arg0: i32, %arg1: i32) -> (i32, i32) {
    %c0_i32 = arith.constant 0 : i32
    %c0_i32_0 = arith.constant 0 : i32
    return %arg1, %c0_i32 : i32, i32
  }
  func.func @transform_6(%arg0: i32, %arg1: i32) -> (i32, i32) {
    %c0_i32 = arith.constant 0 : i32
    %c0_i32_0 = arith.constant 0 : i32
    %c0_i32_1 = arith.constant 0 : i32
    return %c0_i32, %c0_i32_0 : i32, i32
  }
  func.func @transform_7(%arg0: i32, %arg1: i32) -> (i32, i32) {
    %c0_i32 = arith.constant 0 : i32
    %c0_i32_0 = arith.constant 0 : i32
    return %arg0, %c0_i32 : i32, i32
  }
}

module attributes {stable_mosaic.version = 11 : i64} {
  func.func @_content_block_kernel(%arg0: i32, %arg1: i32, %arg2: memref<16x32xf32, #tpu.memory_space<vmem>>, %arg3: memref<1x32xf32, #tpu.memory_space<vmem>>, %arg4: memref<1x32xf32, #tpu.memory_space<vmem>>, %arg5: memref<1x32xf32, #tpu.memory_space<vmem>>, %arg6: memref<1x32xf32, #tpu.memory_space<vmem>>, %arg7: memref<32x128xbf16, #tpu.memory_space<vmem>>, %arg8: memref<1x128xf32, #tpu.memory_space<vmem>>, %arg9: memref<128x32xbf16, #tpu.memory_space<vmem>>, %arg10: memref<1x32xf32, #tpu.memory_space<vmem>>, %arg11: memref<1x32xf32, #tpu.memory_space<vmem>>, %arg12: memref<1x32xf32, #tpu.memory_space<vmem>>, %arg13: memref<16x32xbf16, #tpu.memory_space<vmem>>, %arg14: memref<16x32xbf16, #tpu.memory_space<vmem>>, %arg15: memref<16x32xf32, #tpu.memory_space<vmem>>, %arg16: memref<16x32xf32, #tpu.memory_space<vmem>>) attributes {dimension_semantics = [#tpu.dimension_semantics<parallel>, #tpu.dimension_semantics<arbitrary>], iteration_bounds = array<i64: 1, 1>, scalar_prefetch = 0 : i64, scratch_operands = 3 : i64, tpu.core_type = #tpu.core_type<tc>, window_params = [{transform_indices = @transform_0, window_bounds = array<i64: 16, 32>}, {pipeline_mode = #tpu.pipeline_mode<synchronous>, transform_indices = @transform_1, window_bounds = array<i64: 1, 32>}, {pipeline_mode = #tpu.pipeline_mode<synchronous>, transform_indices = @transform_2, window_bounds = array<i64: 1, 32>}, {pipeline_mode = #tpu.pipeline_mode<synchronous>, transform_indices = @transform_3, window_bounds = array<i64: 1, 32>}, {pipeline_mode = #tpu.pipeline_mode<synchronous>, transform_indices = @transform_4, window_bounds = array<i64: 1, 32>}, {transform_indices = @transform_5, window_bounds = array<i64: 32, 128>}, {transform_indices = @transform_6, window_bounds = array<i64: 1, 128>}, {transform_indices = @transform_7, window_bounds = array<i64: 128, 32>}, {pipeline_mode = #tpu.pipeline_mode<synchronous>, transform_indices = @transform_8, window_bounds = array<i64: 1, 32>}, {pipeline_mode = #tpu.pipeline_mode<synchronous>, transform_indices = @transform_9, window_bounds = array<i64: 1, 32>}, {pipeline_mode = #tpu.pipeline_mode<synchronous>, transform_indices = @transform_10, window_bounds = array<i64: 1, 32>}, {transform_indices = @transform_11, window_bounds = array<i64: 16, 32>}]} {
    %c0_i32 = arith.constant 0 : i32
    %0 = arith.cmpi eq, %arg1, %c0_i32 : i32
    %1 = arith.extui %0 : i1 to i32
    %c0_i32_0 = arith.constant 0 : i32
    %2 = arith.cmpi ne, %1, %c0_i32_0 : i32
    scf.if %2 {
      %c0_19 = arith.constant 0 : index
      %c0_20 = arith.constant 0 : index
      %31 = vector.load %arg2[%c0_19, %c0_20] : memref<16x32xf32, #tpu.memory_space<vmem>>, vector<16x32xf32>
      %c0_21 = arith.constant 0 : index
      %c0_22 = arith.constant 0 : index
      %32 = vector.load %arg3[%c0_21, %c0_22] : memref<1x32xf32, #tpu.memory_space<vmem>>, vector<1x32xf32>
      %c0_23 = arith.constant 0 : index
      %c0_24 = arith.constant 0 : index
      %33 = vector.load %arg4[%c0_23, %c0_24] : memref<1x32xf32, #tpu.memory_space<vmem>>, vector<1x32xf32>
      %cst_25 = arith.constant dense<0.000000e+00> : vector<16xf32>
      %34 = vector.multi_reduction <add>, %31, %cst_25 [1] : vector<16x32xf32> to vector<16xf32>
      %35 = vector.shape_cast %34 : vector<16xf32> to vector<16x1xf32>
      %cst_26 = arith.constant 3.200000e+01 : f32
      %36 = vector.broadcast %cst_26 : f32 to vector<16x1xf32>
      %37 = arith.divf %35, %36 : vector<16x1xf32>
      %38 = vector.broadcast %37 : vector<16x1xf32> to vector<16x32xf32>
      %39 = arith.subf %31, %38 : vector<16x32xf32>
      %40 = arith.mulf %39, %39 : vector<16x32xf32>
      %cst_27 = arith.constant dense<0.000000e+00> : vector<16xf32>
      %41 = vector.multi_reduction <add>, %40, %cst_27 [1] : vector<16x32xf32> to vector<16xf32>
      %42 = vector.shape_cast %41 : vector<16xf32> to vector<16x1xf32>
      %cst_28 = arith.constant 3.200000e+01 : f32
      %43 = vector.broadcast %cst_28 : f32 to vector<16x1xf32>
      %44 = arith.divf %42, %43 : vector<16x1xf32>
      %45 = vector.broadcast %37 : vector<16x1xf32> to vector<16x32xf32>
      %46 = arith.subf %31, %45 : vector<16x32xf32>
      %cst_29 = arith.constant 9.99999974E-6 : f32
      %47 = vector.broadcast %cst_29 : f32 to vector<16x1xf32>
      %48 = arith.addf %44, %47 : vector<16x1xf32>
      %49 = math.rsqrt %48 : vector<16x1xf32>
      %50 = vector.broadcast %49 : vector<16x1xf32> to vector<16x32xf32>
      %51 = arith.mulf %46, %50 : vector<16x32xf32>
      %52 = vector.broadcast %32 : vector<1x32xf32> to vector<16x32xf32>
      %53 = arith.mulf %51, %52 : vector<16x32xf32>
      %54 = vector.broadcast %33 : vector<1x32xf32> to vector<16x32xf32>
      %55 = arith.addf %53, %54 : vector<16x32xf32>
      %56 = arith.addf %55, %31 : vector<16x32xf32>
      %c0_30 = arith.constant 0 : index
      %c0_31 = arith.constant 0 : index
      %57 = vector.load %arg15[%c0_30, %c0_31] : memref<16x32xf32, #tpu.memory_space<vmem>>, vector<16x32xf32>
      tpu.vector_store %arg15[%c0_30, %c0_31], %56 {strides = array<i32>} : memref<16x32xf32, #tpu.memory_space<vmem>>, vector<16x32xf32>,
      %c0_32 = arith.constant 0 : index
      %c0_33 = arith.constant 0 : index
      %58 = vector.load %arg5[%c0_32, %c0_33] : memref<1x32xf32, #tpu.memory_space<vmem>>, vector<1x32xf32>
      %c0_34 = arith.constant 0 : index
      %c0_35 = arith.constant 0 : index
      %59 = vector.load %arg6[%c0_34, %c0_35] : memref<1x32xf32, #tpu.memory_space<vmem>>, vector<1x32xf32>
      %cst_36 = arith.constant dense<0.000000e+00> : vector<16xf32>
      %60 = vector.multi_reduction <add>, %56, %cst_36 [1] : vector<16x32xf32> to vector<16xf32>
      %61 = vector.shape_cast %60 : vector<16xf32> to vector<16x1xf32>
      %cst_37 = arith.constant 3.200000e+01 : f32
      %62 = vector.broadcast %cst_37 : f32 to vector<16x1xf32>
      %63 = arith.divf %61, %62 : vector<16x1xf32>
      %64 = vector.broadcast %63 : vector<16x1xf32> to vector<16x32xf32>
      %65 = arith.subf %56, %64 : vector<16x32xf32>
      %66 = arith.mulf %65, %65 : vector<16x32xf32>
      %cst_38 = arith.constant dense<0.000000e+00> : vector<16xf32>
      %67 = vector.multi_reduction <add>, %66, %cst_38 [1] : vector<16x32xf32> to vector<16xf32>
      %68 = vector.shape_cast %67 : vector<16xf32> to vector<16x1xf32>
      %cst_39 = arith.constant 3.200000e+01 : f32
      %69 = vector.broadcast %cst_39 : f32 to vector<16x1xf32>
      %70 = arith.divf %68, %69 : vector<16x1xf32>
      %71 = vector.broadcast %63 : vector<16x1xf32> to vector<16x32xf32>
      %72 = arith.subf %56, %71 : vector<16x32xf32>
      %cst_40 = arith.constant 9.99999974E-6 : f32
      %73 = vector.broadcast %cst_40 : f32 to vector<16x1xf32>
      %74 = arith.addf %70, %73 : vector<16x1xf32>
      %75 = math.rsqrt %74 : vector<16x1xf32>
      %76 = vector.broadcast %75 : vector<16x1xf32> to vector<16x32xf32>
      %77 = arith.mulf %72, %76 : vector<16x32xf32>
      %78 = vector.broadcast %58 : vector<1x32xf32> to vector<16x32xf32>
      %79 = arith.mulf %77, %78 : vector<16x32xf32>
      %80 = vector.broadcast %59 : vector<1x32xf32> to vector<16x32xf32>
      %81 = arith.addf %79, %80 : vector<16x32xf32>
      %82 = arith.truncf %81 : vector<16x32xf32> to vector<16x32xbf16>
      %c0_41 = arith.constant 0 : index
      %c0_42 = arith.constant 0 : index
      %83 = vector.load %arg14[%c0_41, %c0_42] : memref<16x32xbf16, #tpu.memory_space<vmem>>, vector<16x32xbf16>
      tpu.vector_store %arg14[%c0_41, %c0_42], %82 {strides = array<i32>} : memref<16x32xbf16, #tpu.memory_space<vmem>>, vector<16x32xbf16>,
      %cst_43 = arith.constant 0.000000e+00 : f32
      %84 = vector.broadcast %cst_43 : f32 to vector<16x32xf32>
      %c0_44 = arith.constant 0 : index
      %c0_45 = arith.constant 0 : index
      %85 = vector.load %arg16[%c0_44, %c0_45] : memref<16x32xf32, #tpu.memory_space<vmem>>, vector<16x32xf32>
      tpu.vector_store %arg16[%c0_44, %c0_45], %84 {strides = array<i32>} : memref<16x32xf32, #tpu.memory_space<vmem>>, vector<16x32xf32>,
    } else {
    }
    %c0 = arith.constant 0 : index
    %c0_1 = arith.constant 0 : index
    %3 = vector.load %arg14[%c0, %c0_1] : memref<16x32xbf16, #tpu.memory_space<vmem>>, vector<16x32xbf16>
    %c0_2 = arith.constant 0 : index
    %c0_3 = arith.constant 0 : index
    %4 = vector.load %arg7[%c0_2, %c0_3] : memref<32x128xbf16, #tpu.memory_space<vmem>>, vector<32x128xbf16>
    %cst = arith.constant dense<0.000000e+00> : vector<16x128xf32>
    %5 = tpu.matmul %3, %4, %cst {dimension_numbers = #tpu.dot_dimension_numbers<[1], [0], [0], [1], [0, 0, 1, 1], [], []>} : vector<16x32xbf16>, vector<32x128xbf16>, vector<16x128xf32> -> vector<16x128xf32>
    %c0_4 = arith.constant 0 : index
    %c0_5 = arith.constant 0 : index
    %6 = vector.load %arg8[%c0_4, %c0_5] : memref<1x128xf32, #tpu.memory_space<vmem>>, vector<1x128xf32>
    %7 = vector.broadcast %6 : vector<1x128xf32> to vector<16x128xf32>
    %8 = arith.addf %5, %7 : vector<16x128xf32>
    %cst_6 = arith.constant 5.000000e-01 : f32
    %9 = vector.broadcast %cst_6 : f32 to vector<16x128xf32>
    %10 = arith.mulf %9, %8 : vector<16x128xf32>
    %cst_7 = arith.constant 4.471500e-02 : f32
    %11 = vector.broadcast %cst_7 : f32 to vector<16x128xf32>
    %12 = arith.mulf %11, %8 : vector<16x128xf32>
    %13 = arith.mulf %12, %8 : vector<16x128xf32>
    %14 = arith.mulf %13, %8 : vector<16x128xf32>
    %15 = arith.addf %8, %14 : vector<16x128xf32>
    %cst_8 = arith.constant 0.797884583 : f32
    %16 = vector.broadcast %cst_8 : f32 to vector<16x128xf32>
    %17 = arith.mulf %16, %15 : vector<16x128xf32>
    %18 = math.tanh %17 : vector<16x128xf32>
    %cst_9 = arith.constant 1.000000e+00 : f32
    %19 = vector.broadcast %cst_9 : f32 to vector<16x128xf32>
    %20 = arith.addf %19, %18 : vector<16x128xf32>
    %21 = arith.mulf %10, %20 : vector<16x128xf32>
    %22 = arith.truncf %21 : vector<16x128xf32> to vector<16x128xbf16>
    %c0_10 = arith.constant 0 : index
    %c0_11 = arith.constant 0 : index
    %23 = vector.load %arg16[%c0_10, %c0_11] : memref<16x32xf32, #tpu.memory_space<vmem>>, vector<16x32xf32>
    %c0_12 = arith.constant 0 : index
    %c0_13 = arith.constant 0 : index
    %24 = vector.load %arg9[%c0_12, %c0_13] : memref<128x32xbf16, #tpu.memory_space<vmem>>, vector<128x32xbf16>
    %cst_14 = arith.constant dense<0.000000e+00> : vector<16x32xf32>
    %25 = tpu.matmul %22, %24, %cst_14 {dimension_numbers = #tpu.dot_dimension_numbers<[1], [0], [0], [1], [0, 0, 1, 1], [], []>} : vector<16x128xbf16>, vector<128x32xbf16>, vector<16x32xf32> -> vector<16x32xf32>
    %26 = arith.addf %23, %25 : vector<16x32xf32>
    %c0_15 = arith.constant 0 : index
    %c0_16 = arith.constant 0 : index
    %27 = vector.load %arg16[%c0_15, %c0_16] : memref<16x32xf32, #tpu.memory_space<vmem>>, vector<16x32xf32>
    tpu.vector_store %arg16[%c0_15, %c0_16], %26 {strides = array<i32>} : memref<16x32xf32, #tpu.memory_space<vmem>>, vector<16x32xf32>,
    %c0_i32_17 = arith.constant 0 : i32
    %28 = arith.cmpi eq, %arg1, %c0_i32_17 : i32
    %29 = arith.extui %28 : i1 to i32
    %c0_i32_18 = arith.constant 0 : i32
    %30 = arith.cmpi ne, %29, %c0_i32_18 : i32
    scf.if %30 {
      %c0_19 = arith.constant 0 : index
      %c0_20 = arith.constant 0 : index
      %31 = vector.load %arg16[%c0_19, %c0_20] : memref<16x32xf32, #tpu.memory_space<vmem>>, vector<16x32xf32>
      %c0_21 = arith.constant 0 : index
      %c0_22 = arith.constant 0 : index
      %32 = vector.load %arg10[%c0_21, %c0_22] : memref<1x32xf32, #tpu.memory_space<vmem>>, vector<1x32xf32>
      %33 = vector.broadcast %32 : vector<1x32xf32> to vector<16x32xf32>
      %34 = arith.addf %31, %33 : vector<16x32xf32>
      %c0_23 = arith.constant 0 : index
      %c0_24 = arith.constant 0 : index
      %35 = vector.load %arg15[%c0_23, %c0_24] : memref<16x32xf32, #tpu.memory_space<vmem>>, vector<16x32xf32>
      %36 = arith.addf %34, %35 : vector<16x32xf32>
      %c0_25 = arith.constant 0 : index
      %c0_26 = arith.constant 0 : index
      %37 = vector.load %arg11[%c0_25, %c0_26] : memref<1x32xf32, #tpu.memory_space<vmem>>, vector<1x32xf32>
      %c0_27 = arith.constant 0 : index
      %c0_28 = arith.constant 0 : index
      %38 = vector.load %arg12[%c0_27, %c0_28] : memref<1x32xf32, #tpu.memory_space<vmem>>, vector<1x32xf32>
      %cst_29 = arith.constant dense<0.000000e+00> : vector<16xf32>
      %39 = vector.multi_reduction <add>, %36, %cst_29 [1] : vector<16x32xf32> to vector<16xf32>
      %40 = vector.shape_cast %39 : vector<16xf32> to vector<16x1xf32>
      %cst_30 = arith.constant 3.200000e+01 : f32
      %41 = vector.broadcast %cst_30 : f32 to vector<16x1xf32>
      %42 = arith.divf %40, %41 : vector<16x1xf32>
      %43 = vector.broadcast %42 : vector<16x1xf32> to vector<16x32xf32>
      %44 = arith.subf %36, %43 : vector<16x32xf32>
      %45 = arith.mulf %44, %44 : vector<16x32xf32>
      %cst_31 = arith.constant dense<0.000000e+00> : vector<16xf32>
      %46 = vector.multi_reduction <add>, %45, %cst_31 [1] : vector<16x32xf32> to vector<16xf32>
      %47 = vector.shape_cast %46 : vector<16xf32> to vector<16x1xf32>
      %cst_32 = arith.constant 3.200000e+01 : f32
      %48 = vector.broadcast %cst_32 : f32 to vector<16x1xf32>
      %49 = arith.divf %47, %48 : vector<16x1xf32>
      %50 = vector.broadcast %42 : vector<16x1xf32> to vector<16x32xf32>
      %51 = arith.subf %36, %50 : vector<16x32xf32>
      %cst_33 = arith.constant 9.99999974E-6 : f32
      %52 = vector.broadcast %cst_33 : f32 to vector<16x1xf32>
      %53 = arith.addf %49, %52 : vector<16x1xf32>
      %54 = math.rsqrt %53 : vector<16x1xf32>
      %55 = vector.broadcast %54 : vector<16x1xf32> to vector<16x32xf32>
      %56 = arith.mulf %51, %55 : vector<16x32xf32>
      %57 = vector.broadcast %37 : vector<1x32xf32> to vector<16x32xf32>
      %58 = arith.mulf %56, %57 : vector<16x32xf32>
      %59 = vector.broadcast %38 : vector<1x32xf32> to vector<16x32xf32>
      %60 = arith.addf %58, %59 : vector<16x32xf32>
      %61 = arith.truncf %60 : vector<16x32xf32> to vector<16x32xbf16>
      %c0_34 = arith.constant 0 : index
      %c0_35 = arith.constant 0 : index
      %62 = vector.load %arg13[%c0_34, %c0_35] : memref<16x32xbf16, #tpu.memory_space<vmem>>, vector<16x32xbf16>
      tpu.vector_store %arg13[%c0_34, %c0_35], %61 {strides = array<i32>} : memref<16x32xbf16, #tpu.memory_space<vmem>>, vector<16x32xbf16>,
    } else {
    }
    return
  }
  func.func @transform_0(%arg0: i32, %arg1: i32) -> (i32, i32) {
    %c0_i32 = arith.constant 0 : i32
    %c0_i32_0 = arith.constant 0 : i32
    return %arg0, %c0_i32 : i32, i32
  }
  func.func @transform_1(%arg0: i32, %arg1: i32) -> (i32, i32) {
    %c0_i32 = arith.constant 0 : i32
    %c0_i32_0 = arith.constant 0 : i32
    %c0_i32_1 = arith.constant 0 : i32
    return %c0_i32, %c0_i32_0 : i32, i32
  }
  func.func @transform_2(%arg0: i32, %arg1: i32) -> (i32, i32) {
    %c0_i32 = arith.constant 0 : i32
    %c0_i32_0 = arith.constant 0 : i32
    %c0_i32_1 = arith.constant 0 : i32
    return %c0_i32, %c0_i32_0 : i32, i32
  }
  func.func @transform_3(%arg0: i32, %arg1: i32) -> (i32, i32) {
    %c0_i32 = arith.constant 0 : i32
    %c0_i32_0 = arith.constant 0 : i32
    %c0_i32_1 = arith.constant 0 : i32
    return %c0_i32, %c0_i32_0 : i32, i32
  }
  func.func @transform_4(%arg0: i32, %arg1: i32) -> (i32, i32) {
    %c0_i32 = arith.constant 0 : i32
    %c0_i32_0 = arith.constant 0 : i32
    %c0_i32_1 = arith.constant 0 : i32
    return %c0_i32, %c0_i32_0 : i32, i32
  }
  func.func @transform_5(%arg0: i32, %arg1: i32) -> (i32, i32) {
    %c0_i32 = arith.constant 0 : i32
    %c0_i32_0 = arith.constant 0 : i32
    return %c0_i32, %arg1 : i32, i32
  }
  func.func @transform_6(%arg0: i32, %arg1: i32) -> (i32, i32) {
    %c0_i32 = arith.constant 0 : i32
    %c0_i32_0 = arith.constant 0 : i32
    return %c0_i32, %arg1 : i32, i32
  }
  func.func @transform_7(%arg0: i32, %arg1: i32) -> (i32, i32) {
    %c0_i32 = arith.constant 0 : i32
    %c0_i32_0 = arith.constant 0 : i32
    return %arg1, %c0_i32 : i32, i32
  }
  func.func @transform_8(%arg0: i32, %arg1: i32) -> (i32, i32) {
    %c0_i32 = arith.constant 0 : i32
    %c0_i32_0 = arith.constant 0 : i32
    %c0_i32_1 = arith.constant 0 : i32
    return %c0_i32, %c0_i32_0 : i32, i32
  }
  func.func @transform_9(%arg0: i32, %arg1: i32) -> (i32, i32) {
    %c0_i32 = arith.constant 0 : i32
    %c0_i32_0 = arith.constant 0 : i32
    %c0_i32_1 = arith.constant 0 : i32
    return %c0_i32, %c0_i32_0 : i32, i32
  }
  func.func @transform_10(%arg0: i32, %arg1: i32) -> (i32, i32) {
    %c0_i32 = arith.constant 0 : i32
    %c0_i32_0 = arith.constant 0 : i32
    %c0_i32_1 = arith.constant 0 : i32
    return %c0_i32, %c0_i32_0 : i32, i32
  }
  func.func @transform_11(%arg0: i32, %arg1: i32) -> (i32, i32) {
    %c0_i32 = arith.constant 0 : i32
    %c0_i32_0 = arith.constant 0 : i32
    return %arg0, %c0_i32 : i32, i32
  }
}

module attributes {stable_mosaic.version = 11 : i64} {
  func.func @_ln_grouped_linear_kernel(%arg0: i32, %arg1: i32, %arg2: memref<16x32xf32, #tpu.memory_space<vmem>>, %arg3: memref<1x32xf32, #tpu.memory_space<vmem>>, %arg4: memref<1x32xf32, #tpu.memory_space<vmem>>, %arg5: memref<1x32x16xbf16, #tpu.memory_space<vmem>>, %arg6: memref<1x1x16xf32, #tpu.memory_space<vmem>>, %arg7: memref<1x16x16xbf16, #tpu.memory_space<vmem>>) attributes {dimension_semantics = [#tpu.dimension_semantics<parallel>, #tpu.dimension_semantics<parallel>], iteration_bounds = array<i64: 4, 1>, scalar_prefetch = 0 : i64, scratch_operands = 0 : i64, tpu.core_type = #tpu.core_type<tc>, window_params = [{transform_indices = @transform_0, window_bounds = array<i64: 16, 32>}, {pipeline_mode = #tpu.pipeline_mode<synchronous>, transform_indices = @transform_1, window_bounds = array<i64: 1, 32>}, {pipeline_mode = #tpu.pipeline_mode<synchronous>, transform_indices = @transform_2, window_bounds = array<i64: 1, 32>}, {transform_indices = @transform_3, window_bounds = array<i64: 1, 32, 16>}, {transform_indices = @transform_4, window_bounds = array<i64: 1, 1, 16>}, {transform_indices = @transform_5, window_bounds = array<i64: 1, 16, 16>}]} {
    %c0 = arith.constant 0 : index
    %c0_0 = arith.constant 0 : index
    %0 = vector.load %arg2[%c0, %c0_0] : memref<16x32xf32, #tpu.memory_space<vmem>>, vector<16x32xf32>
    %c0_1 = arith.constant 0 : index
    %c0_2 = arith.constant 0 : index
    %1 = vector.load %arg3[%c0_1, %c0_2] : memref<1x32xf32, #tpu.memory_space<vmem>>, vector<1x32xf32>
    %c0_3 = arith.constant 0 : index
    %c0_4 = arith.constant 0 : index
    %2 = vector.load %arg4[%c0_3, %c0_4] : memref<1x32xf32, #tpu.memory_space<vmem>>, vector<1x32xf32>
    %cst = arith.constant dense<0.000000e+00> : vector<16xf32>
    %3 = vector.multi_reduction <add>, %0, %cst [1] : vector<16x32xf32> to vector<16xf32>
    %4 = vector.shape_cast %3 : vector<16xf32> to vector<16x1xf32>
    %cst_5 = arith.constant 3.200000e+01 : f32
    %5 = vector.broadcast %cst_5 : f32 to vector<16x1xf32>
    %6 = arith.divf %4, %5 : vector<16x1xf32>
    %7 = vector.broadcast %6 : vector<16x1xf32> to vector<16x32xf32>
    %8 = arith.subf %0, %7 : vector<16x32xf32>
    %9 = arith.mulf %8, %8 : vector<16x32xf32>
    %cst_6 = arith.constant dense<0.000000e+00> : vector<16xf32>
    %10 = vector.multi_reduction <add>, %9, %cst_6 [1] : vector<16x32xf32> to vector<16xf32>
    %11 = vector.shape_cast %10 : vector<16xf32> to vector<16x1xf32>
    %cst_7 = arith.constant 3.200000e+01 : f32
    %12 = vector.broadcast %cst_7 : f32 to vector<16x1xf32>
    %13 = arith.divf %11, %12 : vector<16x1xf32>
    %14 = vector.broadcast %6 : vector<16x1xf32> to vector<16x32xf32>
    %15 = arith.subf %0, %14 : vector<16x32xf32>
    %cst_8 = arith.constant 9.99999974E-6 : f32
    %16 = vector.broadcast %cst_8 : f32 to vector<16x1xf32>
    %17 = arith.addf %13, %16 : vector<16x1xf32>
    %18 = math.rsqrt %17 : vector<16x1xf32>
    %19 = vector.broadcast %18 : vector<16x1xf32> to vector<16x32xf32>
    %20 = arith.mulf %15, %19 : vector<16x32xf32>
    %21 = vector.broadcast %1 : vector<1x32xf32> to vector<16x32xf32>
    %22 = arith.mulf %20, %21 : vector<16x32xf32>
    %23 = vector.broadcast %2 : vector<1x32xf32> to vector<16x32xf32>
    %24 = arith.addf %22, %23 : vector<16x32xf32>
    %25 = arith.truncf %24 : vector<16x32xf32> to vector<16x32xbf16>
    %c0_9 = arith.constant 0 : index
    %c0_10 = arith.constant 0 : index
    %c0_11 = arith.constant 0 : index
    %26 = vector.load %arg5[%c0_9, %c0_10, %c0_11] : memref<1x32x16xbf16, #tpu.memory_space<vmem>>, vector<1x32x16xbf16>
    %27 = vector.shape_cast %26 : vector<1x32x16xbf16> to vector<32x16xbf16>
    %c0_12 = arith.constant 0 : index
    %c0_13 = arith.constant 0 : index
    %c0_14 = arith.constant 0 : index
    %28 = vector.load %arg6[%c0_12, %c0_13, %c0_14] : memref<1x1x16xf32, #tpu.memory_space<vmem>>, vector<1x1x16xf32>
    %29 = vector.shape_cast %28 : vector<1x1x16xf32> to vector<1x16xf32>
    %cst_15 = arith.constant dense<0.000000e+00> : vector<16x16xf32>
    %30 = tpu.matmul %25, %27, %cst_15 {dimension_numbers = #tpu.dot_dimension_numbers<[1], [0], [0], [1], [0, 0, 1, 1], [], []>} : vector<16x32xbf16>, vector<32x16xbf16>, vector<16x16xf32> -> vector<16x16xf32>
    %31 = vector.broadcast %29 : vector<1x16xf32> to vector<16x16xf32>
    %32 = arith.addf %30, %31 : vector<16x16xf32>
    %33 = vector.shape_cast %32 : vector<16x16xf32> to vector<1x16x16xf32>
    %34 = arith.truncf %33 : vector<1x16x16xf32> to vector<1x16x16xbf16>
    %c0_16 = arith.constant 0 : index
    %c0_17 = arith.constant 0 : index
    %c0_18 = arith.constant 0 : index
    %35 = vector.load %arg7[%c0_16, %c0_17, %c0_18] : memref<1x16x16xbf16, #tpu.memory_space<vmem>>, vector<1x16x16xbf16>
    tpu.vector_store %arg7[%c0_16, %c0_17, %c0_18], %34 {strides = array<i32>} : memref<1x16x16xbf16, #tpu.memory_space<vmem>>, vector<1x16x16xbf16>,
    return
  }
  func.func @transform_0(%arg0: i32, %arg1: i32) -> (i32, i32) {
    %c0_i32 = arith.constant 0 : i32
    %c0_i32_0 = arith.constant 0 : i32
    return %arg1, %c0_i32 : i32, i32
  }
  func.func @transform_1(%arg0: i32, %arg1: i32) -> (i32, i32) {
    %c0_i32 = arith.constant 0 : i32
    %c0_i32_0 = arith.constant 0 : i32
    %c0_i32_1 = arith.constant 0 : i32
    return %c0_i32, %c0_i32_0 : i32, i32
  }
  func.func @transform_2(%arg0: i32, %arg1: i32) -> (i32, i32) {
    %c0_i32 = arith.constant 0 : i32
    %c0_i32_0 = arith.constant 0 : i32
    %c0_i32_1 = arith.constant 0 : i32
    return %c0_i32, %c0_i32_0 : i32, i32
  }
  func.func @transform_3(%arg0: i32, %arg1: i32) -> (i32, i32, i32) {
    %c0_i32 = arith.constant 0 : i32
    %c0_i32_0 = arith.constant 0 : i32
    %c0_i32_1 = arith.constant 0 : i32
    return %arg0, %c0_i32, %c0_i32_0 : i32, i32, i32
  }
  func.func @transform_4(%arg0: i32, %arg1: i32) -> (i32, i32, i32) {
    %c0_i32 = arith.constant 0 : i32
    %c0_i32_0 = arith.constant 0 : i32
    %c0_i32_1 = arith.constant 0 : i32
    return %arg0, %c0_i32, %c0_i32_0 : i32, i32, i32
  }
  func.func @transform_5(%arg0: i32, %arg1: i32) -> (i32, i32, i32) {
    %c0_i32 = arith.constant 0 : i32
    %c0_i32_0 = arith.constant 0 : i32
    return %arg0, %arg1, %c0_i32 : i32, i32, i32
  }
}

module attributes {stable_mosaic.version = 11 : i64} {
  func.func @_linear_kernel(%arg0: i32, %arg1: i32, %arg2: memref<16x32xbf16, #tpu.memory_space<vmem>>, %arg3: memref<32x128xbf16, #tpu.memory_space<vmem>>, %arg4: memref<1x128xf32, #tpu.memory_space<vmem>>, %arg5: memref<16x128xbf16, #tpu.memory_space<vmem>>) attributes {dimension_semantics = [#tpu.dimension_semantics<parallel>, #tpu.dimension_semantics<parallel>], iteration_bounds = array<i64: 1, 1>, scalar_prefetch = 0 : i64, scratch_operands = 0 : i64, tpu.core_type = #tpu.core_type<tc>, window_params = [{transform_indices = @transform_0, window_bounds = array<i64: 16, 32>}, {transform_indices = @transform_1, window_bounds = array<i64: 32, 128>}, {transform_indices = @transform_2, window_bounds = array<i64: 1, 128>}, {transform_indices = @transform_3, window_bounds = array<i64: 16, 128>}]} {
    %c0 = arith.constant 0 : index
    %c0_0 = arith.constant 0 : index
    %0 = vector.load %arg2[%c0, %c0_0] : memref<16x32xbf16, #tpu.memory_space<vmem>>, vector<16x32xbf16>
    %c0_1 = arith.constant 0 : index
    %c0_2 = arith.constant 0 : index
    %1 = vector.load %arg3[%c0_1, %c0_2] : memref<32x128xbf16, #tpu.memory_space<vmem>>, vector<32x128xbf16>
    %cst = arith.constant dense<0.000000e+00> : vector<16x128xf32>
    %2 = tpu.matmul %0, %1, %cst {dimension_numbers = #tpu.dot_dimension_numbers<[1], [0], [0], [1], [0, 0, 1, 1], [], []>} : vector<16x32xbf16>, vector<32x128xbf16>, vector<16x128xf32> -> vector<16x128xf32>
    %c0_3 = arith.constant 0 : index
    %c0_4 = arith.constant 0 : index
    %3 = vector.load %arg4[%c0_3, %c0_4] : memref<1x128xf32, #tpu.memory_space<vmem>>, vector<1x128xf32>
    %4 = vector.broadcast %3 : vector<1x128xf32> to vector<16x128xf32>
    %5 = arith.addf %2, %4 : vector<16x128xf32>
    %cst_5 = arith.constant 5.000000e-01 : f32
    %6 = vector.broadcast %cst_5 : f32 to vector<16x128xf32>
    %7 = arith.mulf %6, %5 : vector<16x128xf32>
    %cst_6 = arith.constant 4.471500e-02 : f32
    %8 = vector.broadcast %cst_6 : f32 to vector<16x128xf32>
    %9 = arith.mulf %8, %5 : vector<16x128xf32>
    %10 = arith.mulf %9, %5 : vector<16x128xf32>
    %11 = arith.mulf %10, %5 : vector<16x128xf32>
    %12 = arith.addf %5, %11 : vector<16x128xf32>
    %cst_7 = arith.constant 0.797884583 : f32
    %13 = vector.broadcast %cst_7 : f32 to vector<16x128xf32>
    %14 = arith.mulf %13, %12 : vector<16x128xf32>
    %15 = math.tanh %14 : vector<16x128xf32>
    %cst_8 = arith.constant 1.000000e+00 : f32
    %16 = vector.broadcast %cst_8 : f32 to vector<16x128xf32>
    %17 = arith.addf %16, %15 : vector<16x128xf32>
    %18 = arith.mulf %7, %17 : vector<16x128xf32>
    %19 = arith.truncf %18 : vector<16x128xf32> to vector<16x128xbf16>
    %c0_9 = arith.constant 0 : index
    %c0_10 = arith.constant 0 : index
    %20 = vector.load %arg5[%c0_9, %c0_10] : memref<16x128xbf16, #tpu.memory_space<vmem>>, vector<16x128xbf16>
    tpu.vector_store %arg5[%c0_9, %c0_10], %19 {strides = array<i32>} : memref<16x128xbf16, #tpu.memory_space<vmem>>, vector<16x128xbf16>,
    return
  }
  func.func @transform_0(%arg0: i32, %arg1: i32) -> (i32, i32) {
    %c0_i32 = arith.constant 0 : i32
    %c0_i32_0 = arith.constant 0 : i32
    return %arg0, %c0_i32 : i32, i32
  }
  func.func @transform_1(%arg0: i32, %arg1: i32) -> (i32, i32) {
    %c0_i32 = arith.constant 0 : i32
    %c0_i32_0 = arith.constant 0 : i32
    return %c0_i32, %arg1 : i32, i32
  }
  func.func @transform_2(%arg0: i32, %arg1: i32) -> (i32, i32) {
    %c0_i32 = arith.constant 0 : i32
    %c0_i32_0 = arith.constant 0 : i32
    return %c0_i32, %arg1 : i32, i32
  }
  func.func @transform_3(%arg0: i32, %arg1: i32) -> (i32, i32) {
    %c0_i32 = arith.constant 0 : i32
    return %arg0, %arg1 : i32, i32
  }
}

module attributes {stable_mosaic.version = 11 : i64} {
  func.func @_grouped_linear_kernel(%arg0: i32, %arg1: i32, %arg2: memref<16x128xbf16, #tpu.memory_space<vmem>>, %arg3: memref<1x128x32xbf16, #tpu.memory_space<vmem>>, %arg4: memref<1x1x32xf32, #tpu.memory_space<vmem>>, %arg5: memref<1x16x32xbf16, #tpu.memory_space<vmem>>) attributes {dimension_semantics = [#tpu.dimension_semantics<parallel>, #tpu.dimension_semantics<parallel>], iteration_bounds = array<i64: 4, 1>, scalar_prefetch = 0 : i64, scratch_operands = 0 : i64, tpu.core_type = #tpu.core_type<tc>, window_params = [{transform_indices = @transform_0, window_bounds = array<i64: 16, 128>}, {transform_indices = @transform_1, window_bounds = array<i64: 1, 128, 32>}, {transform_indices = @transform_2, window_bounds = array<i64: 1, 1, 32>}, {transform_indices = @transform_3, window_bounds = array<i64: 1, 16, 32>}]} {
    %c0 = arith.constant 0 : index
    %c0_0 = arith.constant 0 : index
    %c0_1 = arith.constant 0 : index
    %0 = vector.load %arg3[%c0, %c0_0, %c0_1] : memref<1x128x32xbf16, #tpu.memory_space<vmem>>, vector<1x128x32xbf16>
    %1 = vector.shape_cast %0 : vector<1x128x32xbf16> to vector<128x32xbf16>
    %c0_2 = arith.constant 0 : index
    %c0_3 = arith.constant 0 : index
    %c0_4 = arith.constant 0 : index
    %2 = vector.load %arg4[%c0_2, %c0_3, %c0_4] : memref<1x1x32xf32, #tpu.memory_space<vmem>>, vector<1x1x32xf32>
    %3 = vector.shape_cast %2 : vector<1x1x32xf32> to vector<1x32xf32>
    %c0_5 = arith.constant 0 : index
    %c0_6 = arith.constant 0 : index
    %4 = vector.load %arg2[%c0_5, %c0_6] : memref<16x128xbf16, #tpu.memory_space<vmem>>, vector<16x128xbf16>
    %cst = arith.constant dense<0.000000e+00> : vector<16x32xf32>
    %5 = tpu.matmul %4, %1, %cst {dimension_numbers = #tpu.dot_dimension_numbers<[1], [0], [0], [1], [0, 0, 1, 1], [], []>} : vector<16x128xbf16>, vector<128x32xbf16>, vector<16x32xf32> -> vector<16x32xf32>
    %6 = vector.broadcast %3 : vector<1x32xf32> to vector<16x32xf32>
    %7 = arith.addf %5, %6 : vector<16x32xf32>
    %8 = vector.shape_cast %7 : vector<16x32xf32> to vector<1x16x32xf32>
    %9 = arith.truncf %8 : vector<1x16x32xf32> to vector<1x16x32xbf16>
    %c0_7 = arith.constant 0 : index
    %c0_8 = arith.constant 0 : index
    %c0_9 = arith.constant 0 : index
    %10 = vector.load %arg5[%c0_7, %c0_8, %c0_9] : memref<1x16x32xbf16, #tpu.memory_space<vmem>>, vector<1x16x32xbf16>
    tpu.vector_store %arg5[%c0_7, %c0_8, %c0_9], %9 {strides = array<i32>} : memref<1x16x32xbf16, #tpu.memory_space<vmem>>, vector<1x16x32xbf16>,
    return
  }
  func.func @transform_0(%arg0: i32, %arg1: i32) -> (i32, i32) {
    %c0_i32 = arith.constant 0 : i32
    %c0_i32_0 = arith.constant 0 : i32
    return %arg1, %c0_i32 : i32, i32
  }
  func.func @transform_1(%arg0: i32, %arg1: i32) -> (i32, i32, i32) {
    %c0_i32 = arith.constant 0 : i32
    %c0_i32_0 = arith.constant 0 : i32
    %c0_i32_1 = arith.constant 0 : i32
    return %arg0, %c0_i32, %c0_i32_0 : i32, i32, i32
  }
  func.func @transform_2(%arg0: i32, %arg1: i32) -> (i32, i32, i32) {
    %c0_i32 = arith.constant 0 : i32
    %c0_i32_0 = arith.constant 0 : i32
    %c0_i32_1 = arith.constant 0 : i32
    return %arg0, %c0_i32, %c0_i32_0 : i32, i32, i32
  }
  func.func @transform_3(%arg0: i32, %arg1: i32) -> (i32, i32, i32) {
    %c0_i32 = arith.constant 0 : i32
    %c0_i32_0 = arith.constant 0 : i32
    return %arg0, %arg1, %c0_i32 : i32, i32, i32
  }
}

module attributes {stable_mosaic.version = 11 : i64} {
  func.func @_lm_head_kernel(%arg0: i32, %arg1: i32, %arg2: memref<16x32xbf16, #tpu.memory_space<vmem>>, %arg3: memref<128x32xbf16, #tpu.memory_space<vmem>>, %arg4: memref<16x128xf32, #tpu.memory_space<vmem>>) attributes {dimension_semantics = [#tpu.dimension_semantics<parallel>, #tpu.dimension_semantics<parallel>], iteration_bounds = array<i64: 1, 1>, scalar_prefetch = 0 : i64, scratch_operands = 0 : i64, tpu.core_type = #tpu.core_type<tc>, window_params = [{transform_indices = @transform_0, window_bounds = array<i64: 16, 32>}, {transform_indices = @transform_1, window_bounds = array<i64: 128, 32>}, {transform_indices = @transform_2, window_bounds = array<i64: 16, 128>}]} {
    %c0 = arith.constant 0 : index
    %c0_0 = arith.constant 0 : index
    %0 = vector.load %arg2[%c0, %c0_0] : memref<16x32xbf16, #tpu.memory_space<vmem>>, vector<16x32xbf16>
    %c0_1 = arith.constant 0 : index
    %c0_2 = arith.constant 0 : index
    %1 = vector.load %arg3[%c0_1, %c0_2] : memref<128x32xbf16, #tpu.memory_space<vmem>>, vector<128x32xbf16>
    %cst = arith.constant dense<0.000000e+00> : vector<16x128xf32>
    %2 = tpu.matmul %0, %1, %cst {dimension_numbers = #tpu.dot_dimension_numbers<[1], [1], [0], [0], [0, 0, 1, 0], [], []>} : vector<16x32xbf16>, vector<128x32xbf16>, vector<16x128xf32> -> vector<16x128xf32>
    %c0_3 = arith.constant 0 : index
    %c0_4 = arith.constant 0 : index
    %3 = vector.load %arg4[%c0_3, %c0_4] : memref<16x128xf32, #tpu.memory_space<vmem>>, vector<16x128xf32>
    tpu.vector_store %arg4[%c0_3, %c0_4], %2 {strides = array<i32>} : memref<16x128xf32, #tpu.memory_space<vmem>>, vector<16x128xf32>,
    return
  }
  func.func @transform_0(%arg0: i32, %arg1: i32) -> (i32, i32) {
    %c0_i32 = arith.constant 0 : i32
    %c0_i32_0 = arith.constant 0 : i32
    return %arg0, %c0_i32 : i32, i32
  }
  func.func @transform_1(%arg0: i32, %arg1: i32) -> (i32, i32) {
    %c0_i32 = arith.constant 0 : i32
    %c0_i32_0 = arith.constant 0 : i32
    return %arg1, %c0_i32 : i32, i32
  }
  func.func @transform_2(%arg0: i32, %arg1: i32) -> (i32, i32) {
    %c0_i32 = arith.constant 0 : i32
    return %arg0, %arg1 : i32, i32
  }
}

module attributes {stable_mosaic.version = 11 : i64} {
  func.func @_ctx_mix_kernel(%arg0: i32, %arg1: i32, %arg2: memref<1x1x8x16xbf16, #tpu.memory_space<vmem>>, %arg3: memref<1x1x8x32xbf16, #tpu.memory_space<vmem>>, %arg4: memref<1x8x32xbf16, #tpu.memory_space<vmem>>, %arg5: memref<8x32xf32, #tpu.memory_space<vmem>>) attributes {dimension_semantics = [#tpu.dimension_semantics<parallel>, #tpu.dimension_semantics<arbitrary>], iteration_bounds = array<i64: 2, 4>, scalar_prefetch = 0 : i64, scratch_operands = 1 : i64, tpu.core_type = #tpu.core_type<tc>, window_params = [{transform_indices = @transform_0, window_bounds = array<i64: 1, 1, 8, 16>}, {transform_indices = @transform_1, window_bounds = array<i64: 1, 1, 8, 32>}, {transform_indices = @transform_2, window_bounds = array<i64: 1, 8, 32>}]} {
    %c0_i32 = arith.constant 0 : i32
    %0 = arith.cmpi eq, %arg1, %c0_i32 : i32
    %1 = arith.extui %0 : i1 to i32
    %c0_i32_0 = arith.constant 0 : i32
    %2 = arith.cmpi ne, %1, %c0_i32_0 : i32
    scf.if %2 {
      %cst_18 = arith.constant 0.000000e+00 : f32
      %36 = vector.broadcast %cst_18 : f32 to vector<8x32xf32>
      %c0_19 = arith.constant 0 : index
      %c0_20 = arith.constant 0 : index
      %37 = vector.load %arg5[%c0_19, %c0_20] : memref<8x32xf32, #tpu.memory_space<vmem>>, vector<8x32xf32>
      tpu.vector_store %arg5[%c0_19, %c0_20], %36 {strides = array<i32>} : memref<8x32xf32, #tpu.memory_space<vmem>>, vector<8x32xf32>,
    } else {
    }
    %c0 = arith.constant 0 : index
    %c0_1 = arith.constant 0 : index
    %c0_2 = arith.constant 0 : index
    %c0_3 = arith.constant 0 : index
    %3 = vector.load %arg2[%c0, %c0_1, %c0_2, %c0_3] : memref<1x1x8x16xbf16, #tpu.memory_space<vmem>>, vector<1x1x8x16xbf16>
    %4 = vector.shape_cast %3 : vector<1x1x8x16xbf16> to vector<8x16xbf16>
    %5 = vector.extract_strided_slice %4 {offsets = [0, 0], sizes = [8, 8], strides = [1, 1]} : vector<8x16xbf16> to vector<8x8xbf16>
    %6 = vector.extract_strided_slice %4 {offsets = [0, 8], sizes = [8, 8], strides = [1, 1]} : vector<8x16xbf16> to vector<8x8xbf16>
    %cst = arith.constant dense<0.000000e+00> : vector<8x8xf32>
    %7 = tpu.matmul %5, %6, %cst {dimension_numbers = #tpu.dot_dimension_numbers<[1], [1], [0], [0], [0, 0, 1, 0], [], []>} : vector<8x8xbf16>, vector<8x8xbf16>, vector<8x8xf32> -> vector<8x8xf32>
    %cst_4 = arith.constant 0.353553385 : f32
    %8 = vector.broadcast %cst_4 : f32 to vector<8x8xf32>
    %9 = arith.mulf %7, %8 : vector<8x8xf32>
    %10 = tpu.iota {dimensions = array<i32: 0>} : vector<8x8xi32>
    %11 = tpu.iota {dimensions = array<i32: 1>} : vector<8x8xi32>
    %12 = arith.cmpi sgt, %11, %10 : vector<8x8xi32>
    %cst_5 = arith.constant 1.000000e+04 : f32
    %13 = vector.broadcast %cst_5 : f32 to vector<8x8xf32>
    %14 = arith.subf %9, %13 : vector<8x8xf32>
    %15 = arith.select %12, %14, %9 : vector<8x8xi1>, vector<8x8xf32>
    %cst_6 = arith.constant dense<0xFF800000> : vector<8xf32>
    %16 = vector.multi_reduction <maximumf>, %15, %cst_6 [1] : vector<8x8xf32> to vector<8xf32>
    %17 = vector.shape_cast %16 : vector<8xf32> to vector<8x1xf32>
    %18 = vector.broadcast %17 : vector<8x1xf32> to vector<8x8xf32>
    %19 = arith.subf %15, %18 : vector<8x8xf32>
    %20 = math.exp %19 : vector<8x8xf32>
    %cst_7 = arith.constant dense<0.000000e+00> : vector<8xf32>
    %21 = vector.multi_reduction <add>, %20, %cst_7 [1] : vector<8x8xf32> to vector<8xf32>
    %22 = vector.shape_cast %21 : vector<8xf32> to vector<8x1xf32>
    %23 = tpu.reciprocal %22 {approx = true} : vector<8x1xf32> -> vector<8x1xf32>
    %24 = vector.broadcast %23 : vector<8x1xf32> to vector<8x8xf32>
    %25 = arith.mulf %20, %24 : vector<8x8xf32>
    %c0_8 = arith.constant 0 : index
    %c0_9 = arith.constant 0 : index
    %c0_10 = arith.constant 0 : index
    %c0_11 = arith.constant 0 : index
    %26 = vector.load %arg3[%c0_8, %c0_9, %c0_10, %c0_11] : memref<1x1x8x32xbf16, #tpu.memory_space<vmem>>, vector<1x1x8x32xbf16>
    %27 = vector.shape_cast %26 : vector<1x1x8x32xbf16> to vector<8x32xbf16>
    %c0_12 = arith.constant 0 : index
    %c0_13 = arith.constant 0 : index
    %28 = vector.load %arg5[%c0_12, %c0_13] : memref<8x32xf32, #tpu.memory_space<vmem>>, vector<8x32xf32>
    %29 = arith.truncf %25 : vector<8x8xf32> to vector<8x8xbf16>
    %cst_14 = arith.constant dense<0.000000e+00> : vector<8x32xf32>
    %30 = tpu.matmul %29, %27, %cst_14 {dimension_numbers = #tpu.dot_dimension_numbers<[1], [0], [0], [1], [0, 0, 1, 1], [], []>} : vector<8x8xbf16>, vector<8x32xbf16>, vector<8x32xf32> -> vector<8x32xf32>
    %31 = arith.addf %28, %30 : vector<8x32xf32>
    %c0_15 = arith.constant 0 : index
    %c0_16 = arith.constant 0 : index
    %32 = vector.load %arg5[%c0_15, %c0_16] : memref<8x32xf32, #tpu.memory_space<vmem>>, vector<8x32xf32>
    tpu.vector_store %arg5[%c0_15, %c0_16], %31 {strides = array<i32>} : memref<8x32xf32, #tpu.memory_space<vmem>>, vector<8x32xf32>,
    %c3_i32 = arith.constant 3 : i32
    %33 = arith.cmpi eq, %arg1, %c3_i32 : i32
    %34 = arith.extui %33 : i1 to i32
    %c0_i32_17 = arith.constant 0 : i32
    %35 = arith.cmpi ne, %34, %c0_i32_17 : i32
    scf.if %35 {
      %c0_18 = arith.constant 0 : index
      %c0_19 = arith.constant 0 : index
      %36 = vector.load %arg5[%c0_18, %c0_19] : memref<8x32xf32, #tpu.memory_space<vmem>>, vector<8x32xf32>
      %37 = vector.shape_cast %36 : vector<8x32xf32> to vector<1x8x32xf32>
      %38 = arith.truncf %37 : vector<1x8x32xf32> to vector<1x8x32xbf16>
      %c0_20 = arith.constant 0 : index
      %c0_21 = arith.constant 0 : index
      %c0_22 = arith.constant 0 : index
      %39 = vector.load %arg4[%c0_20, %c0_21, %c0_22] : memref<1x8x32xbf16, #tpu.memory_space<vmem>>, vector<1x8x32xbf16>
      tpu.vector_store %arg4[%c0_20, %c0_21, %c0_22], %38 {strides = array<i32>} : memref<1x8x32xbf16, #tpu.memory_space<vmem>>, vector<1x8x32xbf16>,
    } else {
    }
    return
  }
  func.func @transform_0(%arg0: i32, %arg1: i32) -> (i32, i32, i32, i32) {
    %c0_i32 = arith.constant 0 : i32
    %c0_i32_0 = arith.constant 0 : i32
    %c0_i32_1 = arith.constant 0 : i32
    return %arg1, %arg0, %c0_i32, %c0_i32_0 : i32, i32, i32, i32
  }
  func.func @transform_1(%arg0: i32, %arg1: i32) -> (i32, i32, i32, i32) {
    %c0_i32 = arith.constant 0 : i32
    %c0_i32_0 = arith.constant 0 : i32
    %c0_i32_1 = arith.constant 0 : i32
    return %arg1, %arg0, %c0_i32, %c0_i32_0 : i32, i32, i32, i32
  }
  func.func @transform_2(%arg0: i32, %arg1: i32) -> (i32, i32, i32) {
    %c0_i32 = arith.constant 0 : i32
    %c0_i32_0 = arith.constant 0 : i32
    %c0_i32_1 = arith.constant 0 : i32
    return %arg0, %c0_i32, %c0_i32_0 : i32, i32, i32
  }
}

</mosaic_0001>

<llo_original>
// kernel: backpack_forward.14
$region0: #{backpack_forward.14}
  #allocation0 [shape = 'u32[]', space=smem, size = 0x4, offset = 0x4, fixed_abs, tag = 'smem constant byte address 0x4 - core index']
  #allocation1 [shape = 'u32[144,128]{1,0:T(1,128)}', space=vmem, size = 0x12000, scoped, tag = 'internal scratch']
  %s0 = inlined_call_operand.vmem [shape: f32[16,32], index: 0, kind: input, shape index: {}]
  %s1 = inlined_call_operand.vmem [shape: f32[1,32], index: 1, kind: input, shape index: {}]
  %s2 = inlined_call_operand.vmem [shape: f32[1,32], index: 2, kind: input, shape index: {}]
  %s3 = inlined_call_operand.vmem [shape: bf16[32,96], index: 3, kind: input, shape index: {}]
  %s4 = inlined_call_operand.vmem [shape: f32[1,96], index: 4, kind: input, shape index: {}]
  %s5 = inlined_call_operand.vmem [shape: bf16[16,96], index: 5, kind: output, shape index: {}]
  %s6 = sld [smem:[#allocation0]]
  $region30: #{backpack_forward.14} parent=0
    _
  %s8 = ssub.s32 1, %s6
  %s9 = scalar_select 0, %s8, %s6
  // Predicated region
  $region2: #{backpack_forward.14} parent=0 // pred_check
    _
  $region3: #{backpack_forward.14} parent=0 // pred_check_branch
    %11 = sbr.rel (0) target = $region5
  $region4: #{backpack_forward.14} parent=0 // pred_region
    _
  $region5: #{backpack_forward.14} parent=0 // pred_fallthru
    _
  // Predicated region
  $region6: #{backpack_forward.14} parent=0 // pred_check
    _
  $region7: #{backpack_forward.14} parent=0 // pred_check_branch
    %13 = sbr.rel (0) target = $region9
  $region8: #{backpack_forward.14} parent=0 // pred_region
    _
  $region9: #{backpack_forward.14} parent=0 // pred_fallthru
    _
  // Predicated region
  $region10: #{backpack_forward.14} parent=0 // pred_check
    _
  $region11: #{backpack_forward.14} parent=0 // pred_check_branch
    %15 = sbr.rel (0) target = $region13
  $region12: #{backpack_forward.14} parent=0 // pred_region
    _
  $region13: #{backpack_forward.14} parent=0 // pred_fallthru
    _
  // Predicated region
  $region14: #{backpack_forward.14} parent=0 // pred_check
    _
  $region15: #{backpack_forward.14} parent=0 // pred_check_branch
    %17 = sbr.rel (0) target = $region17
  $region16: #{backpack_forward.14} parent=0 // pred_region
    _
  $region17: #{backpack_forward.14} parent=0 // pred_fallthru
    _
  // Predicated region
  $region18: #{backpack_forward.14} parent=0 // pred_check
    _
  $region19: #{backpack_forward.14} parent=0 // pred_check_branch
    %19 = sbr.rel (0) target = $region21
  $region20: #{backpack_forward.14} parent=0 // pred_region
    _
  $region21: #{backpack_forward.14} parent=0 // pred_fallthru
    _
  %v21 = vld [vmem:[%s0] sm:$0xff]
  %v22 = vld [vmem:[%s0 + $0x8] sm:$0xff]
  %v23 = vld [vmem:[%s1] sm:$0x1]
  %v24 = vld [vmem:[%s2] sm:$0x1]
  %vm25 = vcmask 261120
  %v26 = vsel %vm25, %v21, 0.0
  %27 = vadd.xlane.f32.xlu0 %v26
  %v28 = vpop.xlane.xlu0 %27
  %v29 = vsel %vm25, %v22, 0.0
  %30 = vadd.xlane.f32.xlu0 %v29
  %v31 = vpop.xlane.xlu0 %30
  %v32 = vrcp.pop 32.0
  %v33 = vmul.f32 %v28, %v32
  %v34 = vmul.f32 %v31, %v32
  %v35 = vsub.f32 %v21, %v33
  %v36 = vsub.f32 %v22, %v34
  %v37 = vmul.f32 %v35, %v35
  %v38 = vmul.f32 %v36, %v36
  %v39 = vsel %vm25, %v37, 0.0
  %40 = vadd.xlane.f32.xlu0 %v39
  %v41 = vpop.xlane.xlu0 %40
  %v42 = vsel %vm25, %v38, 0.0
  %43 = vadd.xlane.f32.xlu0 %v42
  %v44 = vpop.xlane.xlu0 %43
  %v45 = vmul.f32 %v41, %v32
  %v46 = vmul.f32 %v44, %v32
  %v47 = vadd.f32 %v45, 1e-05
  %v48 = vadd.f32 %v46, 1e-05
  %v49 = vrsqrt.pop %v47
  %v50 = vrsqrt.pop %v48
  %v51 = vmul.f32 %v35, %v49
  %v52 = vmul.f32 %v36, %v50
  %v54 = vlaneseq
  %v55 = vshrl.u32 %v54, 7
  %v56 = vsub.s32 0, %v55
  %v57 = vrot.slane %v23, %v56
  %v59 = vmul.f32 %v51, %v57
  %v60 = vmul.f32 %v52, %v57
  %v62 = vlaneseq
  %v63 = vshrl.u32 %v62, 7
  %v64 = vsub.s32 0, %v63
  %v65 = vrot.slane %v24, %v64
  %v67 = vadd.f32 %v59, %v65
  %v68 = vadd.f32 %v60, %v65
  %v69 = vpack.c.bf16 %v68, %v67
  %v70 = vld [vmem:[%s3] sm:$0xf]
  %v71 = vld [vmem:[%s3 + $0x4] sm:$0xf]
  %v72 = vld [vmem:[%s3 + $0x8] sm:$0xf]
  %v73 = vld [vmem:[%s3 + $0xc] sm:$0xf]
  %v74 = vld [vmem:[%s4] sm:$0x1]
  %v76 = vlaneseq
  %v77 = vshrl.u32 %v76, 7
  %v78 = vsub.s32 0, %v77
  %v79 = vrot.slane %v74, %v78
  %v85 = vunpack.c.l.b16 %v70
  %v86 = vunpack.c.l.b16 %v71
  %v87 = vunpack.c.l.b16 %v72
  %v88 = vunpack.c.l.b16 %v73
  %v89 = vpack.c.b16 %v86, %v85
  %v90 = vpack.c.b16 %v88, %v87
  %v94 = vsel %vm25, %v69, 0
  %96 = vmatprep.subr.bf16.mxu0 0
  %97 = vmatpush1.bf16.msra.mxu0 %v89
  %98 = vmatprep.subr.bf16.mxu0 0
  %99 = vmatpush1.bf16.msra.mxu0 %v90
  %100 = vmatprep.subr.bf16.mxu0 0
  %101 = vmatpush1.bf16.msra.mxu0 0
  %102 = vmatprep.subr.bf16.mxu0 0
  %103 = vmatpush1.bf16.msra.mxu0 0
  %104 = vmatprep.subr.bf16.mxu0 0
  %105 = vmatpush1.bf16.msra.mxu0 0
  %106 = vmatprep.subr.bf16.mxu0 0
  %107 = vmatpush1.bf16.msra.mxu0 0
  %108 = vmatprep.subr.bf16.mxu0 0
  %109 = vmatpush1.bf16.msra.mxu0 0
  %110 = vmatprep.subr.bf16.mxu0 0
  %111 = vmatpush1.bf16.msra.mxu0 0
  %112 = vmatprep.subr.bf16.mxu0 0
  %113 = vmatpush1.bf16.msra.mxu0 0
  %114 = vmatprep.subr.bf16.mxu0 0
  %115 = vmatpush1.bf16.msra.mxu0 0
  %116 = vmatprep.subr.bf16.mxu0 0
  %117 = vmatpush1.bf16.msra.mxu0 0
  %118 = vmatprep.subr.bf16.mxu0 0
  %119 = vmatpush1.bf16.msra.mxu0 0
  %120 = vmatprep.subr.bf16.mxu0 0
  %121 = vmatpush1.bf16.msra.mxu0 0
  %122 = vmatprep.subr.bf16.mxu0 0
  %123 = vmatpush1.bf16.msra.mxu0 0
  %124 = vmatprep.subr.bf16.mxu0 0
  %125 = vmatpush1.bf16.msra.mxu0 0
  %126 = vmatprep.subr.bf16.mxu0 0
  %127 = vmatpush1.bf16.msra.mxu0 0
  %128 = vmatprep.mubr.bf16.mxu0 0
  %129 = vmatmul.mubr.bf16.gmra.mrb[0].mxu0 %v94
  %v130 = vpop.f32.mrb[0].mxu0
  %v131 = vadd.f32 %v79, %v130
  %v132 = vpop.f32.mrb[0].mxu0
  %v133 = vpop.f32.mrb[0].mxu0
  %v134 = vadd.f32 %v79, %v133
  %v135 = vpop.f32.mrb[0].mxu0
  %136 = vdwg.mxu0
  %v137 = vpack.c.bf16 %v134, %v131
  %v139 = vunpack.c.l.b16 %v137
  %v140 = vunpack.c.h.b16 %v137
  %v141 = vpack.c.b16 %v139, %v139
  %v142 = vpack.c.b16 %v140, %v140
  %vm145 = vcmask 781312
  %146 = vst.msk [vmem:[%s5] sm:$0xf] %vm145, %v141
  %147 = vst.msk [vmem:[%s5 + $0x4] sm:$0xf] %vm145, %v142
  // Predicated region
  $region22: #{backpack_forward.14} parent=0 // pred_check
    _
  $region23: #{backpack_forward.14} parent=0 // pred_check_branch
    %149 = sbr.rel (0) target = $region25
  $region24: #{backpack_forward.14} parent=0 // pred_region
    _
  $region25: #{backpack_forward.14} parent=0 // pred_fallthru
    _
  // Predicated region
  $region26: #{backpack_forward.14} parent=0 // pred_check
    _
  $region27: #{backpack_forward.14} parent=0 // pred_check_branch
    %151 = sbr.rel (0) target = $region29
  $region28: #{backpack_forward.14} parent=0 // pred_region
    _
  $region29: #{backpack_forward.14} parent=0 // pred_fallthru
    _

// kernel: backpack_forward.15
$region0: #{backpack_forward.15}
  #allocation0 [shape = 'u32[]', space=smem, size = 0x4, offset = 0x4, fixed_abs, tag = 'smem constant byte address 0x4 - core index']
  #allocation1 [shape = 'u32[144,128]{1,0:T(1,128)}', space=vmem, size = 0x12000, scoped, tag = 'internal scratch']
  %s0 = inlined_call_operand.vmem [shape: bf16[2,3,4,8,8], index: 0, kind: input, shape index: {}]
  %s1 = inlined_call_operand.vmem [shape: bf16[2,4,8,8], index: 1, kind: output, shape index: {}]
  %s2 = sld [smem:[#allocation0]]
  $region78: #{backpack_forward.15} parent=0
    _
  %s4 = ssub.s32 1, %s2
  %s5 = scalar_select 0, %s4, %s2
  $region1: #{backpack_forward.15} parent=0
    #allocation2 [shape = 'u8[12288]{0}', space=vmem, size = 0x3000, scoped, tag = 'input window, operand 0']
    loop: start=0, step=1, limit=10
    $region2: #{backpack_forward.15} parent=1 // loop_pre_header
      _
    $region3: #{backpack_forward.15} parent=1 // loop_header
      %s7 = sphi 0, %s11
      %p8 = scmp.ge.s32.totalorder %s7, 10
      %s14 = sphi 0, %s26
      %s15 = sphi 0, %s22
      %s16 = sphi 0, %s14
      %s17 = sphi 0, %s15
      %s18 = sphi 0, %s16
      %s19 = sphi 0, %s17
      %s31 = sphi 0, %s33
      %s34 = sphi 0, %s31
      %s35 = sphi 0, %s34
      %s51 = sphi 0, %s35
      %s59 = sphi 0, %s61
      %s62 = sphi 0, %s59
      %s63 = sphi 0, %s62
      %s79 = sphi 0, %s63
    $region4: #{backpack_forward.15} parent=1 // loop_header_branch
      %10 = sbr.rel (%p8) target = $region8
    $region5: #{backpack_forward.15} parent=1 // loop_body
      %s12 = ssub.s32 %s7, 1
      %s13 = ssub.s32 %s7, 2
      %s20 = sadd.s32 1, %s15
      %p21 = scmp.ge.s32.totalorder %s20, 4
      %s22 = scalar_select %p21, 0, %s20
      %s23 = sadd.s32 1, %s14
      %s24 = scalar_select %p21, %s23, %s14
      %p25 = scmp.ge.s32.totalorder %s24, 2
      %s26 = scalar_select %p25, 0, %s24
      %s27 = ssub.s32 %s14, %s26
      %s28 = ssub.s32 %s15, %s22
      %s29 = sor.u32 %s27, %s28
      %p30 = scmp.eq.s32.totalorder %s29, 0
      %s32 = sadd.s32 %s31, 1
      %s33 = scalar_select %p30, %s31, %s32
      %p36 = pneg %p30
      %p37 = scmp.eq.s32.totalorder %s7, 7
      %p38 = por %p36, %p37
      %p39 = scmp.ne.s32.totalorder %s31, %s34
      %p40 = scmp.eq.s32.totalorder %s7, 0
      %p41 = por %p39, %p40
      %p42 = scmp.ne.s32.totalorder %s31, %s34
      %p43 = scmp.eq.s32.totalorder %s12, 7
      %p44 = por %p42, %p43
      %p45 = scmp.ne.s32.totalorder %s34, %s35
      %p46 = scmp.eq.s32.totalorder %s12, 0
      %p47 = por %p45, %p46
      %p48 = scmp.ne.s32.totalorder %s34, %s35
      %p49 = scmp.eq.s32.totalorder %s13, 7
      %p50 = por %p48, %p49
      %p52 = scmp.ne.s32.totalorder %s35, %s51
      %p53 = scmp.eq.s32.totalorder %s13, 0
      %p54 = por %p52, %p53
      %s55 = ssub.s32 %s14, %s26
      %s56 = ssub.s32 %s15, %s22
      %s57 = sor.u32 %s55, %s56
      %p58 = scmp.eq.s32.totalorder %s57, 0
      %s60 = sadd.s32 %s59, 1
      %s61 = scalar_select %p58, %s59, %s60
      %p64 = pneg %p58
      %p65 = scmp.eq.s32.totalorder %s7, 7
      %p66 = por %p64, %p65
      %p67 = scmp.ne.s32.totalorder %s59, %s62
      %p68 = scmp.eq.s32.totalorder %s7, 0
      %p69 = por %p67, %p68
      %p70 = scmp.ne.s32.totalorder %s59, %s62
      %p71 = scmp.eq.s32.totalorder %s12, 7
      %p72 = por %p70, %p71
      %p73 = scmp.ne.s32.totalorder %s62, %s63
      %p74 = scmp.eq.s32.totalorder %s12, 0
      %p75 = por %p73, %p74
      %p76 = scmp.ne.s32.totalorder %s62, %s63
      %p77 = scmp.eq.s32.totalorder %s13, 7
      %p78 = por %p76, %p77
      %p80 = scmp.ne.s32.totalorder %s63, %s79
      %p81 = scmp.eq.s32.totalorder %s13, 0
      %p82 = por %p80, %p81
      %p83 = scmp.le.s32.totalorder 1, %s7
      %p84 = scmp.lt.s32.totalorder %s7, 9
      %p85 = pnand %p83, %p84
      %p86 = pneg %p85
      // Predicated region
      $region9: #{backpack_forward.15} parent=5 // pred_check
        _
      $region10: #{backpack_forward.15} parent=5 // pred_check_branch
        %88 = sbr.rel (%p85) target = $region12
      $region11: #{backpack_forward.15} parent=5 // pred_region
        %s89 = ssub.s32 %s7, 1
      $region12: #{backpack_forward.15} parent=5 // pred_fallthru
        _
      %p90 = scmp.lt.s32.totalorder %s7, 8
      // Predicated region
      $region13: #{backpack_forward.15} parent=5 // pred_check
        %p91 = pneg %p90
      $region14: #{backpack_forward.15} parent=5 // pred_check_branch
        %93 = sbr.rel (%p91) target = $region16
      $region15: #{backpack_forward.15} parent=5 // pred_region
        // Predicated region
        $region17: #{backpack_forward.15} parent=15 // pred_check
          %p94 = pneg %p41
        $region18: #{backpack_forward.15} parent=15 // pred_check_branch
          %96 = sbr.rel (%p94) target = $region20
        $region19: #{backpack_forward.15} parent=15 // pred_region
          %s97 = sand.u32 %s31, 1
          %s98 = sand.u32 %s31, 1
          %s99 = smul.addr %s98, 12
          %s100 = scalar_lea.vmem [#allocation2], %s99
          %s101 = smul.addr %s14, 12
          %s102 = sadd.s32 %s15, %s101
          %s103 = smul.addr %s102, 4
          %s104 = scalar_lea.vmem %s0, %s103
          // Predicated region
          $region21: #{backpack_forward.15} parent=19 // pred_check
            _
          $region22: #{backpack_forward.15} parent=19 // pred_check_branch
            %106 = sbr.rel (0) target = $region24
          $region23: #{backpack_forward.15} parent=19 // pred_region
            // Predicated region
            $region25: #{backpack_forward.15} parent=23 // pred_check
              _
            $region26: #{backpack_forward.15} parent=23 // pred_check_branch
              %108 = sbr.rel target = $region28
            $region27: #{backpack_forward.15} parent=23 // pred_region
              // Predicated region
              $region40: #{backpack_forward.15} parent=27 // pred_check
                _
              $region41: #{backpack_forward.15} parent=27 // pred_check_branch
                %127 = sbr.rel (0) target = $region43
              $region42: #{backpack_forward.15} parent=27 // pred_region
                loop: start=0, step=1, limit=1
                $region44: #{backpack_forward.15} parent=42 // loop_pre_header
                  _
                $region45: #{backpack_forward.15} parent=42 // loop_header
                  %s129 = sphi 0, %s133
                  %p130 = scmp.ge.s32.totalorder %s129, 1
                  %s134 = sphi %s104, %s104
                  %s135 = sphi %s100, %s100
                $region46: #{backpack_forward.15} parent=42 // loop_header_branch
                  %132 = sbr.rel (%p130) target = $region50
                $region47: #{backpack_forward.15} parent=42 // loop_body
                  _
                $region48: #{backpack_forward.15} parent=42 // loop_footer
                  %s133 = sadd.s32 1, %s129
                $region49: #{backpack_forward.15} parent=42 // loop_footer_branch
                  %128 = sbr.rel target = $region45
                $region50: #{backpack_forward.15} parent=42 // loop_exit
                  _
                loop: start=0, step=1, limit=1
                $region51: #{backpack_forward.15} parent=42 // loop_pre_header
                  _
                $region52: #{backpack_forward.15} parent=42 // loop_header
                  %s138 = sphi 0, %s142
                  %p139 = scmp.ge.s32.totalorder %s138, 1
                  %s143 = sphi %s104, %s104
                  %s144 = sphi %s100, %s100
                $region53: #{backpack_forward.15} parent=42 // loop_header_branch
                  %141 = sbr.rel (%p139) target = $region57
                $region54: #{backpack_forward.15} parent=42 // loop_body
                  %v145 = vld [vmem:[%s143] sm:$0xf]
                  %146 = vst [vmem:[%s144] sm:$0xf] %v145
                  %v147 = vld [vmem:[%s143 + $0x10] sm:$0xf]
                  %148 = vst [vmem:[%s144 + $0x4] sm:$0xf] %v147
                  %v149 = vld [vmem:[%s143 + $0x20] sm:$0xf]
                  %150 = vst [vmem:[%s144 + $0x8] sm:$0xf] %v149
                $region55: #{backpack_forward.15} parent=42 // loop_footer
                  %s142 = sadd.s32 1, %s138
                $region56: #{backpack_forward.15} parent=42 // loop_footer_branch
                  %137 = sbr.rel target = $region52
                $region57: #{backpack_forward.15} parent=42 // loop_exit
                  _
              $region43: #{backpack_forward.15} parent=27 // pred_fallthru
                _
            $region28: #{backpack_forward.15} parent=23 // pred_fallthru
              _
            // Predicated region
            $region29: #{backpack_forward.15} parent=23 // pred_check
              _
            $region30: #{backpack_forward.15} parent=23 // pred_check_branch
              %110 = sbr.rel (0) target = $region32
            $region31: #{backpack_forward.15} parent=23 // pred_region
              loop: start=0, step=1, limit=1
              $region33: #{backpack_forward.15} parent=31 // loop_pre_header
                _
              $region34: #{backpack_forward.15} parent=31 // loop_header
                %s113 = sphi 0, %s117
                %p114 = scmp.ge.s32.totalorder %s113, 1
                %s118 = sphi %s104, %s104
                %s119 = sphi %s100, %s100
              $region35: #{backpack_forward.15} parent=31 // loop_header_branch
                %116 = sbr.rel (%p114) target = $region39
              $region36: #{backpack_forward.15} parent=31 // loop_body
                %v120 = vld [vmem:[%s118] sm:$0xf]
                %121 = vst [vmem:[%s119] sm:$0xf] %v120
                %v122 = vld [vmem:[%s118 + $0x10] sm:$0xf]
                %123 = vst [vmem:[%s119 + $0x4] sm:$0xf] %v122
                %v124 = vld [vmem:[%s118 + $0x20] sm:$0xf]
                %125 = vst [vmem:[%s119 + $0x8] sm:$0xf] %v124
              $region37: #{backpack_forward.15} parent=31 // loop_footer
                %s117 = sadd.s32 1, %s113
              $region38: #{backpack_forward.15} parent=31 // loop_footer_branch
                %112 = sbr.rel target = $region34
              $region39: #{backpack_forward.15} parent=31 // loop_exit
                _
            $region32: #{backpack_forward.15} parent=23 // pred_fallthru
              _
          $region24: #{backpack_forward.15} parent=19 // pred_fallthru
            _
          %151 = vnop
        $region20: #{backpack_forward.15} parent=15 // pred_fallthru
          _
      $region16: #{backpack_forward.15} parent=5 // pred_fallthru
        _
      %p152 = scmp.le.s32.totalorder 1, %s7
      %p153 = scmp.lt.s32.totalorder %s7, 9
      %p154 = pnand %p152, %p153
      %p155 = pneg %p154
      // Predicated region
      $region58: #{backpack_forward.15} parent=5 // pred_check
        _
      $region59: #{backpack_forward.15} parent=5 // pred_check_branch
        %157 = sbr.rel (%p154) target = $region61
      $region60: #{backpack_forward.15} parent=5 // pred_region
        %s158 = ssub.s32 %s7, 1
        %s159 = sand.u32 %s34, 1
        %s160 = sand.u32 %s34, 1
        %s161 = smul.addr %s160, 12
        %s162 = scalar_lea.vmem [#allocation2], %s161
        // Predicated region
        $region62: #{backpack_forward.15} parent=60 // pred_check
          %p163 = pneg %p47
        $region63: #{backpack_forward.15} parent=60 // pred_check_branch
          %165 = sbr.rel (%p163) target = $region65
        $region64: #{backpack_forward.15} parent=60 // pred_region
          _
        $region65: #{backpack_forward.15} parent=60 // pred_fallthru
          _
        %s166 = sand.u32 %s34, 1
        %s167 = sand.u32 %s34, 1
        %s168 = smul.addr %s167, 12
        %s169 = scalar_lea.vmem [#allocation2], %s168
        %p170 = pneg %p47
        %p171 = pneg %p44
        %p172 = pneg %p75
        %p173 = pneg %p72
        %p174 = scmp.lt.s32.totalorder %s16, 1
        %s175 = scalar_select %p174, %s16, 1
        %p176 = scmp.lt.s32.totalorder %s17, 3
        %s177 = scalar_select %p176, %s17, 3
        %s178 = smul.addr %s175, 4
        %s179 = sadd.s32 %s177, %s178
        %s180 = smul.addr %s179, 4
        %s181 = scalar_lea.vmem %s1, %s180
        %p182 = scmp.lt.s32.totalorder %s16, 1
        %s183 = scalar_select %p182, %s16, 1
        %p184 = scmp.lt.s32.totalorder %s17, 3
        %s185 = scalar_select %p184, %s17, 3
        %s186 = smul.addr %s183, 4
        %s187 = sadd.s32 %s185, %s186
        %s188 = smul.addr %s187, 4
        %s189 = scalar_lea.vmem %s1, %s188
        %v191 = vld [vmem:[%s162] sm:$0xf]
        %v192 = vld [vmem:[%s162 + $0x4] sm:$0xf]
        %v193 = vld [vmem:[%s162 + $0x8] sm:$0xf]
        %vm194 = vcmask 64512
        %v196 = vsel %vm194, %v191, 0
        %v199 = vsel %vm194, %v192, 0
        %201 = vmatprep.subr.bf16.mxu0 0
        %202 = vmatpush1.bf16.xpose.msra.mxu0 %v199
        %203 = vmatprep.subr.bf16.mxu0 0
        %204 = vmatpush1.bf16.xpose.msra.mxu0 0
        %205 = vmatprep.subr.bf16.mxu0 0
        %206 = vmatpush1.bf16.xpose.msra.mxu0 0
        %207 = vmatprep.subr.bf16.mxu0 0
        %208 = vmatpush1.bf16.xpose.msra.mxu0 0
        %209 = vmatprep.subr.bf16.mxu0 0
        %210 = vmatpush1.bf16.xpose.msra.mxu0 0
        %211 = vmatprep.subr.bf16.mxu0 0
        %212 = vmatpush1.bf16.xpose.msra.mxu0 0
        %213 = vmatprep.subr.bf16.mxu0 0
        %214 = vmatpush1.bf16.xpose.msra.mxu0 0
        %215 = vmatprep.subr.bf16.mxu0 0
        %216 = vmatpush1.bf16.xpose.msra.mxu0 0
        %217 = vmatprep.subr.bf16.mxu0 0
        %218 = vmatpush1.bf16.xpose.msra.mxu0 0
        %219 = vmatprep.subr.bf16.mxu0 0
        %220 = vmatpush1.bf16.xpose.msra.mxu0 0
        %221 = vmatprep.subr.bf16.mxu0 0
        %222 = vmatpush1.bf16.xpose.msra.mxu0 0
        %223 = vmatprep.subr.bf16.mxu0 0
        %224 = vmatpush1.bf16.xpose.msra.mxu0 0
        %225 = vmatprep.subr.bf16.mxu0 0
        %226 = vmatpush1.bf16.xpose.msra.mxu0 0
        %227 = vmatprep.subr.bf16.mxu0 0
        %228 = vmatpush1.bf16.xpose.msra.mxu0 0
        %229 = vmatprep.subr.bf16.mxu0 0
        %230 = vmatpush1.bf16.xpose.msra.mxu0 0
        %231 = vmatprep.subr.bf16.mxu0 0
        %232 = vmatpush1.bf16.xpose.msra.mxu0 0
        %233 = vmatprep.mubr.bf16.mxu0 0
        %234 = vmatmul.mubr.bf16.gmra.mrb[0].mxu0 %v196
        %v235 = vpop.f32.mrb[0].mxu0
        %v236 = vadd.f32 0.0, %v235
        %v237 = vpop.f32.mrb[0].mxu0
        %v238 = vpop.f32.mrb[0].mxu0
        %v239 = vpop.f32.mrb[0].mxu0
        %240 = vdwg.mxu0
        %v241 = vmul.f32 %v236, 0.35355338
        %v242 = vlaneseq
        %v243 = vshrl.u32 %v242, 7
        %v244 = vlaneseq
        %v245 = vand.u32 %v244, 127
        %vm246 = vcmp.gt.s32.totalorder %v245, %v243
        %v247 = vsub.f32 %v241, 10000.0
        %v248 = vsel %vm246, %v247, %v241
        %v249 = vsel %vm194, %v248, -inf
        %250 = vmax.xlane.f32.xlu0 %v249
        %v251 = vpop.xlane.xlu0 %250
        %v252 = vsub.f32 %v248, %v251
        %v253 = vmul.f32 %v252, 1.442695
        %v254 = vpow.pop %v253
        %v255 = vsel %vm194, %v254, 0.0
        %256 = vadd.xlane.f32.xlu0 %v255
        %v257 = vpop.xlane.xlu0 %256
        %v258 = vrcp.pop %v257
        %v259 = vmul.f32 %v254, %v258
        %v260 = vpack.c.bf16 %v259, %v259
        %v262 = vsel %vm194, %v260, 0
        %vm264 = vcmask 1043456
        %v266 = vsel %vm264, %v193, 0
        %268 = vmatprep.subr.bf16.mxu0 0
        %269 = vmatpush1.bf16.msra.mxu0 %v266
        %270 = vmatprep.subr.bf16.mxu0 0
        %271 = vmatpush1.bf16.msra.mxu0 0
        %272 = vmatprep.subr.bf16.mxu0 0
        %273 = vmatpush1.bf16.msra.mxu0 0
        %274 = vmatprep.subr.bf16.mxu0 0
        %275 = vmatpush1.bf16.msra.mxu0 0
        %276 = vmatprep.subr.bf16.mxu0 0
        %277 = vmatpush1.bf16.msra.mxu0 0
        %278 = vmatprep.subr.bf16.mxu0 0
        %279 = vmatpush1.bf16.msra.mxu0 0
        %280 = vmatprep.subr.bf16.mxu0 0
        %281 = vmatpush1.bf16.msra.mxu0 0
        %282 = vmatprep.subr.bf16.mxu0 0
        %283 = vmatpush1.bf16.msra.mxu0 0
        %284 = vmatprep.subr.bf16.mxu0 0
        %285 = vmatpush1.bf16.msra.mxu0 0
        %286 = vmatprep.subr.bf16.mxu0 0
        %287 = vmatpush1.bf16.msra.mxu0 0
        %288 = vmatprep.subr.bf16.mxu0 0
        %289 = vmatpush1.bf16.msra.mxu0 0
        %290 = vmatprep.subr.bf16.mxu0 0
        %291 = vmatpush1.bf16.msra.mxu0 0
        %292 = vmatprep.subr.bf16.mxu0 0
        %293 = vmatpush1.bf16.msra.mxu0 0
        %294 = vmatprep.subr.bf16.mxu0 0
        %295 = vmatpush1.bf16.msra.mxu0 0
        %296 = vmatprep.subr.bf16.mxu0 0
        %297 = vmatpush1.bf16.msra.mxu0 0
        %298 = vmatprep.subr.bf16.mxu0 0
        %299 = vmatpush1.bf16.msra.mxu0 0
        %300 = vmatprep.mubr.bf16.mxu0 0
        %301 = vmatmul.mubr.bf16.gmra.mrb[0].mxu0 %v262
        %v302 = vpop.f32.mrb[0].mxu0
        %v303 = vadd.f32 0.0, %v302
        %v304 = vpop.f32.mrb[0].mxu0
        %v305 = vpop.f32.mrb[0].mxu0
        %v306 = vpop.f32.mrb[0].mxu0
        %307 = vdwg.mxu0
        %v308 = vpack.c.bf16 %v303, %v303
        %vm309 = vcmask 60416
        %310 = vst.msk [vmem:[%s189] sm:$0xf] %vm309, %v308
        %p311 = scmp.lt.s32.totalorder %s16, 1
        %s312 = scalar_select %p311, %s16, 1
        %p313 = scmp.lt.s32.totalorder %s17, 3
        %s314 = scalar_select %p313, %s17, 3
        %s315 = smul.addr %s312, 4
        %s316 = sadd.s32 %s314, %s315
        %s317 = smul.addr %s316, 4
        %s318 = scalar_lea.vmem %s1, %s317
        // Predicated region
        $region66: #{backpack_forward.15} parent=60 // pred_check
          %p319 = pneg %p72
        $region67: #{backpack_forward.15} parent=60 // pred_check_branch
          %321 = sbr.rel (%p319) target = $region69
        $region68: #{backpack_forward.15} parent=60 // pred_region
          _
        $region69: #{backpack_forward.15} parent=60 // pred_fallthru
          _
      $region61: #{backpack_forward.15} parent=5 // pred_fallthru
        _
      %p322 = scmp.le.s32.totalorder 2, %s7
      // Predicated region
      $region70: #{backpack_forward.15} parent=5 // pred_check
        %p323 = pneg %p322
      $region71: #{backpack_forward.15} parent=5 // pred_check_branch
        %325 = sbr.rel (%p323) target = $region73
      $region72: #{backpack_forward.15} parent=5 // pred_region
        %s326 = ssub.s32 %s7, 2
        // Predicated region
        $region74: #{backpack_forward.15} parent=72 // pred_check
          %p327 = pneg %p78
        $region75: #{backpack_forward.15} parent=72 // pred_check_branch
          %329 = sbr.rel (%p327) target = $region77
        $region76: #{backpack_forward.15} parent=72 // pred_region
          %p330 = scmp.lt.s32.totalorder %s18, 1
          %s331 = scalar_select %p330, %s18, 1
          %p332 = scmp.lt.s32.totalorder %s19, 3
          %s333 = scalar_select %p332, %s19, 3
          %s334 = smul.addr %s331, 4
          %s335 = sadd.s32 %s333, %s334
          %s336 = smul.addr %s335, 4
          %s337 = scalar_lea.vmem %s1, %s336
        $region77: #{backpack_forward.15} parent=72 // pred_fallthru
          _
      $region73: #{backpack_forward.15} parent=5 // pred_fallthru
        _
    $region6: #{backpack_forward.15} parent=1 // loop_footer
      %s11 = sadd.s32 1, %s7
    $region7: #{backpack_forward.15} parent=1 // loop_footer_branch
      %6 = sbr.rel target = $region3
    $region8: #{backpack_forward.15} parent=1 // loop_exit
      _

// kernel: backpack_forward.16
$region0: #{backpack_forward.16}
  #allocation0 [shape = 'u32[]', space=smem, size = 0x4, offset = 0x4, fixed_abs, tag = 'smem constant byte address 0x4 - core index']
  #allocation1 [shape = 'u32[144,128]{1,0:T(1,128)}', space=vmem, size = 0x12000, scoped, tag = 'internal scratch']
  %s0 = inlined_call_operand.vmem [shape: bf16[16,32], index: 0, kind: input, shape index: {}]
  %s1 = inlined_call_operand.vmem [shape: bf16[32,32], index: 1, kind: input, shape index: {}]
  %s2 = inlined_call_operand.vmem [shape: f32[1,32], index: 2, kind: input, shape index: {}]
  %s3 = inlined_call_operand.vmem [shape: f32[16,32], index: 3, kind: input, shape index: {}]
  %s4 = inlined_call_operand.vmem [shape: f32[16,32], index: 4, kind: output, shape index: {}]
  %s5 = sld [smem:[#allocation0]]
  $region26: #{backpack_forward.16} parent=0
    _
  %s7 = ssub.s32 1, %s5
  %s8 = scalar_select 0, %s7, %s5
  // Predicated region
  $region2: #{backpack_forward.16} parent=0 // pred_check
    _
  $region3: #{backpack_forward.16} parent=0 // pred_check_branch
    %10 = sbr.rel (0) target = $region5
  $region4: #{backpack_forward.16} parent=0 // pred_region
    _
  $region5: #{backpack_forward.16} parent=0 // pred_fallthru
    _
  // Predicated region
  $region6: #{backpack_forward.16} parent=0 // pred_check
    _
  $region7: #{backpack_forward.16} parent=0 // pred_check_branch
    %12 = sbr.rel (0) target = $region9
  $region8: #{backpack_forward.16} parent=0 // pred_region
    _
  $region9: #{backpack_forward.16} parent=0 // pred_fallthru
    _
  // Predicated region
  $region10: #{backpack_forward.16} parent=0 // pred_check
    _
  $region11: #{backpack_forward.16} parent=0 // pred_check_branch
    %14 = sbr.rel (0) target = $region13
  $region12: #{backpack_forward.16} parent=0 // pred_region
    _
  $region13: #{backpack_forward.16} parent=0 // pred_fallthru
    _
  // Predicated region
  $region14: #{backpack_forward.16} parent=0 // pred_check
    _
  $region15: #{backpack_forward.16} parent=0 // pred_check_branch
    %16 = sbr.rel (0) target = $region17
  $region16: #{backpack_forward.16} parent=0 // pred_region
    _
  $region17: #{backpack_forward.16} parent=0 // pred_fallthru
    _
  %v18 = vld [vmem:[%s0] sm:$0xf]
  %v19 = vld [vmem:[%s0 + $0x4] sm:$0xf]
  %v20 = vld [vmem:[%s1] sm:$0xf]
  %v21 = vld [vmem:[%s1 + $0x4] sm:$0xf]
  %v22 = vld [vmem:[%s1 + $0x8] sm:$0xf]
  %v23 = vld [vmem:[%s1 + $0xc] sm:$0xf]
  %v24 = vld [vmem:[%s2] sm:$0x1]
  %v26 = vlaneseq
  %v27 = vshrl.u32 %v26, 7
  %v28 = vsub.s32 0, %v27
  %v29 = vrot.slane %v24, %v28
  %v33 = vunpack.c.l.b16 %v18
  %v34 = vunpack.c.l.b16 %v19
  %v35 = vpack.c.b16 %v34, %v33
  %v40 = vunpack.c.l.b16 %v20
  %v41 = vunpack.c.l.b16 %v21
  %v42 = vunpack.c.l.b16 %v22
  %v43 = vunpack.c.l.b16 %v23
  %v44 = vpack.c.b16 %v41, %v40
  %v45 = vpack.c.b16 %v43, %v42
  %vm48 = vcmask 261120
  %v50 = vsel %vm48, %v35, 0
  %52 = vmatprep.subr.bf16.mxu0 0
  %53 = vmatpush1.bf16.msra.mxu0 %v44
  %54 = vmatprep.subr.bf16.mxu0 0
  %55 = vmatpush1.bf16.msra.mxu0 %v45
  %56 = vmatprep.subr.bf16.mxu0 0
  %57 = vmatpush1.bf16.msra.mxu0 0
  %58 = vmatprep.subr.bf16.mxu0 0
  %59 = vmatpush1.bf16.msra.mxu0 0
  %60 = vmatprep.subr.bf16.mxu0 0
  %61 = vmatpush1.bf16.msra.mxu0 0
  %62 = vmatprep.subr.bf16.mxu0 0
  %63 = vmatpush1.bf16.msra.mxu0 0
  %64 = vmatprep.subr.bf16.mxu0 0
  %65 = vmatpush1.bf16.msra.mxu0 0
  %66 = vmatprep.subr.bf16.mxu0 0
  %67 = vmatpush1.bf16.msra.mxu0 0
  %68 = vmatprep.subr.bf16.mxu0 0
  %69 = vmatpush1.bf16.msra.mxu0 0
  %70 = vmatprep.subr.bf16.mxu0 0
  %71 = vmatpush1.bf16.msra.mxu0 0
  %72 = vmatprep.subr.bf16.mxu0 0
  %73 = vmatpush1.bf16.msra.mxu0 0
  %74 = vmatprep.subr.bf16.mxu0 0
  %75 = vmatpush1.bf16.msra.mxu0 0
  %76 = vmatprep.subr.bf16.mxu0 0
  %77 = vmatpush1.bf16.msra.mxu0 0
  %78 = vmatprep.subr.bf16.mxu0 0
  %79 = vmatpush1.bf16.msra.mxu0 0
  %80 = vmatprep.subr.bf16.mxu0 0
  %81 = vmatpush1.bf16.msra.mxu0 0
  %82 = vmatprep.subr.bf16.mxu0 0
  %83 = vmatpush1.bf16.msra.mxu0 0
  %84 = vmatprep.mubr.bf16.mxu0 0
  %85 = vmatmul.mubr.bf16.gmra.mrb[0].mxu0 %v50
  %v86 = vpop.f32.mrb[0].mxu0
  %v87 = vadd.f32 %v29, %v86
  %v88 = vpop.f32.mrb[0].mxu0
  %v89 = vpop.f32.mrb[0].mxu0
  %v90 = vadd.f32 %v29, %v89
  %v91 = vpop.f32.mrb[0].mxu0
  %92 = vdwg.mxu0
  %v93 = vld [vmem:[%s3] sm:$0xff]
  %v94 = vld [vmem:[%s3 + $0x8] sm:$0xff]
  %v95 = vadd.f32 %v87, %v93
  %v96 = vadd.f32 %v90, %v94
  %97 = vst.msk [vmem:[%s4] sm:$0xff] %vm48, %v95
  %98 = vst.msk [vmem:[%s4 + $0x8] sm:$0xff] %vm48, %v96
  // Predicated region
  $region18: #{backpack_forward.16} parent=0 // pred_check
    _
  $region19: #{backpack_forward.16} parent=0 // pred_check_branch
    %100 = sbr.rel (0) target = $region21
  $region20: #{backpack_forward.16} parent=0 // pred_region
    _
  $region21: #{backpack_forward.16} parent=0 // pred_fallthru
    _
  // Predicated region
  $region22: #{backpack_forward.16} parent=0 // pred_check
    _
  $region23: #{backpack_forward.16} parent=0 // pred_check_branch
    %102 = sbr.rel (0) target = $region25
  $region24: #{backpack_forward.16} parent=0 // pred_region
    _
  $region25: #{backpack_forward.16} parent=0 // pred_fallthru
    _

// kernel: backpack_forward.22
$region0: #{backpack_forward.22}
  #allocation0 [shape = 'u32[]', space=smem, size = 0x4, offset = 0x4, fixed_abs, tag = 'smem constant byte address 0x4 - core index']
  #allocation1 [shape = 'u32[144,128]{1,0:T(1,128)}', space=vmem, size = 0x12000, scoped, tag = 'internal scratch']
  %s0 = inlined_call_operand.vmem [shape: f32[16,32], index: 0, kind: input, shape index: {}]
  %s1 = inlined_call_operand.vmem [shape: f32[1,32], index: 1, kind: input, shape index: {}]
  %s2 = inlined_call_operand.vmem [shape: f32[1,32], index: 2, kind: input, shape index: {}]
  %s3 = inlined_call_operand.vmem [shape: bf16[4,32,16], index: 3, kind: input, shape index: {}]
  %s4 = inlined_call_operand.vmem [shape: f32[4,1,16], index: 4, kind: input, shape index: {}]
  %s5 = inlined_call_operand.vmem [shape: bf16[4,16,16], index: 5, kind: output, shape index: {}]
  %s6 = sld [smem:[#allocation0]]
  $region53: #{backpack_forward.22} parent=0
    _
  %s8 = ssub.s32 1, %s6
  %s9 = scalar_select 0, %s8, %s6
  loop: start=0, step=1, limit=6
  $region2: #{backpack_forward.22} parent=0 // loop_pre_header
    _
  $region3: #{backpack_forward.22} parent=0 // loop_header
    %s11 = sphi 0, %s15
    %p12 = scmp.ge.s32.totalorder %s11, 6
    %s18 = sphi 0, %s30
    %s19 = sphi 0, %s26
    %s20 = sphi 0, %s18
    %s21 = sphi 0, %s19
    %s22 = sphi 0, %s20
    %s23 = sphi 0, %s21
    %s33 = sphi 0, %s35
    %s36 = sphi 0, %s33
    %s37 = sphi 0, %s36
    %s53 = sphi 0, %s37
    %s57 = sphi 0, %s57
    %s59 = sphi 0, %s57
    %s60 = sphi 0, %s59
    %s74 = sphi 0, %s60
    %s78 = sphi 0, %s78
    %s80 = sphi 0, %s78
    %s81 = sphi 0, %s80
    %s95 = sphi 0, %s81
    %s101 = sphi 0, %s103
    %s104 = sphi 0, %s101
    %s105 = sphi 0, %s104
    %s121 = sphi 0, %s105
    %s127 = sphi 0, %s129
    %s130 = sphi 0, %s127
    %s131 = sphi 0, %s130
    %s147 = sphi 0, %s131
    %s155 = sphi 0, %s157
    %s158 = sphi 0, %s155
    %s159 = sphi 0, %s158
    %s175 = sphi 0, %s159
  $region4: #{backpack_forward.22} parent=0 // loop_header_branch
    %14 = sbr.rel (%p12) target = $region8
  $region5: #{backpack_forward.22} parent=0 // loop_body
    %s16 = ssub.s32 %s11, 1
    %s17 = ssub.s32 %s11, 2
    %s24 = sadd.s32 1, %s19
    %p25 = scmp.ge.s32.totalorder %s24, 1
    %s26 = scalar_select %p25, 0, %s24
    %s27 = sadd.s32 1, %s18
    %s28 = scalar_select %p25, %s27, %s18
    %p29 = scmp.ge.s32.totalorder %s28, 4
    %s30 = scalar_select %p29, 0, %s28
    %s31 = ssub.s32 %s19, %s26
    %p32 = scmp.eq.s32.totalorder %s31, 0
    %s34 = sadd.s32 %s33, 1
    %s35 = scalar_select %p32, %s33, %s34
    %p38 = pneg %p32
    %p39 = scmp.eq.s32.totalorder %s11, 3
    %p40 = por %p38, %p39
    %p41 = scmp.ne.s32.totalorder %s33, %s36
    %p42 = scmp.eq.s32.totalorder %s11, 0
    %p43 = por %p41, %p42
    %p44 = scmp.ne.s32.totalorder %s33, %s36
    %p45 = scmp.eq.s32.totalorder %s16, 3
    %p46 = por %p44, %p45
    %p47 = scmp.ne.s32.totalorder %s36, %s37
    %p48 = scmp.eq.s32.totalorder %s16, 0
    %p49 = por %p47, %p48
    %p50 = scmp.ne.s32.totalorder %s36, %s37
    %p51 = scmp.eq.s32.totalorder %s17, 3
    %p52 = por %p50, %p51
    %p54 = scmp.ne.s32.totalorder %s37, %s53
    %p55 = scmp.eq.s32.totalorder %s17, 0
    %p56 = por %p54, %p55
    %s58 = sadd.s32 %s57, 1
    %p61 = scmp.eq.s32.totalorder %s11, 3
    %p62 = scmp.ne.s32.totalorder %s57, %s59
    %p63 = scmp.eq.s32.totalorder %s11, 0
    %p64 = por %p62, %p63
    %p65 = scmp.ne.s32.totalorder %s57, %s59
    %p66 = scmp.eq.s32.totalorder %s16, 3
    %p67 = por %p65, %p66
    %p68 = scmp.ne.s32.totalorder %s59, %s60
    %p69 = scmp.eq.s32.totalorder %s16, 0
    %p70 = por %p68, %p69
    %p71 = scmp.ne.s32.totalorder %s59, %s60
    %p72 = scmp.eq.s32.totalorder %s17, 3
    %p73 = por %p71, %p72
    %p75 = scmp.ne.s32.totalorder %s60, %s74
    %p76 = scmp.eq.s32.totalorder %s17, 0
    %p77 = por %p75, %p76
    %s79 = sadd.s32 %s78, 1
    %p82 = scmp.eq.s32.totalorder %s11, 3
    %p83 = scmp.ne.s32.totalorder %s78, %s80
    %p84 = scmp.eq.s32.totalorder %s11, 0
    %p85 = por %p83, %p84
    %p86 = scmp.ne.s32.totalorder %s78, %s80
    %p87 = scmp.eq.s32.totalorder %s16, 3
    %p88 = por %p86, %p87
    %p89 = scmp.ne.s32.totalorder %s80, %s81
    %p90 = scmp.eq.s32.totalorder %s16, 0
    %p91 = por %p89, %p90
    %p92 = scmp.ne.s32.totalorder %s80, %s81
    %p93 = scmp.eq.s32.totalorder %s17, 3
    %p94 = por %p92, %p93
    %p96 = scmp.ne.s32.totalorder %s81, %s95
    %p97 = scmp.eq.s32.totalorder %s17, 0
    %p98 = por %p96, %p97
    %s99 = ssub.s32 %s18, %s30
    %p100 = scmp.eq.s32.totalorder %s99, 0
    %s102 = sadd.s32 %s101, 1
    %s103 = scalar_select %p100, %s101, %s102
    %p106 = pneg %p100
    %p107 = scmp.eq.s32.totalorder %s11, 3
    %p108 = por %p106, %p107
    %p109 = scmp.ne.s32.totalorder %s101, %s104
    %p110 = scmp.eq.s32.totalorder %s11, 0
    %p111 = por %p109, %p110
    %p112 = scmp.ne.s32.totalorder %s101, %s104
    %p113 = scmp.eq.s32.totalorder %s16, 3
    %p114 = por %p112, %p113
    %p115 = scmp.ne.s32.totalorder %s104, %s105
    %p116 = scmp.eq.s32.totalorder %s16, 0
    %p117 = por %p115, %p116
    %p118 = scmp.ne.s32.totalorder %s104, %s105
    %p119 = scmp.eq.s32.totalorder %s17, 3
    %p120 = por %p118, %p119
    %p122 = scmp.ne.s32.totalorder %s105, %s121
    %p123 = scmp.eq.s32.totalorder %s17, 0
    %p124 = por %p122, %p123
    %s125 = ssub.s32 %s18, %s30
    %p126 = scmp.eq.s32.totalorder %s125, 0
    %s128 = sadd.s32 %s127, 1
    %s129 = scalar_select %p126, %s127, %s128
    %p132 = pneg %p126
    %p133 = scmp.eq.s32.totalorder %s11, 3
    %p134 = por %p132, %p133
    %p135 = scmp.ne.s32.totalorder %s127, %s130
    %p136 = scmp.eq.s32.totalorder %s11, 0
    %p137 = por %p135, %p136
    %p138 = scmp.ne.s32.totalorder %s127, %s130
    %p139 = scmp.eq.s32.totalorder %s16, 3
    %p140 = por %p138, %p139
    %p141 = scmp.ne.s32.totalorder %s130, %s131
    %p142 = scmp.eq.s32.totalorder %s16, 0
    %p143 = por %p141, %p142
    %p144 = scmp.ne.s32.totalorder %s130, %s131
    %p145 = scmp.eq.s32.totalorder %s17, 3
    %p146 = por %p144, %p145
    %p148 = scmp.ne.s32.totalorder %s131, %s147
    %p149 = scmp.eq.s32.totalorder %s17, 0
    %p150 = por %p148, %p149
    %s151 = ssub.s32 %s18, %s30
    %s152 = ssub.s32 %s19, %s26
    %s153 = sor.u32 %s151, %s152
    %p154 = scmp.eq.s32.totalorder %s153, 0
    %s156 = sadd.s32 %s155, 1
    %s157 = scalar_select %p154, %s155, %s156
    %p160 = pneg %p154
    %p161 = scmp.eq.s32.totalorder %s11, 3
    %p162 = por %p160, %p161
    %p163 = scmp.ne.s32.totalorder %s155, %s158
    %p164 = scmp.eq.s32.totalorder %s11, 0
    %p165 = por %p163, %p164
    %p166 = scmp.ne.s32.totalorder %s155, %s158
    %p167 = scmp.eq.s32.totalorder %s16, 3
    %p168 = por %p166, %p167
    %p169 = scmp.ne.s32.totalorder %s158, %s159
    %p170 = scmp.eq.s32.totalorder %s16, 0
    %p171 = por %p169, %p170
    %p172 = scmp.ne.s32.totalorder %s158, %s159
    %p173 = scmp.eq.s32.totalorder %s17, 3
    %p174 = por %p172, %p173
    %p176 = scmp.ne.s32.totalorder %s159, %s175
    %p177 = scmp.eq.s32.totalorder %s17, 0
    %p178 = por %p176, %p177
    %p179 = scmp.le.s32.totalorder 1, %s11
    %p180 = scmp.lt.s32.totalorder %s11, 5
    %p181 = pnand %p179, %p180
    %p182 = pneg %p181
    // Predicated region
    $region9: #{backpack_forward.22} parent=5 // pred_check
      _
    $region10: #{backpack_forward.22} parent=5 // pred_check_branch
      %184 = sbr.rel (%p181) target = $region12
    $region11: #{backpack_forward.22} parent=5 // pred_region
      %s185 = ssub.s32 %s11, 1
      // Predicated region
      $region13: #{backpack_forward.22} parent=11 // pred_check
        %p186 = pneg %p49
      $region14: #{backpack_forward.22} parent=11 // pred_check_branch
        %188 = sbr.rel (%p186) target = $region16
      $region15: #{backpack_forward.22} parent=11 // pred_region
        %s189 = smul.u32 2, %s21
        %p190 = scmp.lt.s32.totalorder %s189, 1
        %s191 = scalar_select %p190, %s189, 1
        %s192 = smul.addr %s191, 8
        %s193 = scalar_lea.vmem %s0, %s192
        %s194 = smul.u32 2, %s21
      $region16: #{backpack_forward.22} parent=11 // pred_fallthru
        _
      // Predicated region
      $region17: #{backpack_forward.22} parent=11 // pred_check
        %p195 = pneg %p70
      $region18: #{backpack_forward.22} parent=11 // pred_check_branch
        %197 = sbr.rel (%p195) target = $region20
      $region19: #{backpack_forward.22} parent=11 // pred_region
        _
      $region20: #{backpack_forward.22} parent=11 // pred_fallthru
        _
      // Predicated region
      $region21: #{backpack_forward.22} parent=11 // pred_check
        %p198 = pneg %p91
      $region22: #{backpack_forward.22} parent=11 // pred_check_branch
        %200 = sbr.rel (%p198) target = $region24
      $region23: #{backpack_forward.22} parent=11 // pred_region
        _
      $region24: #{backpack_forward.22} parent=11 // pred_fallthru
        _
    $region12: #{backpack_forward.22} parent=5 // pred_fallthru
      _
    %p201 = scmp.lt.s32.totalorder %s11, 4
    // Predicated region
    $region25: #{backpack_forward.22} parent=5 // pred_check
      %p202 = pneg %p201
    $region26: #{backpack_forward.22} parent=5 // pred_check_branch
      %204 = sbr.rel (%p202) target = $region28
    $region27: #{backpack_forward.22} parent=5 // pred_region
      // Predicated region
      $region29: #{backpack_forward.22} parent=27 // pred_check
        %p205 = pneg %p111
      $region30: #{backpack_forward.22} parent=27 // pred_check_branch
        %207 = sbr.rel (%p205) target = $region32
      $region31: #{backpack_forward.22} parent=27 // pred_region
        %p208 = scmp.lt.s32.totalorder %s18, 3
        %s209 = scalar_select %p208, %s18, 3
        %s210 = smul.addr %s209, 4
        %s211 = smul.addr %s210, 4
        %s212 = scalar_lea.vmem %s3, %s211
      $region32: #{backpack_forward.22} parent=27 // pred_fallthru
        _
      // Predicated region
      $region33: #{backpack_forward.22} parent=27 // pred_check
        %p213 = pneg %p137
      $region34: #{backpack_forward.22} parent=27 // pred_check_branch
        %215 = sbr.rel (%p213) target = $region36
      $region35: #{backpack_forward.22} parent=27 // pred_region
        %p216 = scmp.lt.s32.totalorder %s18, 3
        %s217 = scalar_select %p216, %s18, 3
        %s218 = scalar_lea.vmem %s4, %s217
      $region36: #{backpack_forward.22} parent=27 // pred_fallthru
        _
    $region28: #{backpack_forward.22} parent=5 // pred_fallthru
      _
    %p219 = scmp.le.s32.totalorder 1, %s11
    %p220 = scmp.lt.s32.totalorder %s11, 5
    %p221 = pnand %p219, %p220
    %p222 = pneg %p221
    // Predicated region
    $region37: #{backpack_forward.22} parent=5 // pred_check
      _
    $region38: #{backpack_forward.22} parent=5 // pred_check_branch
      %224 = sbr.rel (%p221) target = $region40
    $region39: #{backpack_forward.22} parent=5 // pred_region
      %s225 = ssub.s32 %s11, 1
      %s226 = smul.u32 2, %s21
      %p227 = scmp.lt.s32.totalorder %s226, 1
      %s228 = scalar_select %p227, %s226, 1
      %s229 = smul.addr %s228, 8
      %s230 = scalar_lea.vmem %s0, %s229
      %p231 = pneg %p49
      %p232 = pneg %p46
      %p233 = pneg %p70
      %p234 = pneg %p67
      %p235 = pneg %p91
      %p236 = pneg %p88
      %p237 = scmp.lt.s32.totalorder %s20, 3
      %s238 = scalar_select %p237, %s20, 3
      %s239 = smul.addr %s238, 4
      %s240 = smul.addr %s239, 4
      %s241 = scalar_lea.vmem %s3, %s240
      %p242 = pneg %p117
      %p243 = pneg %p114
      %p244 = scmp.lt.s32.totalorder %s20, 3
      %s245 = scalar_select %p244, %s20, 3
      %s246 = scalar_lea.vmem %s4, %s245
      %p247 = pneg %p143
      %p248 = pneg %p140
      %p249 = pneg %p171
      %p250 = pneg %p168
      %s251 = smul.u32 2, %s21
      %p252 = scmp.lt.s32.totalorder %s20, 3
      %s253 = scalar_select %p252, %s20, 3
      %p254 = scmp.lt.s32.totalorder %s251, 1
      %s255 = scalar_select %p254, %s251, 1
      %s256 = smul.addr %s253, 2
      %s257 = sadd.s32 %s255, %s256
      %s258 = smul.addr %s257, 4
      %s259 = scalar_lea.vmem %s5, %s258
      %s260 = smul.u32 2, %s21
      %p261 = scmp.lt.s32.totalorder %s260, 1
      %s262 = scalar_select %p261, %s260, 1
      %s263 = smul.addr %s262, 8
      %s264 = scalar_lea.vmem %s0, %s263
      %s265 = smul.u32 2, %s21
      %p266 = scmp.lt.s32.totalorder %s20, 3
      %s267 = scalar_select %p266, %s20, 3
      %s268 = smul.addr %s267, 4
      %s269 = smul.addr %s268, 4
      %s270 = scalar_lea.vmem %s3, %s269
      %p271 = scmp.lt.s32.totalorder %s20, 3
      %s272 = scalar_select %p271, %s20, 3
      %s273 = scalar_lea.vmem %s4, %s272
      %s274 = smul.u32 2, %s21
      %p275 = scmp.lt.s32.totalorder %s20, 3
      %s276 = scalar_select %p275, %s20, 3
      %p277 = scmp.lt.s32.totalorder %s274, 1
      %s278 = scalar_select %p277, %s274, 1
      %s279 = smul.addr %s276, 2
      %s280 = sadd.s32 %s278, %s279
      %s281 = smul.addr %s280, 4
      %s282 = scalar_lea.vmem %s5, %s281
      %s283 = smul.u32 2, %s21
      %v285 = vld [vmem:[%s264] sm:$0xff]
      %v286 = vld [vmem:[%s264 + $0x8] sm:$0xff]
      %v287 = vld [vmem:[%s1] sm:$0x1]
      %v288 = vld [vmem:[%s2] sm:$0x1]
      %vm289 = vcmask 261120
      %v290 = vsel %vm289, %v285, 0.0
      %291 = vadd.xlane.f32.xlu0 %v290
      %v292 = vpop.xlane.xlu0 %291
      %v293 = vsel %vm289, %v286, 0.0
      %294 = vadd.xlane.f32.xlu0 %v293
      %v295 = vpop.xlane.xlu0 %294
      %v296 = vrcp.pop 32.0
      %v297 = vmul.f32 %v292, %v296
      %v298 = vmul.f32 %v295, %v296
      %v299 = vsub.f32 %v285, %v297
      %v300 = vsub.f32 %v286, %v298
      %v301 = vmul.f32 %v299, %v299
      %v302 = vmul.f32 %v300, %v300
      %v303 = vsel %vm289, %v301, 0.0
      %304 = vadd.xlane.f32.xlu0 %v303
      %v305 = vpop.xlane.xlu0 %304
      %v306 = vsel %vm289, %v302, 0.0
      %307 = vadd.xlane.f32.xlu0 %v306
      %v308 = vpop.xlane.xlu0 %307
      %v309 = vmul.f32 %v305, %v296
      %v310 = vmul.f32 %v308, %v296
      %v311 = vadd.f32 %v309, 1e-05
      %v312 = vadd.f32 %v310, 1e-05
      %v313 = vrsqrt.pop %v311
      %v314 = vrsqrt.pop %v312
      %v315 = vmul.f32 %v299, %v313
      %v316 = vmul.f32 %v300, %v314
      %v318 = vlaneseq
      %v319 = vshrl.u32 %v318, 7
      %v320 = vsub.s32 0, %v319
      %v321 = vrot.slane %v287, %v320
      %v323 = vmul.f32 %v315, %v321
      %v324 = vmul.f32 %v316, %v321
      %v326 = vlaneseq
      %v327 = vshrl.u32 %v326, 7
      %v328 = vsub.s32 0, %v327
      %v329 = vrot.slane %v288, %v328
      %v331 = vadd.f32 %v323, %v329
      %v332 = vadd.f32 %v324, %v329
      %v333 = vpack.c.bf16 %v332, %v331
      %v334 = vld [vmem:[%s270] sm:$0xf]
      %v335 = vld [vmem:[%s270 + $0x4] sm:$0xf]
      %v336 = vld [vmem:[%s270 + $0x8] sm:$0xf]
      %v337 = vld [vmem:[%s270 + $0xc] sm:$0xf]
      %v338 = vld [vmem:[%s273] sm:$0x1]
      %v340 = vlaneseq
      %v341 = vshrl.u32 %v340, 7
      %v342 = vsub.s32 0, %v341
      %v343 = vrot.slane %v338, %v342
      %v349 = vunpack.c.l.b16 %v334
      %v350 = vunpack.c.l.b16 %v335
      %v351 = vunpack.c.l.b16 %v336
      %v352 = vunpack.c.l.b16 %v337
      %v353 = vpack.c.b16 %v350, %v349
      %v354 = vpack.c.b16 %v352, %v351
      %v358 = vsel %vm289, %v333, 0
      %360 = vmatprep.subr.bf16.mxu0 0
      %361 = vmatpush1.bf16.msra.mxu0 %v353
      %362 = vmatprep.subr.bf16.mxu0 0
      %363 = vmatpush1.bf16.msra.mxu0 %v354
      %364 = vmatprep.subr.bf16.mxu0 0
      %365 = vmatpush1.bf16.msra.mxu0 0
      %366 = vmatprep.subr.bf16.mxu0 0
      %367 = vmatpush1.bf16.msra.mxu0 0
      %368 = vmatprep.subr.bf16.mxu0 0
      %369 = vmatpush1.bf16.msra.mxu0 0
      %370 = vmatprep.subr.bf16.mxu0 0
      %371 = vmatpush1.bf16.msra.mxu0 0
      %372 = vmatprep.subr.bf16.mxu0 0
      %373 = vmatpush1.bf16.msra.mxu0 0
      %374 = vmatprep.subr.bf16.mxu0 0
      %375 = vmatpush1.bf16.msra.mxu0 0
      %376 = vmatprep.subr.bf16.mxu0 0
      %377 = vmatpush1.bf16.msra.mxu0 0
      %378 = vmatprep.subr.bf16.mxu0 0
      %379 = vmatpush1.bf16.msra.mxu0 0
      %380 = vmatprep.subr.bf16.mxu0 0
      %381 = vmatpush1.bf16.msra.mxu0 0
      %382 = vmatprep.subr.bf16.mxu0 0
      %383 = vmatpush1.bf16.msra.mxu0 0
      %384 = vmatprep.subr.bf16.mxu0 0
      %385 = vmatpush1.bf16.msra.mxu0 0
      %386 = vmatprep.subr.bf16.mxu0 0
      %387 = vmatpush1.bf16.msra.mxu0 0
      %388 = vmatprep.subr.bf16.mxu0 0
      %389 = vmatpush1.bf16.msra.mxu0 0
      %390 = vmatprep.subr.bf16.mxu0 0
      %391 = vmatpush1.bf16.msra.mxu0 0
      %392 = vmatprep.mubr.bf16.mxu0 0
      %393 = vmatmul.mubr.bf16.gmra.mrb[0].mxu0 %v358
      %v394 = vpop.f32.mrb[0].mxu0
      %v395 = vadd.f32 %v343, %v394
      %v396 = vpop.f32.mrb[0].mxu0
      %v397 = vpop.f32.mrb[0].mxu0
      %v398 = vadd.f32 %v343, %v397
      %v399 = vpop.f32.mrb[0].mxu0
      %400 = vdwg.mxu0
      %v401 = vpack.c.bf16 %v398, %v395
      %v403 = vunpack.c.l.b16 %v401
      %v404 = vunpack.c.h.b16 %v401
      %v405 = vpack.c.b16 %v403, %v403
      %v406 = vpack.c.b16 %v404, %v404
      %vm409 = vcmask 125952
      %410 = vst.msk [vmem:[%s282] sm:$0xf] %vm409, %v405
      %411 = vst.msk [vmem:[%s282 + $0x4] sm:$0xf] %vm409, %v406
      %s412 = smul.u32 2, %s21
      %p413 = scmp.lt.s32.totalorder %s20, 3
      %s414 = scalar_select %p413, %s20, 3
      %p415 = scmp.lt.s32.totalorder %s412, 1
      %s416 = scalar_select %p415, %s412, 1
      %s417 = smul.addr %s414, 2
      %s418 = sadd.s32 %s416, %s417
      %s419 = smul.addr %s418, 4
      %s420 = scalar_lea.vmem %s5, %s419
      // Predicated region
      $region41: #{backpack_forward.22} parent=39 // pred_check
        %p421 = pneg %p168
      $region42: #{backpack_forward.22} parent=39 // pred_check_branch
        %423 = sbr.rel (%p421) target = $region44
      $region43: #{backpack_forward.22} parent=39 // pred_region
        %s424 = smul.u32 2, %s21
      $region44: #{backpack_forward.22} parent=39 // pred_fallthru
        _
    $region40: #{backpack_forward.22} parent=5 // pred_fallthru
      _
    %p425 = scmp.le.s32.totalorder 2, %s11
    // Predicated region
    $region45: #{backpack_forward.22} parent=5 // pred_check
      %p426 = pneg %p425
    $region46: #{backpack_forward.22} parent=5 // pred_check_branch
      %428 = sbr.rel (%p426) target = $region48
    $region47: #{backpack_forward.22} parent=5 // pred_region
      %s429 = ssub.s32 %s11, 2
      // Predicated region
      $region49: #{backpack_forward.22} parent=47 // pred_check
        %p430 = pneg %p174
      $region50: #{backpack_forward.22} parent=47 // pred_check_branch
        %432 = sbr.rel (%p430) target = $region52
      $region51: #{backpack_forward.22} parent=47 // pred_region
        %s433 = smul.u32 2, %s23
        %p434 = scmp.lt.s32.totalorder %s22, 3
        %s435 = scalar_select %p434, %s22, 3
        %p436 = scmp.lt.s32.totalorder %s433, 1
        %s437 = scalar_select %p436, %s433, 1
        %s438 = smul.addr %s435, 2
        %s439 = sadd.s32 %s437, %s438
        %s440 = smul.addr %s439, 4
        %s441 = scalar_lea.vmem %s5, %s440
      $region52: #{backpack_forward.22} parent=47 // pred_fallthru
        _
    $region48: #{backpack_forward.22} parent=5 // pred_fallthru
      _
  $region6: #{backpack_forward.22} parent=0 // loop_footer
    %s15 = sadd.s32 1, %s11
  $region7: #{backpack_forward.22} parent=0 // loop_footer_branch
    %10 = sbr.rel target = $region3
  $region8: #{backpack_forward.22} parent=0 // loop_exit
    _

// kernel: backpack_forward.17
$region0: #{backpack_forward.17}
  #allocation0 [shape = 'u32[]', space=smem, size = 0x4, offset = 0x4, fixed_abs, tag = 'smem constant byte address 0x4 - core index']
  #allocation1 [shape = 'u32[144,128]{1,0:T(1,128)}', space=vmem, size = 0x12000, scoped, tag = 'internal scratch']
  #allocation2 [shape = 'bf16[16,32]{1,0:T(16,128)(2,1)}', space=vmem, size = 0x1000, scoped, tag = 'scratch operand']
  #allocation3 [shape = 'f32[16,32]{1,0:T(8,128)}', space=vmem, size = 0x2000, scoped, tag = 'scratch operand']
  %s0 = inlined_call_operand.vmem [shape: f32[16,32], index: 0, kind: input, shape index: {}]
  %s1 = inlined_call_operand.vmem [shape: f32[1,32], index: 1, kind: input, shape index: {}]
  %s2 = inlined_call_operand.vmem [shape: f32[1,32], index: 2, kind: input, shape index: {}]
  %s3 = inlined_call_operand.vmem [shape: bf16[32,128], index: 3, kind: input, shape index: {}]
  %s4 = inlined_call_operand.vmem [shape: f32[1,128], index: 4, kind: input, shape index: {}]
  %s5 = inlined_call_operand.vmem [shape: bf16[128,32], index: 5, kind: input, shape index: {}]
  %s6 = inlined_call_operand.vmem [shape: f32[1,32], index: 6, kind: input, shape index: {}]
  %s7 = inlined_call_operand.vmem [shape: f32[16,32], index: 7, kind: output, shape index: {}]
  %s8 = sld [smem:[#allocation0]]
  $region46: #{backpack_forward.17} parent=0
    _
  %s10 = ssub.s32 1, %s8
  %s11 = scalar_select 0, %s10, %s8
  // Predicated region
  $region2: #{backpack_forward.17} parent=0 // pred_check
    _
  $region3: #{backpack_forward.17} parent=0 // pred_check_branch
    %13 = sbr.rel (0) target = $region5
  $region4: #{backpack_forward.17} parent=0 // pred_region
    _
  $region5: #{backpack_forward.17} parent=0 // pred_fallthru
    _
  // Predicated region
  $region6: #{backpack_forward.17} parent=0 // pred_check
    _
  $region7: #{backpack_forward.17} parent=0 // pred_check_branch
    %15 = sbr.rel (0) target = $region9
  $region8: #{backpack_forward.17} parent=0 // pred_region
    _
  $region9: #{backpack_forward.17} parent=0 // pred_fallthru
    _
  // Predicated region
  $region10: #{backpack_forward.17} parent=0 // pred_check
    _
  $region11: #{backpack_forward.17} parent=0 // pred_check_branch
    %17 = sbr.rel (0) target = $region13
  $region12: #{backpack_forward.17} parent=0 // pred_region
    _
  $region13: #{backpack_forward.17} parent=0 // pred_fallthru
    _
  // Predicated region
  $region14: #{backpack_forward.17} parent=0 // pred_check
    _
  $region15: #{backpack_forward.17} parent=0 // pred_check_branch
    %19 = sbr.rel (0) target = $region17
  $region16: #{backpack_forward.17} parent=0 // pred_region
    _
  $region17: #{backpack_forward.17} parent=0 // pred_fallthru
    _
  // Predicated region
  $region18: #{backpack_forward.17} parent=0 // pred_check
    _
  $region19: #{backpack_forward.17} parent=0 // pred_check_branch
    %21 = sbr.rel (0) target = $region21
  $region20: #{backpack_forward.17} parent=0 // pred_region
    _
  $region21: #{backpack_forward.17} parent=0 // pred_fallthru
    _
  // Predicated region
  $region22: #{backpack_forward.17} parent=0 // pred_check
    _
  $region23: #{backpack_forward.17} parent=0 // pred_check_branch
    %23 = sbr.rel (0) target = $region25
  $region24: #{backpack_forward.17} parent=0 // pred_region
    _
  $region25: #{backpack_forward.17} parent=0 // pred_fallthru
    _
  // Predicated region
  $region26: #{backpack_forward.17} parent=0 // pred_check
    _
  $region27: #{backpack_forward.17} parent=0 // pred_check_branch
    %25 = sbr.rel (0) target = $region29
  $region28: #{backpack_forward.17} parent=0 // pred_region
    _
  $region29: #{backpack_forward.17} parent=0 // pred_fallthru
    _
  %p27 = scmp.eq.s32.totalorder 0, 0
  // Predicated region
  $region30: #{backpack_forward.17} parent=0 // pred_check
    %p28 = pneg %p27
  $region31: #{backpack_forward.17} parent=0 // pred_check_branch
    %30 = sbr.rel (%p28) target = $region33
  $region32: #{backpack_forward.17} parent=0 // pred_region
    %v31 = vld [vmem:[%s0] sm:$0xff]
    %v32 = vld [vmem:[%s0 + $0x8] sm:$0xff]
    %v33 = vld [vmem:[%s1] sm:$0x1]
    %v34 = vld [vmem:[%s2] sm:$0x1]
    %vm35 = vcmask 261120
    %v36 = vsel %vm35, %v31, 0.0
    %37 = vadd.xlane.f32.xlu0 %v36
    %v38 = vpop.xlane.xlu0 %37
    %v39 = vsel %vm35, %v32, 0.0
    %40 = vadd.xlane.f32.xlu0 %v39
    %v41 = vpop.xlane.xlu0 %40
    %v42 = vrcp.pop 32.0
    %v43 = vmul.f32 %v38, %v42
    %v44 = vmul.f32 %v41, %v42
    %v45 = vsub.f32 %v31, %v43
    %v46 = vsub.f32 %v32, %v44
    %v47 = vmul.f32 %v45, %v45
    %v48 = vmul.f32 %v46, %v46
    %v49 = vsel %vm35, %v47, 0.0
    %50 = vadd.xlane.f32.xlu0 %v49
    %v51 = vpop.xlane.xlu0 %50
    %v52 = vsel %vm35, %v48, 0.0
    %53 = vadd.xlane.f32.xlu0 %v52
    %v54 = vpop.xlane.xlu0 %53
    %v55 = vmul.f32 %v51, %v42
    %v56 = vmul.f32 %v54, %v42
    %v57 = vadd.f32 %v55, 1e-05
    %v58 = vadd.f32 %v56, 1e-05
    %v59 = vrsqrt.pop %v57
    %v60 = vrsqrt.pop %v58
    %v61 = vmul.f32 %v45, %v59
    %v62 = vmul.f32 %v46, %v60
    %v64 = vlaneseq
    %v65 = vshrl.u32 %v64, 7
    %v66 = vsub.s32 0, %v65
    %v67 = vrot.slane %v33, %v66
    %v69 = vmul.f32 %v61, %v67
    %v70 = vmul.f32 %v62, %v67
    %v72 = vlaneseq
    %v73 = vshrl.u32 %v72, 7
    %v74 = vsub.s32 0, %v73
    %v75 = vrot.slane %v34, %v74
    %v77 = vadd.f32 %v69, %v75
    %v78 = vadd.f32 %v70, %v75
    %v79 = vpack.c.bf16 %v78, %v77
    %80 = vst.msk [vmem:[#allocation2] sm:$0xff] %vm35, %v79
    %81 = vst.msk [vmem:[#allocation3] sm:$0xff] %vm35, 0.0
    %82 = vst.msk [vmem:[#allocation3 + $0x8] sm:$0xff] %vm35, 0.0
  $region33: #{backpack_forward.17} parent=0 // pred_fallthru
    _
  %v83 = vld [vmem:[#allocation2] sm:$0xff]
  %v84 = vld [vmem:[%s3] sm:$0xf]
  %v85 = vld [vmem:[%s3 + $0x4] sm:$0xf]
  %v86 = vld [vmem:[%s3 + $0x8] sm:$0xf]
  %v87 = vld [vmem:[%s3 + $0xc] sm:$0xf]
  %v88 = vld [vmem:[%s4] sm:$0x1]
  %v90 = vlaneseq
  %v91 = vshrl.u32 %v90, 7
  %v92 = vsub.s32 0, %v91
  %v93 = vrot.slane %v88, %v92
  %v99 = vunpack.c.l.b16 %v84
  %v100 = vunpack.c.l.b16 %v85
  %v101 = vunpack.c.l.b16 %v86
  %v102 = vunpack.c.l.b16 %v87
  %v103 = vpack.c.b16 %v100, %v99
  %v104 = vpack.c.b16 %v102, %v101
  %vm107 = vcmask 261120
  %v109 = vsel %vm107, %v83, 0
  %111 = vmatprep.subr.bf16.mxu0 0
  %112 = vmatpush1.bf16.msra.mxu0 %v103
  %113 = vmatprep.subr.bf16.mxu0 0
  %114 = vmatpush1.bf16.msra.mxu0 %v104
  %115 = vmatprep.subr.bf16.mxu0 0
  %116 = vmatpush1.bf16.msra.mxu0 0
  %117 = vmatprep.subr.bf16.mxu0 0
  %118 = vmatpush1.bf16.msra.mxu0 0
  %119 = vmatprep.subr.bf16.mxu0 0
  %120 = vmatpush1.bf16.msra.mxu0 0
  %121 = vmatprep.subr.bf16.mxu0 0
  %122 = vmatpush1.bf16.msra.mxu0 0
  %123 = vmatprep.subr.bf16.mxu0 0
  %124 = vmatpush1.bf16.msra.mxu0 0
  %125 = vmatprep.subr.bf16.mxu0 0
  %126 = vmatpush1.bf16.msra.mxu0 0
  %127 = vmatprep.subr.bf16.mxu0 0
  %128 = vmatpush1.bf16.msra.mxu0 0
  %129 = vmatprep.subr.bf16.mxu0 0
  %130 = vmatpush1.bf16.msra.mxu0 0
  %131 = vmatprep.subr.bf16.mxu0 0
  %132 = vmatpush1.bf16.msra.mxu0 0
  %133 = vmatprep.subr.bf16.mxu0 0
  %134 = vmatpush1.bf16.msra.mxu0 0
  %135 = vmatprep.subr.bf16.mxu0 0
  %136 = vmatpush1.bf16.msra.mxu0 0
  %137 = vmatprep.subr.bf16.mxu0 0
  %138 = vmatpush1.bf16.msra.mxu0 0
  %139 = vmatprep.subr.bf16.mxu0 0
  %140 = vmatpush1.bf16.msra.mxu0 0
  %141 = vmatprep.subr.bf16.mxu0 0
  %142 = vmatpush1.bf16.msra.mxu0 0
  %143 = vmatprep.mubr.bf16.mxu0 0
  %144 = vmatmul.mubr.bf16.gmra.mrb[0].mxu0 %v109
  %v145 = vpop.f32.mrb[0].mxu0
  %v146 = vadd.f32 %v93, %v145
  %v147 = vpop.f32.mrb[0].mxu0
  %v148 = vpop.f32.mrb[0].mxu0
  %v149 = vadd.f32 %v93, %v148
  %v150 = vpop.f32.mrb[0].mxu0
  %151 = vdwg.mxu0
  %v152 = vmul.f32 %v146, 0.5
  %v153 = vmul.f32 %v149, 0.5
  %v154 = vmul.f32 %v146, 0.044715
  %v155 = vmul.f32 %v149, 0.044715
  %v156 = vmul.f32 %v154, %v146
  %v157 = vmul.f32 %v155, %v149
  %v158 = vmul.f32 %v156, %v146
  %v159 = vmul.f32 %v157, %v149
  %v160 = vadd.f32 %v146, %v158
  %v161 = vadd.f32 %v149, %v159
  %v162 = vmul.f32 %v160, 0.7978846
  %v163 = vmul.f32 %v161, 0.7978846
  %v164 = vtanh.pop %v162
  %v165 = vtanh.pop %v163
  %v166 = vadd.f32 %v164, 1.0
  %v167 = vadd.f32 %v165, 1.0
  %v168 = vmul.f32 %v152, %v166
  %v169 = vmul.f32 %v153, %v167
  %v170 = vpack.c.bf16 %v169, %v168
  %v171 = vld [vmem:[#allocation3] sm:$0xff]
  %v172 = vld [vmem:[#allocation3 + $0x8] sm:$0xff]
  %v173 = vld [vmem:[%s5] sm:$0xf]
  %v174 = vld [vmem:[%s5 + $0x4] sm:$0xf]
  %v175 = vld [vmem:[%s5 + $0x8] sm:$0xf]
  %v176 = vld [vmem:[%s5 + $0xc] sm:$0xf]
  %v177 = vld [vmem:[%s5 + $0x10] sm:$0xf]
  %v178 = vld [vmem:[%s5 + $0x14] sm:$0xf]
  %v179 = vld [vmem:[%s5 + $0x18] sm:$0xf]
  %v180 = vld [vmem:[%s5 + $0x1c] sm:$0xf]
  %v181 = vld [vmem:[%s5 + $0x20] sm:$0xf]
  %v182 = vld [vmem:[%s5 + $0x24] sm:$0xf]
  %v183 = vld [vmem:[%s5 + $0x28] sm:$0xf]
  %v184 = vld [vmem:[%s5 + $0x2c] sm:$0xf]
  %v185 = vld [vmem:[%s5 + $0x30] sm:$0xf]
  %v186 = vld [vmem:[%s5 + $0x34] sm:$0xf]
  %v187 = vld [vmem:[%s5 + $0x38] sm:$0xf]
  %v188 = vld [vmem:[%s5 + $0x3c] sm:$0xf]
  %v205 = vunpack.c.l.b16 %v173
  %v206 = vunpack.c.l.b16 %v174
  %v207 = vunpack.c.l.b16 %v175
  %v208 = vunpack.c.l.b16 %v176
  %v209 = vunpack.c.l.b16 %v177
  %v210 = vunpack.c.l.b16 %v178
  %v211 = vunpack.c.l.b16 %v179
  %v212 = vunpack.c.l.b16 %v180
  %v213 = vunpack.c.l.b16 %v181
  %v214 = vunpack.c.l.b16 %v182
  %v215 = vunpack.c.l.b16 %v183
  %v216 = vunpack.c.l.b16 %v184
  %v217 = vunpack.c.l.b16 %v185
  %v218 = vunpack.c.l.b16 %v186
  %v219 = vunpack.c.l.b16 %v187
  %v220 = vunpack.c.l.b16 %v188
  %v221 = vpack.c.b16 %v206, %v205
  %v222 = vpack.c.b16 %v208, %v207
  %v223 = vpack.c.b16 %v210, %v209
  %v224 = vpack.c.b16 %v212, %v211
  %v225 = vpack.c.b16 %v214, %v213
  %v226 = vpack.c.b16 %v216, %v215
  %v227 = vpack.c.b16 %v218, %v217
  %v228 = vpack.c.b16 %v220, %v219
  %237 = vmatprep.subr.bf16.mxu0 0
  %238 = vmatpush1.bf16.msra.mxu0 %v221
  %239 = vmatprep.subr.bf16.mxu0 0
  %240 = vmatpush1.bf16.msra.mxu0 %v222
  %241 = vmatprep.subr.bf16.mxu0 0
  %242 = vmatpush1.bf16.msra.mxu0 %v223
  %243 = vmatprep.subr.bf16.mxu0 0
  %244 = vmatpush1.bf16.msra.mxu0 %v224
  %245 = vmatprep.subr.bf16.mxu0 0
  %246 = vmatpush1.bf16.msra.mxu0 %v225
  %247 = vmatprep.subr.bf16.mxu0 0
  %248 = vmatpush1.bf16.msra.mxu0 %v226
  %249 = vmatprep.subr.bf16.mxu0 0
  %250 = vmatpush1.bf16.msra.mxu0 %v227
  %251 = vmatprep.subr.bf16.mxu0 0
  %252 = vmatpush1.bf16.msra.mxu0 %v228
  %253 = vmatprep.subr.bf16.mxu0 0
  %254 = vmatpush1.bf16.msra.mxu0 0
  %255 = vmatprep.subr.bf16.mxu0 0
  %256 = vmatpush1.bf16.msra.mxu0 0
  %257 = vmatprep.subr.bf16.mxu0 0
  %258 = vmatpush1.bf16.msra.mxu0 0
  %259 = vmatprep.subr.bf16.mxu0 0
  %260 = vmatpush1.bf16.msra.mxu0 0
  %261 = vmatprep.subr.bf16.mxu0 0
  %262 = vmatpush1.bf16.msra.mxu0 0
  %263 = vmatprep.subr.bf16.mxu0 0
  %264 = vmatpush1.bf16.msra.mxu0 0
  %265 = vmatprep.subr.bf16.mxu0 0
  %266 = vmatpush1.bf16.msra.mxu0 0
  %267 = vmatprep.subr.bf16.mxu0 0
  %268 = vmatpush1.bf16.msra.mxu0 0
  %269 = vmatprep.mubr.bf16.mxu0 0
  %270 = vmatmul.mubr.bf16.gmra.mrb[0].mxu0 %v170
  %v271 = vpop.f32.mrb[0].mxu0
  %v272 = vadd.f32 0.0, %v271
  %v273 = vpop.f32.mrb[0].mxu0
  %v274 = vpop.f32.mrb[0].mxu0
  %v275 = vadd.f32 0.0, %v274
  %v276 = vpop.f32.mrb[0].mxu0
  %277 = vdwg.mxu0
  %v278 = vadd.f32 %v171, %v272
  %v279 = vadd.f32 %v172, %v275
  %280 = vst.msk [vmem:[#allocation3] sm:$0xff] %vm107, %v278
  %281 = vst.msk [vmem:[#allocation3 + $0x8] sm:$0xff] %vm107, %v279
  // Predicated region
  $region34: #{backpack_forward.17} parent=0 // pred_check
    %p282 = pneg %p27
  $region35: #{backpack_forward.17} parent=0 // pred_check_branch
    %284 = sbr.rel (%p282) target = $region37
  $region36: #{backpack_forward.17} parent=0 // pred_region
    %v285 = vld [vmem:[#allocation3] sm:$0xff]
    %v286 = vld [vmem:[#allocation3 + $0x8] sm:$0xff]
    %v287 = vld [vmem:[%s6] sm:$0x1]
    %v289 = vlaneseq
    %v290 = vshrl.u32 %v289, 7
    %v291 = vsub.s32 0, %v290
    %v292 = vrot.slane %v287, %v291
    %v294 = vadd.f32 %v285, %v292
    %v295 = vadd.f32 %v286, %v292
    %v296 = vld [vmem:[%s0] sm:$0xff]
    %v297 = vld [vmem:[%s0 + $0x8] sm:$0xff]
    %v298 = vadd.f32 %v294, %v296
    %v299 = vadd.f32 %v295, %v297
    %300 = vst.msk [vmem:[%s7] sm:$0xff] %vm107, %v298
    %301 = vst.msk [vmem:[%s7 + $0x8] sm:$0xff] %vm107, %v299
  $region37: #{backpack_forward.17} parent=0 // pred_fallthru
    _
  // Predicated region
  $region38: #{backpack_forward.17} parent=0 // pred_check
    _
  $region39: #{backpack_forward.17} parent=0 // pred_check_branch
    %303 = sbr.rel (0) target = $region41
  $region40: #{backpack_forward.17} parent=0 // pred_region
    _
  $region41: #{backpack_forward.17} parent=0 // pred_fallthru
    _
  // Predicated region
  $region42: #{backpack_forward.17} parent=0 // pred_check
    _
  $region43: #{backpack_forward.17} parent=0 // pred_check_branch
    %305 = sbr.rel (0) target = $region45
  $region44: #{backpack_forward.17} parent=0 // pred_region
    _
  $region45: #{backpack_forward.17} parent=0 // pred_fallthru
    _

// kernel: backpack_forward.23
$region0: #{backpack_forward.23}
  #allocation0 [shape = 'u32[]', space=smem, size = 0x4, offset = 0x4, fixed_abs, tag = 'smem constant byte address 0x4 - core index']
  #allocation1 [shape = 'u32[144,128]{1,0:T(1,128)}', space=vmem, size = 0x12000, scoped, tag = 'internal scratch']
  #allocation2 [shape = 'bf16[16,32]{1,0:T(16,128)(2,1)}', space=vmem, size = 0x1000, scoped, tag = 'scratch operand']
  #allocation3 [shape = 'f32[16,32]{1,0:T(8,128)}', space=vmem, size = 0x2000, scoped, tag = 'scratch operand']
  #allocation4 [shape = 'f32[16,32]{1,0:T(8,128)}', space=vmem, size = 0x2000, scoped, tag = 'scratch operand']
  %s0 = inlined_call_operand.vmem [shape: f32[16,32], index: 0, kind: input, shape index: {}]
  %s1 = inlined_call_operand.vmem [shape: f32[1,32], index: 1, kind: input, shape index: {}]
  %s2 = inlined_call_operand.vmem [shape: f32[1,32], index: 2, kind: input, shape index: {}]
  %s3 = inlined_call_operand.vmem [shape: f32[1,32], index: 3, kind: input, shape index: {}]
  %s4 = inlined_call_operand.vmem [shape: f32[1,32], index: 4, kind: input, shape index: {}]
  %s5 = inlined_call_operand.vmem [shape: bf16[32,128], index: 5, kind: input, shape index: {}]
  %s6 = inlined_call_operand.vmem [shape: f32[1,128], index: 6, kind: input, shape index: {}]
  %s7 = inlined_call_operand.vmem [shape: bf16[128,32], index: 7, kind: input, shape index: {}]
  %s8 = inlined_call_operand.vmem [shape: f32[1,32], index: 8, kind: input, shape index: {}]
  %s9 = inlined_call_operand.vmem [shape: f32[1,32], index: 9, kind: input, shape index: {}]
  %s10 = inlined_call_operand.vmem [shape: f32[1,32], index: 10, kind: input, shape index: {}]
  %s11 = inlined_call_operand.vmem [shape: bf16[16,32], index: 11, kind: output, shape index: {}]
  %s12 = sld [smem:[#allocation0]]
  $region62: #{backpack_forward.23} parent=0
    _
  %s14 = ssub.s32 1, %s12
  %s15 = scalar_select 0, %s14, %s12
  // Predicated region
  $region2: #{backpack_forward.23} parent=0 // pred_check
    _
  $region3: #{backpack_forward.23} parent=0 // pred_check_branch
    %17 = sbr.rel (0) target = $region5
  $region4: #{backpack_forward.23} parent=0 // pred_region
    _
  $region5: #{backpack_forward.23} parent=0 // pred_fallthru
    _
  // Predicated region
  $region6: #{backpack_forward.23} parent=0 // pred_check
    _
  $region7: #{backpack_forward.23} parent=0 // pred_check_branch
    %19 = sbr.rel (0) target = $region9
  $region8: #{backpack_forward.23} parent=0 // pred_region
    _
  $region9: #{backpack_forward.23} parent=0 // pred_fallthru
    _
  // Predicated region
  $region10: #{backpack_forward.23} parent=0 // pred_check
    _
  $region11: #{backpack_forward.23} parent=0 // pred_check_branch
    %21 = sbr.rel (0) target = $region13
  $region12: #{backpack_forward.23} parent=0 // pred_region
    _
  $region13: #{backpack_forward.23} parent=0 // pred_fallthru
    _
  // Predicated region
  $region14: #{backpack_forward.23} parent=0 // pred_check
    _
  $region15: #{backpack_forward.23} parent=0 // pred_check_branch
    %23 = sbr.rel (0) target = $region17
  $region16: #{backpack_forward.23} parent=0 // pred_region
    _
  $region17: #{backpack_forward.23} parent=0 // pred_fallthru
    _
  // Predicated region
  $region18: #{backpack_forward.23} parent=0 // pred_check
    _
  $region19: #{backpack_forward.23} parent=0 // pred_check_branch
    %25 = sbr.rel (0) target = $region21
  $region20: #{backpack_forward.23} parent=0 // pred_region
    _
  $region21: #{backpack_forward.23} parent=0 // pred_fallthru
    _
  // Predicated region
  $region22: #{backpack_forward.23} parent=0 // pred_check
    _
  $region23: #{backpack_forward.23} parent=0 // pred_check_branch
    %27 = sbr.rel (0) target = $region25
  $region24: #{backpack_forward.23} parent=0 // pred_region
    _
  $region25: #{backpack_forward.23} parent=0 // pred_fallthru
    _
  // Predicated region
  $region26: #{backpack_forward.23} parent=0 // pred_check
    _
  $region27: #{backpack_forward.23} parent=0 // pred_check_branch
    %29 = sbr.rel (0) target = $region29
  $region28: #{backpack_forward.23} parent=0 // pred_region
    _
  $region29: #{backpack_forward.23} parent=0 // pred_fallthru
    _
  // Predicated region
  $region30: #{backpack_forward.23} parent=0 // pred_check
    _
  $region31: #{backpack_forward.23} parent=0 // pred_check_branch
    %31 = sbr.rel (0) target = $region33
  $region32: #{backpack_forward.23} parent=0 // pred_region
    _
  $region33: #{backpack_forward.23} parent=0 // pred_fallthru
    _
  // Predicated region
  $region34: #{backpack_forward.23} parent=0 // pred_check
    _
  $region35: #{backpack_forward.23} parent=0 // pred_check_branch
    %33 = sbr.rel (0) target = $region37
  $region36: #{backpack_forward.23} parent=0 // pred_region
    _
  $region37: #{backpack_forward.23} parent=0 // pred_fallthru
    _
  // Predicated region
  $region38: #{backpack_forward.23} parent=0 // pred_check
    _
  $region39: #{backpack_forward.23} parent=0 // pred_check_branch
    %35 = sbr.rel (0) target = $region41
  $region40: #{backpack_forward.23} parent=0 // pred_region
    _
  $region41: #{backpack_forward.23} parent=0 // pred_fallthru
    _
  // Predicated region
  $region42: #{backpack_forward.23} parent=0 // pred_check
    _
  $region43: #{backpack_forward.23} parent=0 // pred_check_branch
    %37 = sbr.rel (0) target = $region45
  $region44: #{backpack_forward.23} parent=0 // pred_region
    _
  $region45: #{backpack_forward.23} parent=0 // pred_fallthru
    _
  %p39 = scmp.eq.s32.totalorder 0, 0
  // Predicated region
  $region46: #{backpack_forward.23} parent=0 // pred_check
    %p40 = pneg %p39
  $region47: #{backpack_forward.23} parent=0 // pred_check_branch
    %42 = sbr.rel (%p40) target = $region49
  $region48: #{backpack_forward.23} parent=0 // pred_region
    %v43 = vld [vmem:[%s0] sm:$0xff]
    %v44 = vld [vmem:[%s0 + $0x8] sm:$0xff]
    %v45 = vld [vmem:[%s1] sm:$0x1]
    %v46 = vld [vmem:[%s2] sm:$0x1]
    %vm47 = vcmask 261120
    %v48 = vsel %vm47, %v43, 0.0
    %49 = vadd.xlane.f32.xlu0 %v48
    %v50 = vpop.xlane.xlu0 %49
    %v51 = vsel %vm47, %v44, 0.0
    %52 = vadd.xlane.f32.xlu0 %v51
    %v53 = vpop.xlane.xlu0 %52
    %v54 = vrcp.pop 32.0
    %v55 = vmul.f32 %v50, %v54
    %v56 = vmul.f32 %v53, %v54
    %v57 = vsub.f32 %v43, %v55
    %v58 = vsub.f32 %v44, %v56
    %v59 = vmul.f32 %v57, %v57
    %v60 = vmul.f32 %v58, %v58
    %v61 = vsel %vm47, %v59, 0.0
    %62 = vadd.xlane.f32.xlu0 %v61
    %v63 = vpop.xlane.xlu0 %62
    %v64 = vsel %vm47, %v60, 0.0
    %65 = vadd.xlane.f32.xlu0 %v64
    %v66 = vpop.xlane.xlu0 %65
    %v67 = vmul.f32 %v63, %v54
    %v68 = vmul.f32 %v66, %v54
    %v69 = vadd.f32 %v67, 1e-05
    %v70 = vadd.f32 %v68, 1e-05
    %v71 = vrsqrt.pop %v69
    %v72 = vrsqrt.pop %v70
    %v73 = vmul.f32 %v57, %v71
    %v74 = vmul.f32 %v58, %v72
    %v76 = vlaneseq
    %v77 = vshrl.u32 %v76, 7
    %v78 = vsub.s32 0, %v77
    %v79 = vrot.slane %v45, %v78
    %v81 = vmul.f32 %v73, %v79
    %v82 = vmul.f32 %v74, %v79
    %v84 = vlaneseq
    %v85 = vshrl.u32 %v84, 7
    %v86 = vsub.s32 0, %v85
    %v87 = vrot.slane %v46, %v86
    %v89 = vadd.f32 %v81, %v87
    %v90 = vadd.f32 %v82, %v87
    %v91 = vadd.f32 %v89, %v43
    %v92 = vadd.f32 %v90, %v44
    %93 = vst.msk [vmem:[#allocation3] sm:$0xff] %vm47, %v91
    %94 = vst.msk [vmem:[#allocation3 + $0x8] sm:$0xff] %vm47, %v92
    %v95 = vld [vmem:[%s3] sm:$0x1]
    %v96 = vld [vmem:[%s4] sm:$0x1]
    %v97 = vsel %vm47, %v91, 0.0
    %98 = vadd.xlane.f32.xlu0 %v97
    %v99 = vpop.xlane.xlu0 %98
    %v100 = vsel %vm47, %v92, 0.0
    %101 = vadd.xlane.f32.xlu0 %v100
    %v102 = vpop.xlane.xlu0 %101
    %v103 = vmul.f32 %v99, %v54
    %v104 = vmul.f32 %v102, %v54
    %v105 = vsub.f32 %v91, %v103
    %v106 = vsub.f32 %v92, %v104
    %v107 = vmul.f32 %v105, %v105
    %v108 = vmul.f32 %v106, %v106
    %v109 = vsel %vm47, %v107, 0.0
    %110 = vadd.xlane.f32.xlu0 %v109
    %v111 = vpop.xlane.xlu0 %110
    %v112 = vsel %vm47, %v108, 0.0
    %113 = vadd.xlane.f32.xlu0 %v112
    %v114 = vpop.xlane.xlu0 %113
    %v115 = vmul.f32 %v111, %v54
    %v116 = vmul.f32 %v114, %v54
    %v117 = vadd.f32 %v115, 1e-05
    %v118 = vadd.f32 %v116, 1e-05
    %v119 = vrsqrt.pop %v117
    %v120 = vrsqrt.pop %v118
    %v121 = vmul.f32 %v105, %v119
    %v122 = vmul.f32 %v106, %v120
    %v124 = vlaneseq
    %v125 = vshrl.u32 %v124, 7
    %v126 = vsub.s32 0, %v125
    %v127 = vrot.slane %v95, %v126
    %v129 = vmul.f32 %v121, %v127
    %v130 = vmul.f32 %v122, %v127
    %v132 = vlaneseq
    %v133 = vshrl.u32 %v132, 7
    %v134 = vsub.s32 0, %v133
    %v135 = vrot.slane %v96, %v134
    %v137 = vadd.f32 %v129, %v135
    %v138 = vadd.f32 %v130, %v135
    %v139 = vpack.c.bf16 %v138, %v137
    %140 = vst.msk [vmem:[#allocation2] sm:$0xff] %vm47, %v139
    %141 = vst.msk [vmem:[#allocation4] sm:$0xff] %vm47, 0.0
    %142 = vst.msk [vmem:[#allocation4 + $0x8] sm:$0xff] %vm47, 0.0
  $region49: #{backpack_forward.23} parent=0 // pred_fallthru
    _
  %v143 = vld [vmem:[#allocation2] sm:$0xff]
  %v144 = vld [vmem:[%s5] sm:$0xf]
  %v145 = vld [vmem:[%s5 + $0x4] sm:$0xf]
  %v146 = vld [vmem:[%s5 + $0x8] sm:$0xf]
  %v147 = vld [vmem:[%s5 + $0xc] sm:$0xf]
  %v148 = vld [vmem:[%s6] sm:$0x1]
  %v150 = vlaneseq
  %v151 = vshrl.u32 %v150, 7
  %v152 = vsub.s32 0, %v151
  %v153 = vrot.slane %v148, %v152
  %v159 = vunpack.c.l.b16 %v144
  %v160 = vunpack.c.l.b16 %v145
  %v161 = vunpack.c.l.b16 %v146
  %v162 = vunpack.c.l.b16 %v147
  %v163 = vpack.c.b16 %v160, %v159
  %v164 = vpack.c.b16 %v162, %v161
  %vm167 = vcmask 261120
  %v169 = vsel %vm167, %v143, 0
  %171 = vmatprep.subr.bf16.mxu0 0
  %172 = vmatpush1.bf16.msra.mxu0 %v163
  %173 = vmatprep.subr.bf16.mxu0 0
  %174 = vmatpush1.bf16.msra.mxu0 %v164
  %175 = vmatprep.subr.bf16.mxu0 0
  %176 = vmatpush1.bf16.msra.mxu0 0
  %177 = vmatprep.subr.bf16.mxu0 0
  %178 = vmatpush1.bf16.msra.mxu0 0
  %179 = vmatprep.subr.bf16.mxu0 0
  %180 = vmatpush1.bf16.msra.mxu0 0
  %181 = vmatprep.subr.bf16.mxu0 0
  %182 = vmatpush1.bf16.msra.mxu0 0
  %183 = vmatprep.subr.bf16.mxu0 0
  %184 = vmatpush1.bf16.msra.mxu0 0
  %185 = vmatprep.subr.bf16.mxu0 0
  %186 = vmatpush1.bf16.msra.mxu0 0
  %187 = vmatprep.subr.bf16.mxu0 0
  %188 = vmatpush1.bf16.msra.mxu0 0
  %189 = vmatprep.subr.bf16.mxu0 0
  %190 = vmatpush1.bf16.msra.mxu0 0
  %191 = vmatprep.subr.bf16.mxu0 0
  %192 = vmatpush1.bf16.msra.mxu0 0
  %193 = vmatprep.subr.bf16.mxu0 0
  %194 = vmatpush1.bf16.msra.mxu0 0
  %195 = vmatprep.subr.bf16.mxu0 0
  %196 = vmatpush1.bf16.msra.mxu0 0
  %197 = vmatprep.subr.bf16.mxu0 0
  %198 = vmatpush1.bf16.msra.mxu0 0
  %199 = vmatprep.subr.bf16.mxu0 0
  %200 = vmatpush1.bf16.msra.mxu0 0
  %201 = vmatprep.subr.bf16.mxu0 0
  %202 = vmatpush1.bf16.msra.mxu0 0
  %203 = vmatprep.mubr.bf16.mxu0 0
  %204 = vmatmul.mubr.bf16.gmra.mrb[0].mxu0 %v169
  %v205 = vpop.f32.mrb[0].mxu0
  %v206 = vadd.f32 %v153, %v205
  %v207 = vpop.f32.mrb[0].mxu0
  %v208 = vpop.f32.mrb[0].mxu0
  %v209 = vadd.f32 %v153, %v208
  %v210 = vpop.f32.mrb[0].mxu0
  %211 = vdwg.mxu0
  %v212 = vmul.f32 %v206, 0.5
  %v213 = vmul.f32 %v209, 0.5
  %v214 = vmul.f32 %v206, 0.044715
  %v215 = vmul.f32 %v209, 0.044715
  %v216 = vmul.f32 %v214, %v206
  %v217 = vmul.f32 %v215, %v209
  %v218 = vmul.f32 %v216, %v206
  %v219 = vmul.f32 %v217, %v209
  %v220 = vadd.f32 %v206, %v218
  %v221 = vadd.f32 %v209, %v219
  %v222 = vmul.f32 %v220, 0.7978846
  %v223 = vmul.f32 %v221, 0.7978846
  %v224 = vtanh.pop %v222
  %v225 = vtanh.pop %v223
  %v226 = vadd.f32 %v224, 1.0
  %v227 = vadd.f32 %v225, 1.0
  %v228 = vmul.f32 %v212, %v226
  %v229 = vmul.f32 %v213, %v227
  %v230 = vpack.c.bf16 %v229, %v228
  %v231 = vld [vmem:[#allocation4] sm:$0xff]
  %v232 = vld [vmem:[#allocation4 + $0x8] sm:$0xff]
  %v233 = vld [vmem:[%s7] sm:$0xf]
  %v234 = vld [vmem:[%s7 + $0x4] sm:$0xf]
  %v235 = vld [vmem:[%s7 + $0x8] sm:$0xf]
  %v236 = vld [vmem:[%s7 + $0xc] sm:$0xf]
  %v237 = vld [vmem:[%s7 + $0x10] sm:$0xf]
  %v238 = vld [vmem:[%s7 + $0x14] sm:$0xf]
  %v239 = vld [vmem:[%s7 + $0x18] sm:$0xf]
  %v240 = vld [vmem:[%s7 + $0x1c] sm:$0xf]
  %v241 = vld [vmem:[%s7 + $0x20] sm:$0xf]
  %v242 = vld [vmem:[%s7 + $0x24] sm:$0xf]
  %v243 = vld [vmem:[%s7 + $0x28] sm:$0xf]
  %v244 = vld [vmem:[%s7 + $0x2c] sm:$0xf]
  %v245 = vld [vmem:[%s7 + $0x30] sm:$0xf]
  %v246 = vld [vmem:[%s7 + $0x34] sm:$0xf]
  %v247 = vld [vmem:[%s7 + $0x38] sm:$0xf]
  %v248 = vld [vmem:[%s7 + $0x3c] sm:$0xf]
  %v265 = vunpack.c.l.b16 %v233
  %v266 = vunpack.c.l.b16 %v234
  %v267 = vunpack.c.l.b16 %v235
  %v268 = vunpack.c.l.b16 %v236
  %v269 = vunpack.c.l.b16 %v237
  %v270 = vunpack.c.l.b16 %v238
  %v271 = vunpack.c.l.b16 %v239
  %v272 = vunpack.c.l.b16 %v240
  %v273 = vunpack.c.l.b16 %v241
  %v274 = vunpack.c.l.b16 %v242
  %v275 = vunpack.c.l.b16 %v243
  %v276 = vunpack.c.l.b16 %v244
  %v277 = vunpack.c.l.b16 %v245
  %v278 = vunpack.c.l.b16 %v246
  %v279 = vunpack.c.l.b16 %v247
  %v280 = vunpack.c.l.b16 %v248
  %v281 = vpack.c.b16 %v266, %v265
  %v282 = vpack.c.b16 %v268, %v267
  %v283 = vpack.c.b16 %v270, %v269
  %v284 = vpack.c.b16 %v272, %v271
  %v285 = vpack.c.b16 %v274, %v273
  %v286 = vpack.c.b16 %v276, %v275
  %v287 = vpack.c.b16 %v278, %v277
  %v288 = vpack.c.b16 %v280, %v279
  %297 = vmatprep.subr.bf16.mxu0 0
  %298 = vmatpush1.bf16.msra.mxu0 %v281
  %299 = vmatprep.subr.bf16.mxu0 0
  %300 = vmatpush1.bf16.msra.mxu0 %v282
  %301 = vmatprep.subr.bf16.mxu0 0
  %302 = vmatpush1.bf16.msra.mxu0 %v283
  %303 = vmatprep.subr.bf16.mxu0 0
  %304 = vmatpush1.bf16.msra.mxu0 %v284
  %305 = vmatprep.subr.bf16.mxu0 0
  %306 = vmatpush1.bf16.msra.mxu0 %v285
  %307 = vmatprep.subr.bf16.mxu0 0
  %308 = vmatpush1.bf16.msra.mxu0 %v286
  %309 = vmatprep.subr.bf16.mxu0 0
  %310 = vmatpush1.bf16.msra.mxu0 %v287
  %311 = vmatprep.subr.bf16.mxu0 0
  %312 = vmatpush1.bf16.msra.mxu0 %v288
  %313 = vmatprep.subr.bf16.mxu0 0
  %314 = vmatpush1.bf16.msra.mxu0 0
  %315 = vmatprep.subr.bf16.mxu0 0
  %316 = vmatpush1.bf16.msra.mxu0 0
  %317 = vmatprep.subr.bf16.mxu0 0
  %318 = vmatpush1.bf16.msra.mxu0 0
  %319 = vmatprep.subr.bf16.mxu0 0
  %320 = vmatpush1.bf16.msra.mxu0 0
  %321 = vmatprep.subr.bf16.mxu0 0
  %322 = vmatpush1.bf16.msra.mxu0 0
  %323 = vmatprep.subr.bf16.mxu0 0
  %324 = vmatpush1.bf16.msra.mxu0 0
  %325 = vmatprep.subr.bf16.mxu0 0
  %326 = vmatpush1.bf16.msra.mxu0 0
  %327 = vmatprep.subr.bf16.mxu0 0
  %328 = vmatpush1.bf16.msra.mxu0 0
  %329 = vmatprep.mubr.bf16.mxu0 0
  %330 = vmatmul.mubr.bf16.gmra.mrb[0].mxu0 %v230
  %v331 = vpop.f32.mrb[0].mxu0
  %v332 = vadd.f32 0.0, %v331
  %v333 = vpop.f32.mrb[0].mxu0
  %v334 = vpop.f32.mrb[0].mxu0
  %v335 = vadd.f32 0.0, %v334
  %v336 = vpop.f32.mrb[0].mxu0
  %337 = vdwg.mxu0
  %v338 = vadd.f32 %v231, %v332
  %v339 = vadd.f32 %v232, %v335
  %340 = vst.msk [vmem:[#allocation4] sm:$0xff] %vm167, %v338
  %341 = vst.msk [vmem:[#allocation4 + $0x8] sm:$0xff] %vm167, %v339
  // Predicated region
  $region50: #{backpack_forward.23} parent=0 // pred_check
    %p342 = pneg %p39
  $region51: #{backpack_forward.23} parent=0 // pred_check_branch
    %344 = sbr.rel (%p342) target = $region53
  $region52: #{backpack_forward.23} parent=0 // pred_region
    %v345 = vld [vmem:[#allocation4] sm:$0xff]
    %v346 = vld [vmem:[#allocation4 + $0x8] sm:$0xff]
    %v347 = vld [vmem:[%s8] sm:$0x1]
    %v349 = vlaneseq
    %v350 = vshrl.u32 %v349, 7
    %v351 = vsub.s32 0, %v350
    %v352 = vrot.slane %v347, %v351
    %v354 = vadd.f32 %v345, %v352
    %v355 = vadd.f32 %v346, %v352
    %v356 = vld [vmem:[#allocation3] sm:$0xff]
    %v357 = vld [vmem:[#allocation3 + $0x8] sm:$0xff]
    %v358 = vadd.f32 %v354, %v356
    %v359 = vadd.f32 %v355, %v357
    %v360 = vld [vmem:[%s9] sm:$0x1]
    %v361 = vld [vmem:[%s10] sm:$0x1]
    %v362 = vsel %vm167, %v358, 0.0
    %363 = vadd.xlane.f32.xlu0 %v362
    %v364 = vpop.xlane.xlu0 %363
    %v365 = vsel %vm167, %v359, 0.0
    %366 = vadd.xlane.f32.xlu0 %v365
    %v367 = vpop.xlane.xlu0 %366
    %v368 = vrcp.pop 32.0
    %v369 = vmul.f32 %v364, %v368
    %v370 = vmul.f32 %v367, %v368
    %v371 = vsub.f32 %v358, %v369
    %v372 = vsub.f32 %v359, %v370
    %v373 = vmul.f32 %v371, %v371
    %v374 = vmul.f32 %v372, %v372
    %v375 = vsel %vm167, %v373, 0.0
    %376 = vadd.xlane.f32.xlu0 %v375
    %v377 = vpop.xlane.xlu0 %376
    %v378 = vsel %vm167, %v374, 0.0
    %379 = vadd.xlane.f32.xlu0 %v378
    %v380 = vpop.xlane.xlu0 %379
    %v381 = vmul.f32 %v377, %v368
    %v382 = vmul.f32 %v380, %v368
    %v383 = vadd.f32 %v381, 1e-05
    %v384 = vadd.f32 %v382, 1e-05
    %v385 = vrsqrt.pop %v383
    %v386 = vrsqrt.pop %v384
    %v387 = vmul.f32 %v371, %v385
    %v388 = vmul.f32 %v372, %v386
    %v390 = vlaneseq
    %v391 = vshrl.u32 %v390, 7
    %v392 = vsub.s32 0, %v391
    %v393 = vrot.slane %v360, %v392
    %v395 = vmul.f32 %v387, %v393
    %v396 = vmul.f32 %v388, %v393
    %v398 = vlaneseq
    %v399 = vshrl.u32 %v398, 7
    %v400 = vsub.s32 0, %v399
    %v401 = vrot.slane %v361, %v400
    %v403 = vadd.f32 %v395, %v401
    %v404 = vadd.f32 %v396, %v401
    %v405 = vpack.c.bf16 %v404, %v403
    %v407 = vunpack.c.l.b16 %v405
    %v408 = vunpack.c.h.b16 %v405
    %v409 = vpack.c.b16 %v407, %v407
    %v410 = vpack.c.b16 %v408, %v408
    %vm413 = vcmask 257024
    %414 = vst.msk [vmem:[%s11] sm:$0xf] %vm413, %v409
    %415 = vst.msk [vmem:[%s11 + $0x4] sm:$0xf] %vm413, %v410
  $region53: #{backpack_forward.23} parent=0 // pred_fallthru
    _
  // Predicated region
  $region54: #{backpack_forward.23} parent=0 // pred_check
    _
  $region55: #{backpack_forward.23} parent=0 // pred_check_branch
    %417 = sbr.rel (0) target = $region57
  $region56: #{backpack_forward.23} parent=0 // pred_region
    _
  $region57: #{backpack_forward.23} parent=0 // pred_fallthru
    _
  // Predicated region
  $region58: #{backpack_forward.23} parent=0 // pred_check
    _
  $region59: #{backpack_forward.23} parent=0 // pred_check_branch
    %419 = sbr.rel (0) target = $region61
  $region60: #{backpack_forward.23} parent=0 // pred_region
    _
  $region61: #{backpack_forward.23} parent=0 // pred_fallthru
    _

// kernel: backpack_forward.24
$region0: #{backpack_forward.24}
  #allocation0 [shape = 'u32[]', space=smem, size = 0x4, offset = 0x4, fixed_abs, tag = 'smem constant byte address 0x4 - core index']
  #allocation1 [shape = 'u32[144,128]{1,0:T(1,128)}', space=vmem, size = 0x12000, scoped, tag = 'internal scratch']
  %s0 = inlined_call_operand.vmem [shape: bf16[16,32], index: 0, kind: input, shape index: {}]
  %s1 = inlined_call_operand.vmem [shape: bf16[32,128], index: 1, kind: input, shape index: {}]
  %s2 = inlined_call_operand.vmem [shape: f32[1,128], index: 2, kind: input, shape index: {}]
  %s3 = inlined_call_operand.vmem [shape: bf16[16,128], index: 3, kind: output, shape index: {}]
  %s4 = sld [smem:[#allocation0]]
  $region22: #{backpack_forward.24} parent=0
    _
  %s6 = ssub.s32 1, %s4
  %s7 = scalar_select 0, %s6, %s4
  // Predicated region
  $region2: #{backpack_forward.24} parent=0 // pred_check
    _
  $region3: #{backpack_forward.24} parent=0 // pred_check_branch
    %9 = sbr.rel (0) target = $region5
  $region4: #{backpack_forward.24} parent=0 // pred_region
    _
  $region5: #{backpack_forward.24} parent=0 // pred_fallthru
    _
  // Predicated region
  $region6: #{backpack_forward.24} parent=0 // pred_check
    _
  $region7: #{backpack_forward.24} parent=0 // pred_check_branch
    %11 = sbr.rel (0) target = $region9
  $region8: #{backpack_forward.24} parent=0 // pred_region
    _
  $region9: #{backpack_forward.24} parent=0 // pred_fallthru
    _
  // Predicated region
  $region10: #{backpack_forward.24} parent=0 // pred_check
    _
  $region11: #{backpack_forward.24} parent=0 // pred_check_branch
    %13 = sbr.rel (0) target = $region13
  $region12: #{backpack_forward.24} parent=0 // pred_region
    _
  $region13: #{backpack_forward.24} parent=0 // pred_fallthru
    _
  %v15 = vld [vmem:[%s0] sm:$0xf]
  %v16 = vld [vmem:[%s0 + $0x4] sm:$0xf]
  %v17 = vld [vmem:[%s1] sm:$0xf]
  %v18 = vld [vmem:[%s1 + $0x4] sm:$0xf]
  %v19 = vld [vmem:[%s1 + $0x8] sm:$0xf]
  %v20 = vld [vmem:[%s1 + $0xc] sm:$0xf]
  %v21 = vld [vmem:[%s2] sm:$0x1]
  %v23 = vlaneseq
  %v24 = vshrl.u32 %v23, 7
  %v25 = vsub.s32 0, %v24
  %v26 = vrot.slane %v21, %v25
  %v30 = vunpack.c.l.b16 %v15
  %v31 = vunpack.c.l.b16 %v16
  %v32 = vpack.c.b16 %v31, %v30
  %v37 = vunpack.c.l.b16 %v17
  %v38 = vunpack.c.l.b16 %v18
  %v39 = vunpack.c.l.b16 %v19
  %v40 = vunpack.c.l.b16 %v20
  %v41 = vpack.c.b16 %v38, %v37
  %v42 = vpack.c.b16 %v40, %v39
  %vm45 = vcmask 261120
  %v47 = vsel %vm45, %v32, 0
  %49 = vmatprep.subr.bf16.mxu0 0
  %50 = vmatpush1.bf16.msra.mxu0 %v41
  %51 = vmatprep.subr.bf16.mxu0 0
  %52 = vmatpush1.bf16.msra.mxu0 %v42
  %53 = vmatprep.subr.bf16.mxu0 0
  %54 = vmatpush1.bf16.msra.mxu0 0
  %55 = vmatprep.subr.bf16.mxu0 0
  %56 = vmatpush1.bf16.msra.mxu0 0
  %57 = vmatprep.subr.bf16.mxu0 0
  %58 = vmatpush1.bf16.msra.mxu0 0
  %59 = vmatprep.subr.bf16.mxu0 0
  %60 = vmatpush1.bf16.msra.mxu0 0
  %61 = vmatprep.subr.bf16.mxu0 0
  %62 = vmatpush1.bf16.msra.mxu0 0
  %63 = vmatprep.subr.bf16.mxu0 0
  %64 = vmatpush1.bf16.msra.mxu0 0
  %65 = vmatprep.subr.bf16.mxu0 0
  %66 = vmatpush1.bf16.msra.mxu0 0
  %67 = vmatprep.subr.bf16.mxu0 0
  %68 = vmatpush1.bf16.msra.mxu0 0
  %69 = vmatprep.subr.bf16.mxu0 0
  %70 = vmatpush1.bf16.msra.mxu0 0
  %71 = vmatprep.subr.bf16.mxu0 0
  %72 = vmatpush1.bf16.msra.mxu0 0
  %73 = vmatprep.subr.bf16.mxu0 0
  %74 = vmatpush1.bf16.msra.mxu0 0
  %75 = vmatprep.subr.bf16.mxu0 0
  %76 = vmatpush1.bf16.msra.mxu0 0
  %77 = vmatprep.subr.bf16.mxu0 0
  %78 = vmatpush1.bf16.msra.mxu0 0
  %79 = vmatprep.subr.bf16.mxu0 0
  %80 = vmatpush1.bf16.msra.mxu0 0
  %81 = vmatprep.mubr.bf16.mxu0 0
  %82 = vmatmul.mubr.bf16.gmra.mrb[0].mxu0 %v47
  %v83 = vpop.f32.mrb[0].mxu0
  %v84 = vadd.f32 %v26, %v83
  %v85 = vpop.f32.mrb[0].mxu0
  %v86 = vpop.f32.mrb[0].mxu0
  %v87 = vadd.f32 %v26, %v86
  %v88 = vpop.f32.mrb[0].mxu0
  %89 = vdwg.mxu0
  %v90 = vmul.f32 %v84, 0.5
  %v91 = vmul.f32 %v87, 0.5
  %v92 = vmul.f32 %v84, 0.044715
  %v93 = vmul.f32 %v87, 0.044715
  %v94 = vmul.f32 %v92, %v84
  %v95 = vmul.f32 %v93, %v87
  %v96 = vmul.f32 %v94, %v84
  %v97 = vmul.f32 %v95, %v87
  %v98 = vadd.f32 %v84, %v96
  %v99 = vadd.f32 %v87, %v97
  %v100 = vmul.f32 %v98, 0.7978846
  %v101 = vmul.f32 %v99, 0.7978846
  %v102 = vtanh.pop %v100
  %v103 = vtanh.pop %v101
  %v104 = vadd.f32 %v102, 1.0
  %v105 = vadd.f32 %v103, 1.0
  %v106 = vmul.f32 %v90, %v104
  %v107 = vmul.f32 %v91, %v105
  %v108 = vpack.c.bf16 %v107, %v106
  %v110 = vunpack.c.l.b16 %v108
  %v111 = vunpack.c.h.b16 %v108
  %v112 = vpack.c.b16 %v110, %v110
  %v113 = vpack.c.b16 %v111, %v111
  %116 = vst [vmem:[%s3] sm:$0xf] %v112
  %117 = vst [vmem:[%s3 + $0x4] sm:$0xf] %v113
  // Predicated region
  $region14: #{backpack_forward.24} parent=0 // pred_check
    _
  $region15: #{backpack_forward.24} parent=0 // pred_check_branch
    %119 = sbr.rel (0) target = $region17
  $region16: #{backpack_forward.24} parent=0 // pred_region
    _
  $region17: #{backpack_forward.24} parent=0 // pred_fallthru
    _
  // Predicated region
  $region18: #{backpack_forward.24} parent=0 // pred_check
    _
  $region19: #{backpack_forward.24} parent=0 // pred_check_branch
    %121 = sbr.rel (0) target = $region21
  $region20: #{backpack_forward.24} parent=0 // pred_region
    _
  $region21: #{backpack_forward.24} parent=0 // pred_fallthru
    _

// kernel: backpack_forward.25
$region0: #{backpack_forward.25}
  #allocation0 [shape = 'u32[]', space=smem, size = 0x4, offset = 0x4, fixed_abs, tag = 'smem constant byte address 0x4 - core index']
  #allocation1 [shape = 'u32[144,128]{1,0:T(1,128)}', space=vmem, size = 0x12000, scoped, tag = 'internal scratch']
  %s0 = inlined_call_operand.vmem [shape: bf16[16,128], index: 0, kind: input, shape index: {}]
  %s1 = inlined_call_operand.vmem [shape: bf16[4,128,32], index: 1, kind: input, shape index: {}]
  %s2 = inlined_call_operand.vmem [shape: f32[4,1,32], index: 2, kind: input, shape index: {}]
  %s3 = inlined_call_operand.vmem [shape: bf16[4,16,32], index: 3, kind: output, shape index: {}]
  %s4 = sld [smem:[#allocation0]]
  $region45: #{backpack_forward.25} parent=0
    _
  %s6 = ssub.s32 1, %s4
  %s7 = scalar_select 0, %s6, %s4
  loop: start=0, step=1, limit=6
  $region2: #{backpack_forward.25} parent=0 // loop_pre_header
    _
  $region3: #{backpack_forward.25} parent=0 // loop_header
    %s9 = sphi 0, %s13
    %p10 = scmp.ge.s32.totalorder %s9, 6
    %s16 = sphi 0, %s28
    %s17 = sphi 0, %s24
    %s18 = sphi 0, %s16
    %s19 = sphi 0, %s17
    %s20 = sphi 0, %s18
    %s21 = sphi 0, %s19
    %s31 = sphi 0, %s33
    %s34 = sphi 0, %s31
    %s35 = sphi 0, %s34
    %s51 = sphi 0, %s35
    %s57 = sphi 0, %s59
    %s60 = sphi 0, %s57
    %s61 = sphi 0, %s60
    %s77 = sphi 0, %s61
    %s83 = sphi 0, %s85
    %s86 = sphi 0, %s83
    %s87 = sphi 0, %s86
    %s103 = sphi 0, %s87
    %s111 = sphi 0, %s113
    %s114 = sphi 0, %s111
    %s115 = sphi 0, %s114
    %s131 = sphi 0, %s115
  $region4: #{backpack_forward.25} parent=0 // loop_header_branch
    %12 = sbr.rel (%p10) target = $region8
  $region5: #{backpack_forward.25} parent=0 // loop_body
    %s14 = ssub.s32 %s9, 1
    %s15 = ssub.s32 %s9, 2
    %s22 = sadd.s32 1, %s17
    %p23 = scmp.ge.s32.totalorder %s22, 1
    %s24 = scalar_select %p23, 0, %s22
    %s25 = sadd.s32 1, %s16
    %s26 = scalar_select %p23, %s25, %s16
    %p27 = scmp.ge.s32.totalorder %s26, 4
    %s28 = scalar_select %p27, 0, %s26
    %s29 = ssub.s32 %s17, %s24
    %p30 = scmp.eq.s32.totalorder %s29, 0
    %s32 = sadd.s32 %s31, 1
    %s33 = scalar_select %p30, %s31, %s32
    %p36 = pneg %p30
    %p37 = scmp.eq.s32.totalorder %s9, 3
    %p38 = por %p36, %p37
    %p39 = scmp.ne.s32.totalorder %s31, %s34
    %p40 = scmp.eq.s32.totalorder %s9, 0
    %p41 = por %p39, %p40
    %p42 = scmp.ne.s32.totalorder %s31, %s34
    %p43 = scmp.eq.s32.totalorder %s14, 3
    %p44 = por %p42, %p43
    %p45 = scmp.ne.s32.totalorder %s34, %s35
    %p46 = scmp.eq.s32.totalorder %s14, 0
    %p47 = por %p45, %p46
    %p48 = scmp.ne.s32.totalorder %s34, %s35
    %p49 = scmp.eq.s32.totalorder %s15, 3
    %p50 = por %p48, %p49
    %p52 = scmp.ne.s32.totalorder %s35, %s51
    %p53 = scmp.eq.s32.totalorder %s15, 0
    %p54 = por %p52, %p53
    %s55 = ssub.s32 %s16, %s28
    %p56 = scmp.eq.s32.totalorder %s55, 0
    %s58 = sadd.s32 %s57, 1
    %s59 = scalar_select %p56, %s57, %s58
    %p62 = pneg %p56
    %p63 = scmp.eq.s32.totalorder %s9, 3
    %p64 = por %p62, %p63
    %p65 = scmp.ne.s32.totalorder %s57, %s60
    %p66 = scmp.eq.s32.totalorder %s9, 0
    %p67 = por %p65, %p66
    %p68 = scmp.ne.s32.totalorder %s57, %s60
    %p69 = scmp.eq.s32.totalorder %s14, 3
    %p70 = por %p68, %p69
    %p71 = scmp.ne.s32.totalorder %s60, %s61
    %p72 = scmp.eq.s32.totalorder %s14, 0
    %p73 = por %p71, %p72
    %p74 = scmp.ne.s32.totalorder %s60, %s61
    %p75 = scmp.eq.s32.totalorder %s15, 3
    %p76 = por %p74, %p75
    %p78 = scmp.ne.s32.totalorder %s61, %s77
    %p79 = scmp.eq.s32.totalorder %s15, 0
    %p80 = por %p78, %p79
    %s81 = ssub.s32 %s16, %s28
    %p82 = scmp.eq.s32.totalorder %s81, 0
    %s84 = sadd.s32 %s83, 1
    %s85 = scalar_select %p82, %s83, %s84
    %p88 = pneg %p82
    %p89 = scmp.eq.s32.totalorder %s9, 3
    %p90 = por %p88, %p89
    %p91 = scmp.ne.s32.totalorder %s83, %s86
    %p92 = scmp.eq.s32.totalorder %s9, 0
    %p93 = por %p91, %p92
    %p94 = scmp.ne.s32.totalorder %s83, %s86
    %p95 = scmp.eq.s32.totalorder %s14, 3
    %p96 = por %p94, %p95
    %p97 = scmp.ne.s32.totalorder %s86, %s87
    %p98 = scmp.eq.s32.totalorder %s14, 0
    %p99 = por %p97, %p98
    %p100 = scmp.ne.s32.totalorder %s86, %s87
    %p101 = scmp.eq.s32.totalorder %s15, 3
    %p102 = por %p100, %p101
    %p104 = scmp.ne.s32.totalorder %s87, %s103
    %p105 = scmp.eq.s32.totalorder %s15, 0
    %p106 = por %p104, %p105
    %s107 = ssub.s32 %s16, %s28
    %s108 = ssub.s32 %s17, %s24
    %s109 = sor.u32 %s107, %s108
    %p110 = scmp.eq.s32.totalorder %s109, 0
    %s112 = sadd.s32 %s111, 1
    %s113 = scalar_select %p110, %s111, %s112
    %p116 = pneg %p110
    %p117 = scmp.eq.s32.totalorder %s9, 3
    %p118 = por %p116, %p117
    %p119 = scmp.ne.s32.totalorder %s111, %s114
    %p120 = scmp.eq.s32.totalorder %s9, 0
    %p121 = por %p119, %p120
    %p122 = scmp.ne.s32.totalorder %s111, %s114
    %p123 = scmp.eq.s32.totalorder %s14, 3
    %p124 = por %p122, %p123
    %p125 = scmp.ne.s32.totalorder %s114, %s115
    %p126 = scmp.eq.s32.totalorder %s14, 0
    %p127 = por %p125, %p126
    %p128 = scmp.ne.s32.totalorder %s114, %s115
    %p129 = scmp.eq.s32.totalorder %s15, 3
    %p130 = por %p128, %p129
    %p132 = scmp.ne.s32.totalorder %s115, %s131
    %p133 = scmp.eq.s32.totalorder %s15, 0
    %p134 = por %p132, %p133
    %p135 = scmp.le.s32.totalorder 1, %s9
    %p136 = scmp.lt.s32.totalorder %s9, 5
    %p137 = pnand %p135, %p136
    %p138 = pneg %p137
    // Predicated region
    $region9: #{backpack_forward.25} parent=5 // pred_check
      _
    $region10: #{backpack_forward.25} parent=5 // pred_check_branch
      %140 = sbr.rel (%p137) target = $region12
    $region11: #{backpack_forward.25} parent=5 // pred_region
      %s141 = ssub.s32 %s9, 1
      // Predicated region
      $region13: #{backpack_forward.25} parent=11 // pred_check
        %p142 = pneg %p47
      $region14: #{backpack_forward.25} parent=11 // pred_check_branch
        %144 = sbr.rel (%p142) target = $region16
      $region15: #{backpack_forward.25} parent=11 // pred_region
        %s145 = smul.u32 2, %s19
        %p146 = scmp.lt.s32.totalorder %s145, 1
        %s147 = scalar_select %p146, %s145, 1
        %s148 = smul.addr %s147, 4
        %s149 = scalar_lea.vmem %s0, %s148
        %s150 = smul.u32 2, %s19
      $region16: #{backpack_forward.25} parent=11 // pred_fallthru
        _
    $region12: #{backpack_forward.25} parent=5 // pred_fallthru
      _
    %p151 = scmp.lt.s32.totalorder %s9, 4
    // Predicated region
    $region17: #{backpack_forward.25} parent=5 // pred_check
      %p152 = pneg %p151
    $region18: #{backpack_forward.25} parent=5 // pred_check_branch
      %154 = sbr.rel (%p152) target = $region20
    $region19: #{backpack_forward.25} parent=5 // pred_region
      // Predicated region
      $region21: #{backpack_forward.25} parent=19 // pred_check
        %p155 = pneg %p67
      $region22: #{backpack_forward.25} parent=19 // pred_check_branch
        %157 = sbr.rel (%p155) target = $region24
      $region23: #{backpack_forward.25} parent=19 // pred_region
        %p158 = scmp.lt.s32.totalorder %s16, 3
        %s159 = scalar_select %p158, %s16, 3
        %s160 = smul.addr %s159, 16
        %s161 = smul.addr %s160, 4
        %s162 = scalar_lea.vmem %s1, %s161
      $region24: #{backpack_forward.25} parent=19 // pred_fallthru
        _
      // Predicated region
      $region25: #{backpack_forward.25} parent=19 // pred_check
        %p163 = pneg %p93
      $region26: #{backpack_forward.25} parent=19 // pred_check_branch
        %165 = sbr.rel (%p163) target = $region28
      $region27: #{backpack_forward.25} parent=19 // pred_region
        %p166 = scmp.lt.s32.totalorder %s16, 3
        %s167 = scalar_select %p166, %s16, 3
        %s168 = scalar_lea.vmem %s2, %s167
      $region28: #{backpack_forward.25} parent=19 // pred_fallthru
        _
    $region20: #{backpack_forward.25} parent=5 // pred_fallthru
      _
    %p169 = scmp.le.s32.totalorder 1, %s9
    %p170 = scmp.lt.s32.totalorder %s9, 5
    %p171 = pnand %p169, %p170
    %p172 = pneg %p171
    // Predicated region
    $region29: #{backpack_forward.25} parent=5 // pred_check
      _
    $region30: #{backpack_forward.25} parent=5 // pred_check_branch
      %174 = sbr.rel (%p171) target = $region32
    $region31: #{backpack_forward.25} parent=5 // pred_region
      %s175 = ssub.s32 %s9, 1
      %s176 = smul.u32 2, %s19
      %p177 = scmp.lt.s32.totalorder %s176, 1
      %s178 = scalar_select %p177, %s176, 1
      %s179 = smul.addr %s178, 4
      %s180 = scalar_lea.vmem %s0, %s179
      %p181 = pneg %p47
      %p182 = pneg %p44
      %p183 = scmp.lt.s32.totalorder %s18, 3
      %s184 = scalar_select %p183, %s18, 3
      %s185 = smul.addr %s184, 16
      %s186 = smul.addr %s185, 4
      %s187 = scalar_lea.vmem %s1, %s186
      %p188 = pneg %p73
      %p189 = pneg %p70
      %p190 = scmp.lt.s32.totalorder %s18, 3
      %s191 = scalar_select %p190, %s18, 3
      %s192 = scalar_lea.vmem %s2, %s191
      %p193 = pneg %p99
      %p194 = pneg %p96
      %p195 = pneg %p127
      %p196 = pneg %p124
      %s197 = smul.u32 2, %s19
      %p198 = scmp.lt.s32.totalorder %s18, 3
      %s199 = scalar_select %p198, %s18, 3
      %p200 = scmp.lt.s32.totalorder %s197, 1
      %s201 = scalar_select %p200, %s197, 1
      %s202 = smul.addr %s199, 2
      %s203 = sadd.s32 %s201, %s202
      %s204 = smul.addr %s203, 4
      %s205 = scalar_lea.vmem %s3, %s204
      %s206 = smul.u32 2, %s19
      %p207 = scmp.lt.s32.totalorder %s206, 1
      %s208 = scalar_select %p207, %s206, 1
      %s209 = smul.addr %s208, 4
      %s210 = scalar_lea.vmem %s0, %s209
      %s211 = smul.u32 2, %s19
      %p212 = scmp.lt.s32.totalorder %s18, 3
      %s213 = scalar_select %p212, %s18, 3
      %s214 = smul.addr %s213, 16
      %s215 = smul.addr %s214, 4
      %s216 = scalar_lea.vmem %s1, %s215
      %p217 = scmp.lt.s32.totalorder %s18, 3
      %s218 = scalar_select %p217, %s18, 3
      %s219 = scalar_lea.vmem %s2, %s218
      %s220 = smul.u32 2, %s19
      %p221 = scmp.lt.s32.totalorder %s18, 3
      %s222 = scalar_select %p221, %s18, 3
      %p223 = scmp.lt.s32.totalorder %s220, 1
      %s224 = scalar_select %p223, %s220, 1
      %s225 = smul.addr %s222, 2
      %s226 = sadd.s32 %s224, %s225
      %s227 = smul.addr %s226, 4
      %s228 = scalar_lea.vmem %s3, %s227
      %s229 = smul.u32 2, %s19
      %v231 = vld [vmem:[%s216] sm:$0xf]
      %v232 = vld [vmem:[%s216 + $0x4] sm:$0xf]
      %v233 = vld [vmem:[%s216 + $0x8] sm:$0xf]
      %v234 = vld [vmem:[%s216 + $0xc] sm:$0xf]
      %v235 = vld [vmem:[%s216 + $0x10] sm:$0xf]
      %v236 = vld [vmem:[%s216 + $0x14] sm:$0xf]
      %v237 = vld [vmem:[%s216 + $0x18] sm:$0xf]
      %v238 = vld [vmem:[%s216 + $0x1c] sm:$0xf]
      %v239 = vld [vmem:[%s216 + $0x20] sm:$0xf]
      %v240 = vld [vmem:[%s216 + $0x24] sm:$0xf]
      %v241 = vld [vmem:[%s216 + $0x28] sm:$0xf]
      %v242 = vld [vmem:[%s216 + $0x2c] sm:$0xf]
      %v243 = vld [vmem:[%s216 + $0x30] sm:$0xf]
      %v244 = vld [vmem:[%s216 + $0x34] sm:$0xf]
      %v245 = vld [vmem:[%s216 + $0x38] sm:$0xf]
      %v246 = vld [vmem:[%s216 + $0x3c] sm:$0xf]
      %v247 = vld [vmem:[%s219] sm:$0x1]
      %v248 = vld [vmem:[%s210] sm:$0xf]
      %v249 = vld [vmem:[%s210 + $0x4] sm:$0xf]
      %v251 = vlaneseq
      %v252 = vshrl.u32 %v251, 7
      %v253 = vsub.s32 0, %v252
      %v254 = vrot.slane %v247, %v253
      %v258 = vunpack.c.l.b16 %v248
      %v259 = vunpack.c.l.b16 %v249
      %v260 = vpack.c.b16 %v259, %v258
      %v278 = vunpack.c.l.b16 %v231
      %v279 = vunpack.c.l.b16 %v232
      %v280 = vunpack.c.l.b16 %v233
      %v281 = vunpack.c.l.b16 %v234
      %v282 = vunpack.c.l.b16 %v235
      %v283 = vunpack.c.l.b16 %v236
      %v284 = vunpack.c.l.b16 %v237
      %v285 = vunpack.c.l.b16 %v238
      %v286 = vunpack.c.l.b16 %v239
      %v287 = vunpack.c.l.b16 %v240
      %v288 = vunpack.c.l.b16 %v241
      %v289 = vunpack.c.l.b16 %v242
      %v290 = vunpack.c.l.b16 %v243
      %v291 = vunpack.c.l.b16 %v244
      %v292 = vunpack.c.l.b16 %v245
      %v293 = vunpack.c.l.b16 %v246
      %v294 = vpack.c.b16 %v279, %v278
      %v295 = vpack.c.b16 %v281, %v280
      %v296 = vpack.c.b16 %v283, %v282
      %v297 = vpack.c.b16 %v285, %v284
      %v298 = vpack.c.b16 %v287, %v286
      %v299 = vpack.c.b16 %v289, %v288
      %v300 = vpack.c.b16 %v291, %v290
      %v301 = vpack.c.b16 %v293, %v292
      %310 = vmatprep.subr.bf16.mxu0 0
      %311 = vmatpush1.bf16.msra.mxu0 %v294
      %312 = vmatprep.subr.bf16.mxu0 0
      %313 = vmatpush1.bf16.msra.mxu0 %v295
      %314 = vmatprep.subr.bf16.mxu0 0
      %315 = vmatpush1.bf16.msra.mxu0 %v296
      %316 = vmatprep.subr.bf16.mxu0 0
      %317 = vmatpush1.bf16.msra.mxu0 %v297
      %318 = vmatprep.subr.bf16.mxu0 0
      %319 = vmatpush1.bf16.msra.mxu0 %v298
      %320 = vmatprep.subr.bf16.mxu0 0
      %321 = vmatpush1.bf16.msra.mxu0 %v299
      %322 = vmatprep.subr.bf16.mxu0 0
      %323 = vmatpush1.bf16.msra.mxu0 %v300
      %324 = vmatprep.subr.bf16.mxu0 0
      %325 = vmatpush1.bf16.msra.mxu0 %v301
      %326 = vmatprep.subr.bf16.mxu0 0
      %327 = vmatpush1.bf16.msra.mxu0 0
      %328 = vmatprep.subr.bf16.mxu0 0
      %329 = vmatpush1.bf16.msra.mxu0 0
      %330 = vmatprep.subr.bf16.mxu0 0
      %331 = vmatpush1.bf16.msra.mxu0 0
      %332 = vmatprep.subr.bf16.mxu0 0
      %333 = vmatpush1.bf16.msra.mxu0 0
      %334 = vmatprep.subr.bf16.mxu0 0
      %335 = vmatpush1.bf16.msra.mxu0 0
      %336 = vmatprep.subr.bf16.mxu0 0
      %337 = vmatpush1.bf16.msra.mxu0 0
      %338 = vmatprep.subr.bf16.mxu0 0
      %339 = vmatpush1.bf16.msra.mxu0 0
      %340 = vmatprep.subr.bf16.mxu0 0
      %341 = vmatpush1.bf16.msra.mxu0 0
      %342 = vmatprep.mubr.bf16.mxu0 0
      %343 = vmatmul.mubr.bf16.gmra.mrb[0].mxu0 %v260
      %v344 = vpop.f32.mrb[0].mxu0
      %v345 = vadd.f32 %v254, %v344
      %v346 = vpop.f32.mrb[0].mxu0
      %v347 = vpop.f32.mrb[0].mxu0
      %v348 = vadd.f32 %v254, %v347
      %v349 = vpop.f32.mrb[0].mxu0
      %350 = vdwg.mxu0
      %v351 = vpack.c.bf16 %v348, %v345
      %v353 = vunpack.c.l.b16 %v351
      %v354 = vunpack.c.h.b16 %v351
      %v355 = vpack.c.b16 %v353, %v353
      %v356 = vpack.c.b16 %v354, %v354
      %vm359 = vcmask 257024
      %360 = vst.msk [vmem:[%s228] sm:$0xf] %vm359, %v355
      %361 = vst.msk [vmem:[%s228 + $0x4] sm:$0xf] %vm359, %v356
      %s362 = smul.u32 2, %s19
      %p363 = scmp.lt.s32.totalorder %s18, 3
      %s364 = scalar_select %p363, %s18, 3
      %p365 = scmp.lt.s32.totalorder %s362, 1
      %s366 = scalar_select %p365, %s362, 1
      %s367 = smul.addr %s364, 2
      %s368 = sadd.s32 %s366, %s367
      %s369 = smul.addr %s368, 4
      %s370 = scalar_lea.vmem %s3, %s369
      // Predicated region
      $region33: #{backpack_forward.25} parent=31 // pred_check
        %p371 = pneg %p124
      $region34: #{backpack_forward.25} parent=31 // pred_check_branch
        %373 = sbr.rel (%p371) target = $region36
      $region35: #{backpack_forward.25} parent=31 // pred_region
        %s374 = smul.u32 2, %s19
      $region36: #{backpack_forward.25} parent=31 // pred_fallthru
        _
    $region32: #{backpack_forward.25} parent=5 // pred_fallthru
      _
    %p375 = scmp.le.s32.totalorder 2, %s9
    // Predicated region
    $region37: #{backpack_forward.25} parent=5 // pred_check
      %p376 = pneg %p375
    $region38: #{backpack_forward.25} parent=5 // pred_check_branch
      %378 = sbr.rel (%p376) target = $region40
    $region39: #{backpack_forward.25} parent=5 // pred_region
      %s379 = ssub.s32 %s9, 2
      // Predicated region
      $region41: #{backpack_forward.25} parent=39 // pred_check
        %p380 = pneg %p130
      $region42: #{backpack_forward.25} parent=39 // pred_check_branch
        %382 = sbr.rel (%p380) target = $region44
      $region43: #{backpack_forward.25} parent=39 // pred_region
        %s383 = smul.u32 2, %s21
        %p384 = scmp.lt.s32.totalorder %s20, 3
        %s385 = scalar_select %p384, %s20, 3
        %p386 = scmp.lt.s32.totalorder %s383, 1
        %s387 = scalar_select %p386, %s383, 1
        %s388 = smul.addr %s385, 2
        %s389 = sadd.s32 %s387, %s388
        %s390 = smul.addr %s389, 4
        %s391 = scalar_lea.vmem %s3, %s390
      $region44: #{backpack_forward.25} parent=39 // pred_fallthru
        _
    $region40: #{backpack_forward.25} parent=5 // pred_fallthru
      _
  $region6: #{backpack_forward.25} parent=0 // loop_footer
    %s13 = sadd.s32 1, %s9
  $region7: #{backpack_forward.25} parent=0 // loop_footer_branch
    %8 = sbr.rel target = $region3
  $region8: #{backpack_forward.25} parent=0 // loop_exit
    _

// kernel: backpack_forward.27
$region0: #{backpack_forward.27}
  #allocation0 [shape = 'u32[]', space=smem, size = 0x4, offset = 0x4, fixed_abs, tag = 'smem constant byte address 0x4 - core index']
  #allocation1 [shape = 'u32[144,128]{1,0:T(1,128)}', space=vmem, size = 0x12000, scoped, tag = 'internal scratch']
  %s0 = inlined_call_operand.vmem [shape: bf16[16,32], index: 0, kind: input, shape index: {}]
  %s1 = inlined_call_operand.vmem [shape: bf16[128,32], index: 1, kind: input, shape index: {}]
  %s2 = inlined_call_operand.hbm [shape: f32[16,128], index: 2, kind: output, shape index: {}]
  %s3 = sld [smem:[#allocation0]]
  $region18: #{backpack_forward.27} parent=0
    _
  %s5 = ssub.s32 1, %s3
  %s6 = scalar_select 0, %s5, %s3
  $region1: #{backpack_forward.27} parent=0
    #allocation2 [shape = 'u8[8192]{0}', space=vmem, size = 0x2000, scoped, tag = 'output window, operand 0, single buffered']
    #allocation3 [shape = 's32[1]{0}', space=sflag, size = 0x4, scoped, tag = 'scoped memory for backpack_forward.27']
    %7 = vsyncpa [#allocation3], 0
    // Predicated region
    $region2: #{backpack_forward.27} parent=1 // pred_check
      _
    $region3: #{backpack_forward.27} parent=1 // pred_check_branch
      %9 = sbr.rel (0) target = $region5
    $region4: #{backpack_forward.27} parent=1 // pred_region
      _
    $region5: #{backpack_forward.27} parent=1 // pred_fallthru
      _
    // Predicated region
    $region6: #{backpack_forward.27} parent=1 // pred_check
      _
    $region7: #{backpack_forward.27} parent=1 // pred_check_branch
      %11 = sbr.rel (0) target = $region9
    $region8: #{backpack_forward.27} parent=1 // pred_region
      _
    $region9: #{backpack_forward.27} parent=1 // pred_fallthru
      _
    %v13 = vld [vmem:[%s0] sm:$0xf]
    %v14 = vld [vmem:[%s0 + $0x4] sm:$0xf]
    %v15 = vld [vmem:[%s1] sm:$0xf]
    %v16 = vld [vmem:[%s1 + $0x4] sm:$0xf]
    %v17 = vld [vmem:[%s1 + $0x8] sm:$0xf]
    %v18 = vld [vmem:[%s1 + $0xc] sm:$0xf]
    %v19 = vld [vmem:[%s1 + $0x10] sm:$0xf]
    %v20 = vld [vmem:[%s1 + $0x14] sm:$0xf]
    %v21 = vld [vmem:[%s1 + $0x18] sm:$0xf]
    %v22 = vld [vmem:[%s1 + $0x1c] sm:$0xf]
    %v23 = vld [vmem:[%s1 + $0x20] sm:$0xf]
    %v24 = vld [vmem:[%s1 + $0x24] sm:$0xf]
    %v25 = vld [vmem:[%s1 + $0x28] sm:$0xf]
    %v26 = vld [vmem:[%s1 + $0x2c] sm:$0xf]
    %v27 = vld [vmem:[%s1 + $0x30] sm:$0xf]
    %v28 = vld [vmem:[%s1 + $0x34] sm:$0xf]
    %v29 = vld [vmem:[%s1 + $0x38] sm:$0xf]
    %v30 = vld [vmem:[%s1 + $0x3c] sm:$0xf]
    %v33 = vunpack.c.l.b16 %v13
    %v34 = vunpack.c.l.b16 %v14
    %v35 = vpack.c.b16 %v34, %v33
    %v52 = vunpack.c.l.b16 %v15
    %v53 = vunpack.c.l.b16 %v16
    %v54 = vunpack.c.l.b16 %v17
    %v55 = vunpack.c.l.b16 %v18
    %v56 = vunpack.c.l.b16 %v19
    %v57 = vunpack.c.l.b16 %v20
    %v58 = vunpack.c.l.b16 %v21
    %v59 = vunpack.c.l.b16 %v22
    %v60 = vunpack.c.l.b16 %v23
    %v61 = vunpack.c.l.b16 %v24
    %v62 = vunpack.c.l.b16 %v25
    %v63 = vunpack.c.l.b16 %v26
    %v64 = vunpack.c.l.b16 %v27
    %v65 = vunpack.c.l.b16 %v28
    %v66 = vunpack.c.l.b16 %v29
    %v67 = vunpack.c.l.b16 %v30
    %v68 = vpack.c.b16 %v53, %v52
    %v69 = vpack.c.b16 %v55, %v54
    %v70 = vpack.c.b16 %v57, %v56
    %v71 = vpack.c.b16 %v59, %v58
    %v72 = vpack.c.b16 %v61, %v60
    %v73 = vpack.c.b16 %v63, %v62
    %v74 = vpack.c.b16 %v65, %v64
    %v75 = vpack.c.b16 %v67, %v66
    %vm76 = vcmask 261120
    %v78 = vsel %vm76, %v35, 0
    %v81 = vsel %vm76, %v68, 0
    %v84 = vsel %vm76, %v69, 0
    %v87 = vsel %vm76, %v70, 0
    %v90 = vsel %vm76, %v71, 0
    %v93 = vsel %vm76, %v72, 0
    %v96 = vsel %vm76, %v73, 0
    %v99 = vsel %vm76, %v74, 0
    %v102 = vsel %vm76, %v75, 0
    %104 = vmatprep.subr.bf16.mxu0 0
    %105 = vmatpush1.bf16.xpose.msra.mxu0 %v81
    %106 = vmatprep.subr.bf16.mxu0 0
    %107 = vmatpush1.bf16.xpose.msra.mxu0 %v84
    %108 = vmatprep.subr.bf16.mxu0 0
    %109 = vmatpush1.bf16.xpose.msra.mxu0 %v87
    %110 = vmatprep.subr.bf16.mxu0 0
    %111 = vmatpush1.bf16.xpose.msra.mxu0 %v90
    %112 = vmatprep.subr.bf16.mxu0 0
    %113 = vmatpush1.bf16.xpose.msra.mxu0 %v93
    %114 = vmatprep.subr.bf16.mxu0 0
    %115 = vmatpush1.bf16.xpose.msra.mxu0 %v96
    %116 = vmatprep.subr.bf16.mxu0 0
    %117 = vmatpush1.bf16.xpose.msra.mxu0 %v99
    %118 = vmatprep.subr.bf16.mxu0 0
    %119 = vmatpush1.bf16.xpose.msra.mxu0 %v102
    %120 = vmatprep.subr.bf16.mxu0 0
    %121 = vmatpush1.bf16.xpose.msra.mxu0 0
    %122 = vmatprep.subr.bf16.mxu0 0
    %123 = vmatpush1.bf16.xpose.msra.mxu0 0
    %124 = vmatprep.subr.bf16.mxu0 0
    %125 = vmatpush1.bf16.xpose.msra.mxu0 0
    %126 = vmatprep.subr.bf16.mxu0 0
    %127 = vmatpush1.bf16.xpose.msra.mxu0 0
    %128 = vmatprep.subr.bf16.mxu0 0
    %129 = vmatpush1.bf16.xpose.msra.mxu0 0
    %130 = vmatprep.subr.bf16.mxu0 0
    %131 = vmatpush1.bf16.xpose.msra.mxu0 0
    %132 = vmatprep.subr.bf16.mxu0 0
    %133 = vmatpush1.bf16.xpose.msra.mxu0 0
    %134 = vmatprep.subr.bf16.mxu0 0
    %135 = vmatpush1.bf16.xpose.msra.mxu0 0
    %136 = vmatprep.mubr.bf16.mxu0 0
    %137 = vmatmul.mubr.bf16.gmra.mrb[0].mxu0 %v78
    %v138 = vpop.f32.mrb[0].mxu0
    %v139 = vadd.f32 0.0, %v138
    %v140 = vpop.f32.mrb[0].mxu0
    %v141 = vpop.f32.mrb[0].mxu0
    %v142 = vadd.f32 0.0, %v141
    %v143 = vpop.f32.mrb[0].mxu0
    %144 = vdwg.mxu0
    %145 = vst [vmem:[#allocation2] sm:$0xff] %v139
    %146 = vst [vmem:[#allocation2 + $0x8] sm:$0xff] %v142
    // Predicated region
    $region10: #{backpack_forward.27} parent=1 // pred_check
      _
    $region11: #{backpack_forward.27} parent=1 // pred_check_branch
      %148 = sbr.rel (0) target = $region13
    $region12: #{backpack_forward.27} parent=1 // pred_region
      %s150 = ssub.s32 256, 256
      %151 = vsyncadd [#allocation3], %s150
      %s152 = sshll.u32 [#allocation2], 4
      %s153 = int_to_ptr.vmem [resolvable:$true] %s152
      %158 = dma.vmem_to_hbm [thread:$0]  %s153, 256, %s2, [#allocation3], 128, 128, 8
    $region13: #{backpack_forward.27} parent=1 // pred_fallthru
      _
    // Predicated region
    $region14: #{backpack_forward.27} parent=1 // pred_check
      _
    $region15: #{backpack_forward.27} parent=1 // pred_check_branch
      %160 = sbr.rel (0) target = $region17
    $region16: #{backpack_forward.27} parent=1 // pred_region
      %161 = dma.done [#allocation3], 256
    $region17: #{backpack_forward.27} parent=1 // pred_fallthru
      _
    %162 = vsyncpa [#allocation3], 1

// kernel: backpack_forward.26
$region0: #{backpack_forward.26}
  #allocation0 [shape = 'u32[]', space=smem, size = 0x4, offset = 0x4, fixed_abs, tag = 'smem constant byte address 0x4 - core index']
  #allocation1 [shape = 'u32[144,128]{1,0:T(1,128)}', space=vmem, size = 0x12000, scoped, tag = 'internal scratch']
  #allocation2 [shape = 'f32[8,32]{1,0:T(8,128)}', space=vmem, size = 0x1000, scoped, tag = 'scratch operand']
  %s0 = inlined_call_operand.vmem [shape: bf16[4,2,8,16], index: 0, kind: input, shape index: {}]
  %s1 = inlined_call_operand.vmem [shape: bf16[4,2,8,32], index: 1, kind: input, shape index: {}]
  %s2 = inlined_call_operand.vmem [shape: bf16[2,8,32], index: 2, kind: output, shape index: {}]
  %s3 = sld [smem:[#allocation0]]
  $region49: #{backpack_forward.26} parent=0
    _
  %s5 = ssub.s32 1, %s3
  %s6 = scalar_select 0, %s5, %s3
  loop: start=0, step=1, limit=10
  $region2: #{backpack_forward.26} parent=0 // loop_pre_header
    _
  $region3: #{backpack_forward.26} parent=0 // loop_header
    %s8 = sphi 0, %s12
    %p9 = scmp.ge.s32.totalorder %s8, 10
    %s15 = sphi 0, %s27
    %s16 = sphi 0, %s23
    %s17 = sphi 0, %s15
    %s18 = sphi 0, %s16
    %s19 = sphi 0, %s17
    %s20 = sphi 0, %s18
    %s32 = sphi 0, %s34
    %s35 = sphi 0, %s32
    %s36 = sphi 0, %s35
    %s52 = sphi 0, %s36
    %s60 = sphi 0, %s62
    %s63 = sphi 0, %s60
    %s64 = sphi 0, %s63
    %s80 = sphi 0, %s64
    %s86 = sphi 0, %s88
    %s89 = sphi 0, %s86
    %s90 = sphi 0, %s89
    %s106 = sphi 0, %s90
  $region4: #{backpack_forward.26} parent=0 // loop_header_branch
    %11 = sbr.rel (%p9) target = $region8
  $region5: #{backpack_forward.26} parent=0 // loop_body
    %s13 = ssub.s32 %s8, 1
    %s14 = ssub.s32 %s8, 2
    %s21 = sadd.s32 1, %s16
    %p22 = scmp.ge.s32.totalorder %s21, 4
    %s23 = scalar_select %p22, 0, %s21
    %s24 = sadd.s32 1, %s15
    %s25 = scalar_select %p22, %s24, %s15
    %p26 = scmp.ge.s32.totalorder %s25, 2
    %s27 = scalar_select %p26, 0, %s25
    %s28 = ssub.s32 %s16, %s23
    %s29 = ssub.s32 %s15, %s27
    %s30 = sor.u32 %s28, %s29
    %p31 = scmp.eq.s32.totalorder %s30, 0
    %s33 = sadd.s32 %s32, 1
    %s34 = scalar_select %p31, %s32, %s33
    %p37 = pneg %p31
    %p38 = scmp.eq.s32.totalorder %s8, 7
    %p39 = por %p37, %p38
    %p40 = scmp.ne.s32.totalorder %s32, %s35
    %p41 = scmp.eq.s32.totalorder %s8, 0
    %p42 = por %p40, %p41
    %p43 = scmp.ne.s32.totalorder %s32, %s35
    %p44 = scmp.eq.s32.totalorder %s13, 7
    %p45 = por %p43, %p44
    %p46 = scmp.ne.s32.totalorder %s35, %s36
    %p47 = scmp.eq.s32.totalorder %s13, 0
    %p48 = por %p46, %p47
    %p49 = scmp.ne.s32.totalorder %s35, %s36
    %p50 = scmp.eq.s32.totalorder %s14, 7
    %p51 = por %p49, %p50
    %p53 = scmp.ne.s32.totalorder %s36, %s52
    %p54 = scmp.eq.s32.totalorder %s14, 0
    %p55 = por %p53, %p54
    %s56 = ssub.s32 %s16, %s23
    %s57 = ssub.s32 %s15, %s27
    %s58 = sor.u32 %s56, %s57
    %p59 = scmp.eq.s32.totalorder %s58, 0
    %s61 = sadd.s32 %s60, 1
    %s62 = scalar_select %p59, %s60, %s61
    %p65 = pneg %p59
    %p66 = scmp.eq.s32.totalorder %s8, 7
    %p67 = por %p65, %p66
    %p68 = scmp.ne.s32.totalorder %s60, %s63
    %p69 = scmp.eq.s32.totalorder %s8, 0
    %p70 = por %p68, %p69
    %p71 = scmp.ne.s32.totalorder %s60, %s63
    %p72 = scmp.eq.s32.totalorder %s13, 7
    %p73 = por %p71, %p72
    %p74 = scmp.ne.s32.totalorder %s63, %s64
    %p75 = scmp.eq.s32.totalorder %s13, 0
    %p76 = por %p74, %p75
    %p77 = scmp.ne.s32.totalorder %s63, %s64
    %p78 = scmp.eq.s32.totalorder %s14, 7
    %p79 = por %p77, %p78
    %p81 = scmp.ne.s32.totalorder %s64, %s80
    %p82 = scmp.eq.s32.totalorder %s14, 0
    %p83 = por %p81, %p82
    %s84 = ssub.s32 %s15, %s27
    %p85 = scmp.eq.s32.totalorder %s84, 0
    %s87 = sadd.s32 %s86, 1
    %s88 = scalar_select %p85, %s86, %s87
    %p91 = pneg %p85
    %p92 = scmp.eq.s32.totalorder %s8, 7
    %p93 = por %p91, %p92
    %p94 = scmp.ne.s32.totalorder %s86, %s89
    %p95 = scmp.eq.s32.totalorder %s8, 0
    %p96 = por %p94, %p95
    %p97 = scmp.ne.s32.totalorder %s86, %s89
    %p98 = scmp.eq.s32.totalorder %s13, 7
    %p99 = por %p97, %p98
    %p100 = scmp.ne.s32.totalorder %s89, %s90
    %p101 = scmp.eq.s32.totalorder %s13, 0
    %p102 = por %p100, %p101
    %p103 = scmp.ne.s32.totalorder %s89, %s90
    %p104 = scmp.eq.s32.totalorder %s14, 7
    %p105 = por %p103, %p104
    %p107 = scmp.ne.s32.totalorder %s90, %s106
    %p108 = scmp.eq.s32.totalorder %s14, 0
    %p109 = por %p107, %p108
    %p110 = scmp.le.s32.totalorder 1, %s8
    %p111 = scmp.lt.s32.totalorder %s8, 9
    %p112 = pnand %p110, %p111
    %p113 = pneg %p112
    // Predicated region
    $region9: #{backpack_forward.26} parent=5 // pred_check
      _
    $region10: #{backpack_forward.26} parent=5 // pred_check_branch
      %115 = sbr.rel (%p112) target = $region12
    $region11: #{backpack_forward.26} parent=5 // pred_region
      %s116 = ssub.s32 %s8, 1
    $region12: #{backpack_forward.26} parent=5 // pred_fallthru
      _
    %p117 = scmp.lt.s32.totalorder %s8, 8
    // Predicated region
    $region13: #{backpack_forward.26} parent=5 // pred_check
      %p118 = pneg %p117
    $region14: #{backpack_forward.26} parent=5 // pred_check_branch
      %120 = sbr.rel (%p118) target = $region16
    $region15: #{backpack_forward.26} parent=5 // pred_region
      // Predicated region
      $region17: #{backpack_forward.26} parent=15 // pred_check
        %p121 = pneg %p42
      $region18: #{backpack_forward.26} parent=15 // pred_check_branch
        %123 = sbr.rel (%p121) target = $region20
      $region19: #{backpack_forward.26} parent=15 // pred_region
        %p124 = scmp.lt.s32.totalorder %s16, 3
        %s125 = scalar_select %p124, %s16, 3
        %p126 = scmp.lt.s32.totalorder %s15, 1
        %s127 = scalar_select %p126, %s15, 1
        %s128 = smul.addr %s125, 2
        %s129 = sadd.s32 %s127, %s128
        %s130 = smul.addr %s129, 4
        %s131 = scalar_lea.vmem %s0, %s130
      $region20: #{backpack_forward.26} parent=15 // pred_fallthru
        _
      // Predicated region
      $region21: #{backpack_forward.26} parent=15 // pred_check
        %p132 = pneg %p70
      $region22: #{backpack_forward.26} parent=15 // pred_check_branch
        %134 = sbr.rel (%p132) target = $region24
      $region23: #{backpack_forward.26} parent=15 // pred_region
        %p135 = scmp.lt.s32.totalorder %s16, 3
        %s136 = scalar_select %p135, %s16, 3
        %p137 = scmp.lt.s32.totalorder %s15, 1
        %s138 = scalar_select %p137, %s15, 1
        %s139 = smul.addr %s136, 2
        %s140 = sadd.s32 %s138, %s139
        %s141 = smul.addr %s140, 4
        %s142 = scalar_lea.vmem %s1, %s141
      $region24: #{backpack_forward.26} parent=15 // pred_fallthru
        _
    $region16: #{backpack_forward.26} parent=5 // pred_fallthru
      _
    %p143 = scmp.le.s32.totalorder 1, %s8
    %p144 = scmp.lt.s32.totalorder %s8, 9
    %p145 = pnand %p143, %p144
    %p146 = pneg %p145
    // Predicated region
    $region25: #{backpack_forward.26} parent=5 // pred_check
      _
    $region26: #{backpack_forward.26} parent=5 // pred_check_branch
      %148 = sbr.rel (%p145) target = $region28
    $region27: #{backpack_forward.26} parent=5 // pred_region
      %s149 = ssub.s32 %s8, 1
      %p150 = scmp.lt.s32.totalorder %s18, 3
      %s151 = scalar_select %p150, %s18, 3
      %p152 = scmp.lt.s32.totalorder %s17, 1
      %s153 = scalar_select %p152, %s17, 1
      %s154 = smul.addr %s151, 2
      %s155 = sadd.s32 %s153, %s154
      %s156 = smul.addr %s155, 4
      %s157 = scalar_lea.vmem %s0, %s156
      %p158 = pneg %p48
      %p159 = pneg %p45
      %p160 = scmp.lt.s32.totalorder %s18, 3
      %s161 = scalar_select %p160, %s18, 3
      %p162 = scmp.lt.s32.totalorder %s17, 1
      %s163 = scalar_select %p162, %s17, 1
      %s164 = smul.addr %s161, 2
      %s165 = sadd.s32 %s163, %s164
      %s166 = smul.addr %s165, 4
      %s167 = scalar_lea.vmem %s1, %s166
      %p168 = pneg %p76
      %p169 = pneg %p73
      %p170 = pneg %p102
      %p171 = pneg %p99
      %p172 = scmp.lt.s32.totalorder %s17, 1
      %s173 = scalar_select %p172, %s17, 1
      %s174 = smul.addr %s173, 4
      %s175 = scalar_lea.vmem %s2, %s174
      %p176 = scmp.lt.s32.totalorder %s18, 3
      %s177 = scalar_select %p176, %s18, 3
      %p178 = scmp.lt.s32.totalorder %s17, 1
      %s179 = scalar_select %p178, %s17, 1
      %s180 = smul.addr %s177, 2
      %s181 = sadd.s32 %s179, %s180
      %s182 = smul.addr %s181, 4
      %s183 = scalar_lea.vmem %s0, %s182
      %p184 = scmp.lt.s32.totalorder %s18, 3
      %s185 = scalar_select %p184, %s18, 3
      %p186 = scmp.lt.s32.totalorder %s17, 1
      %s187 = scalar_select %p186, %s17, 1
      %s188 = smul.addr %s185, 2
      %s189 = sadd.s32 %s187, %s188
      %s190 = smul.addr %s189, 4
      %s191 = scalar_lea.vmem %s1, %s190
      %p192 = scmp.lt.s32.totalorder %s17, 1
      %s193 = scalar_select %p192, %s17, 1
      %s194 = smul.addr %s193, 4
      %s195 = scalar_lea.vmem %s2, %s194
      %p197 = scmp.eq.s32.totalorder %s18, 0
      // Predicated region
      $region29: #{backpack_forward.26} parent=27 // pred_check
        %p198 = pneg %p197
      $region30: #{backpack_forward.26} parent=27 // pred_check_branch
        %200 = sbr.rel (%p198) target = $region32
      $region31: #{backpack_forward.26} parent=27 // pred_region
        %vm201 = vcmask 261120
        %202 = vst.msk [vmem:[#allocation2] sm:$0xff] %vm201, 0.0
      $region32: #{backpack_forward.26} parent=27 // pred_fallthru
        _
      %v203 = vld [vmem:[%s183] sm:$0xf]
      %v205 = vunpack.c.l.b16 %v203
      %v206 = vpack.c.b16 %v205, %v205
      %207 = vrot.lane.b32.xlu0 %v206, 120
      %v208 = vpop.permute.xlu0 %207
      %vm209 = vcmask 64512
      %v211 = vsel %vm209, %v203, 0
      %v214 = vsel %vm209, %v208, 0
      %216 = vmatprep.subr.bf16.mxu0 0
      %217 = vmatpush1.bf16.xpose.msra.mxu0 %v214
      %218 = vmatprep.subr.bf16.mxu0 0
      %219 = vmatpush1.bf16.xpose.msra.mxu0 0
      %220 = vmatprep.subr.bf16.mxu0 0
      %221 = vmatpush1.bf16.xpose.msra.mxu0 0
      %222 = vmatprep.subr.bf16.mxu0 0
      %223 = vmatpush1.bf16.xpose.msra.mxu0 0
      %224 = vmatprep.subr.bf16.mxu0 0
      %225 = vmatpush1.bf16.xpose.msra.mxu0 0
      %226 = vmatprep.subr.bf16.mxu0 0
      %227 = vmatpush1.bf16.xpose.msra.mxu0 0
      %228 = vmatprep.subr.bf16.mxu0 0
      %229 = vmatpush1.bf16.xpose.msra.mxu0 0
      %230 = vmatprep.subr.bf16.mxu0 0
      %231 = vmatpush1.bf16.xpose.msra.mxu0 0
      %232 = vmatprep.subr.bf16.mxu0 0
      %233 = vmatpush1.bf16.xpose.msra.mxu0 0
      %234 = vmatprep.subr.bf16.mxu0 0
      %235 = vmatpush1.bf16.xpose.msra.mxu0 0
      %236 = vmatprep.subr.bf16.mxu0 0
      %237 = vmatpush1.bf16.xpose.msra.mxu0 0
      %238 = vmatprep.subr.bf16.mxu0 0
      %239 = vmatpush1.bf16.xpose.msra.mxu0 0
      %240 = vmatprep.subr.bf16.mxu0 0
      %241 = vmatpush1.bf16.xpose.msra.mxu0 0
      %242 = vmatprep.subr.bf16.mxu0 0
      %243 = vmatpush1.bf16.xpose.msra.mxu0 0
      %244 = vmatprep.subr.bf16.mxu0 0
      %245 = vmatpush1.bf16.xpose.msra.mxu0 0
      %246 = vmatprep.subr.bf16.mxu0 0
      %247 = vmatpush1.bf16.xpose.msra.mxu0 0
      %248 = vmatprep.mubr.bf16.mxu0 0
      %249 = vmatmul.mubr.bf16.gmra.mrb[0].mxu0 %v211
      %v250 = vpop.f32.mrb[0].mxu0
      %v251 = vadd.f32 0.0, %v250
      %v252 = vpop.f32.mrb[0].mxu0
      %v253 = vpop.f32.mrb[0].mxu0
      %v254 = vpop.f32.mrb[0].mxu0
      %255 = vdwg.mxu0
      %v256 = vmul.f32 %v251, 0.35355338
      %v257 = vlaneseq
      %v258 = vshrl.u32 %v257, 7
      %v259 = vlaneseq
      %v260 = vand.u32 %v259, 127
      %vm261 = vcmp.gt.s32.totalorder %v260, %v258
      %v262 = vsub.f32 %v256, 10000.0
      %v263 = vsel %vm261, %v262, %v256
      %v264 = vsel %vm209, %v263, -inf
      %265 = vmax.xlane.f32.xlu0 %v264
      %v266 = vpop.xlane.xlu0 %265
      %v267 = vsub.f32 %v263, %v266
      %v268 = vmul.f32 %v267, 1.442695
      %v269 = vpow.pop %v268
      %v270 = vsel %vm209, %v269, 0.0
      %271 = vadd.xlane.f32.xlu0 %v270
      %v272 = vpop.xlane.xlu0 %271
      %v273 = vrcp.pop %v272
      %v274 = vmul.f32 %v269, %v273
      %v275 = vld [vmem:[%s191] sm:$0xf]
      %v276 = vld [vmem:[#allocation2] sm:$0xff]
      %v277 = vpack.c.bf16 %v274, %v274
      %v279 = vsel %vm209, %v277, 0
      %vm281 = vcmask 1043456
      %v283 = vsel %vm281, %v275, 0
      %285 = vmatprep.subr.bf16.mxu0 0
      %286 = vmatpush1.bf16.msra.mxu0 %v283
      %287 = vmatprep.subr.bf16.mxu0 0
      %288 = vmatpush1.bf16.msra.mxu0 0
      %289 = vmatprep.subr.bf16.mxu0 0
      %290 = vmatpush1.bf16.msra.mxu0 0
      %291 = vmatprep.subr.bf16.mxu0 0
      %292 = vmatpush1.bf16.msra.mxu0 0
      %293 = vmatprep.subr.bf16.mxu0 0
      %294 = vmatpush1.bf16.msra.mxu0 0
      %295 = vmatprep.subr.bf16.mxu0 0
      %296 = vmatpush1.bf16.msra.mxu0 0
      %297 = vmatprep.subr.bf16.mxu0 0
      %298 = vmatpush1.bf16.msra.mxu0 0
      %299 = vmatprep.subr.bf16.mxu0 0
      %300 = vmatpush1.bf16.msra.mxu0 0
      %301 = vmatprep.subr.bf16.mxu0 0
      %302 = vmatpush1.bf16.msra.mxu0 0
      %303 = vmatprep.subr.bf16.mxu0 0
      %304 = vmatpush1.bf16.msra.mxu0 0
      %305 = vmatprep.subr.bf16.mxu0 0
      %306 = vmatpush1.bf16.msra.mxu0 0
      %307 = vmatprep.subr.bf16.mxu0 0
      %308 = vmatpush1.bf16.msra.mxu0 0
      %309 = vmatprep.subr.bf16.mxu0 0
      %310 = vmatpush1.bf16.msra.mxu0 0
      %311 = vmatprep.subr.bf16.mxu0 0
      %312 = vmatpush1.bf16.msra.mxu0 0
      %313 = vmatprep.subr.bf16.mxu0 0
      %314 = vmatpush1.bf16.msra.mxu0 0
      %315 = vmatprep.subr.bf16.mxu0 0
      %316 = vmatpush1.bf16.msra.mxu0 0
      %317 = vmatprep.mubr.bf16.mxu0 0
      %318 = vmatmul.mubr.bf16.gmra.mrb[0].mxu0 %v279
      %v319 = vpop.f32.mrb[0].mxu0
      %v320 = vadd.f32 0.0, %v319
      %v321 = vpop.f32.mrb[0].mxu0
      %v322 = vpop.f32.mrb[0].mxu0
      %v323 = vpop.f32.mrb[0].mxu0
      %324 = vdwg.mxu0
      %v325 = vadd.f32 %v276, %v320
      %vm326 = vcmask 261120
      %327 = vst.msk [vmem:[#allocation2] sm:$0xff] %vm326, %v325
      %p328 = scmp.eq.s32.totalorder %s18, 3
      // Predicated region
      $region33: #{backpack_forward.26} parent=27 // pred_check
        %p329 = pneg %p328
      $region34: #{backpack_forward.26} parent=27 // pred_check_branch
        %331 = sbr.rel (%p329) target = $region36
      $region35: #{backpack_forward.26} parent=27 // pred_region
        %v332 = vld [vmem:[#allocation2] sm:$0xff]
        %v333 = vpack.c.bf16 %v332, %v332
        %vm334 = vcmask 257024
        %335 = vst.msk [vmem:[%s195] sm:$0xf] %vm334, %v333
      $region36: #{backpack_forward.26} parent=27 // pred_fallthru
        _
      %p336 = scmp.lt.s32.totalorder %s17, 1
      %s337 = scalar_select %p336, %s17, 1
      %s338 = smul.addr %s337, 4
      %s339 = scalar_lea.vmem %s2, %s338
      // Predicated region
      $region37: #{backpack_forward.26} parent=27 // pred_check
        %p340 = pneg %p99
      $region38: #{backpack_forward.26} parent=27 // pred_check_branch
        %342 = sbr.rel (%p340) target = $region40
      $region39: #{backpack_forward.26} parent=27 // pred_region
        _
      $region40: #{backpack_forward.26} parent=27 // pred_fallthru
        _
    $region28: #{backpack_forward.26} parent=5 // pred_fallthru
      _
    %p343 = scmp.le.s32.totalorder 2, %s8
    // Predicated region
    $region41: #{backpack_forward.26} parent=5 // pred_check
      %p344 = pneg %p343
    $region42: #{backpack_forward.26} parent=5 // pred_check_branch
      %346 = sbr.rel (%p344) target = $region44
    $region43: #{backpack_forward.26} parent=5 // pred_region
      %s347 = ssub.s32 %s8, 2
      // Predicated region
      $region45: #{backpack_forward.26} parent=43 // pred_check
        %p348 = pneg %p105
      $region46: #{backpack_forward.26} parent=43 // pred_check_branch
        %350 = sbr.rel (%p348) target = $region48
      $region47: #{backpack_forward.26} parent=43 // pred_region
        %p351 = scmp.lt.s32.totalorder %s19, 1
        %s352 = scalar_select %p351, %s19, 1
        %s353 = smul.addr %s352, 4
        %s354 = scalar_lea.vmem %s2, %s353
      $region48: #{backpack_forward.26} parent=43 // pred_fallthru
        _
    $region44: #{backpack_forward.26} parent=5 // pred_fallthru
      _
  $region6: #{backpack_forward.26} parent=0 // loop_footer
    %s12 = sadd.s32 1, %s8
  $region7: #{backpack_forward.26} parent=0 // loop_footer_branch
    %7 = sbr.rel target = $region3
  $region8: #{backpack_forward.26} parent=0 // loop_exit
    _

</llo_original>
